<compile_context>
chip_gen: v5e
topology: v5e:2x2
jax: 0.10.0
libtpu: 0.0.40
codegen_flags: <defaults>
</compile_context>

<pallas_src>
import math
import jax
import jax.numpy as jnp
from jax.experimental import pallas as pl
from jax.experimental.pallas import tpu as pltpu

# ---------------- model hyper-params (small, consistent with the module) ----
B = 2              # batch
C = 4              # in channels
IMG = 16           # spatial
PATCH = 4          # patch size
NP = (IMG // PATCH) ** 2           # 16 patches
CPP = C * PATCH * PATCH            # 64 flattened patch features
D = 32             # embed dim
NUM_HEADS = 4
DH = D // NUM_HEADS                # 8
DEPTH = 2
MLP_HIDDEN = 4 * D                 # 128
NUM_CLASSES = 8
L = NP + 1                         # 17 tokens (cls, dist_token is None)
L_PAD = 24                         # token axis padded to a multiple of 8 sublanes
LANE = 128                         # lane width used for padded slabs / output
EPS = 1e-6                         # timm ViT LayerNorm eps
ATTN_SCALE = DH ** -0.5


# ---------------- in-kernel helpers -----------------------------------------
def _layernorm(v, w, b):
    # two-pass (centered) variance: matches torch LayerNorm numerics more closely
    mu = jnp.mean(v, axis=-1, keepdims=True)
    c = v - mu
    var = jnp.mean(c * c, axis=-1, keepdims=True)
    return c * jax.lax.rsqrt(var + EPS) * w + b


def _gelu_exact(x):
    # torch.nn.GELU default: exact erf formulation (erf goes to the EUP)
    return 0.5 * x * (1.0 + jax.lax.erf(x * (1.0 / math.sqrt(2.0))))


# ---------------- the fused kernel -------------------------------------------
def vit_fused_kernel(xp_ref, embed_ref, blk_w_ref, blk_w2_ref, blk_vec_ref,
                     head_ref, o_ref):
    n_rows = xp_ref.shape[0]              # B * L_PAD
    n_samples = n_rows // L_PAD

    # ---- patch embedding, batched over all B*L_PAD rows -----------------------
    # embed_ref rows [0:CPP]           = patch-embed weight (CPP, D)
    # embed_ref rows [CPP:CPP+n_rows]  = per-row additive base:
    #     patch rows: conv bias + pos_embed[1:]; cls row (row 16): cls_token + pos_embed[0];
    #     pad rows: zeros.  Cls/pad rows of xp are zero, so one matmul + add builds x.
    patch_w = embed_ref[0:CPP, :]                                        # (CPP, D)
    base = embed_ref[CPP:CPP + n_rows, :]                                # (rows, D)
    x = jnp.dot(xp_ref[...], patch_w,
                preferred_element_type=jnp.float32) + base               # (rows, D)

    # key-column mask for the padded token positions (hoisted out of the block loop)
    col = jax.lax.broadcasted_iota(jnp.int32, (1, L_PAD), 1)
    key_bias = jnp.where(col < L, 0.0, -1e30).astype(jnp.float32)        # (1, L_PAD)

    # ---- transformer blocks (static unroll over the stacked DEPTH axis) -------
    for d in range(DEPTH):
        # per-block vectors, packed as rows of a (8, LANE) tile
        ln1_w = blk_vec_ref[d, 0:1, 0:D]
        ln1_b = blk_vec_ref[d, 1:2, 0:D]
        ln2_w = blk_vec_ref[d, 2:3, 0:D]
        ln2_b = blk_vec_ref[d, 3:4, 0:D]
        bqkv  = blk_vec_ref[d, 4:5, 0:3 * D]
        bproj = blk_vec_ref[d, 5:6, 0:D]
        b1    = blk_vec_ref[d, 6:7, :]                                   # (1, MLP_HIDDEN)
        b2    = blk_vec_ref[d, 7:8, 0:D]
        # per-block matrices, packed along lanes: [wqkv | wproj | w1]
        wqkv  = blk_w_ref[d, :, 0:3 * D]                                 # (D, 3D)
        wproj = blk_w_ref[d, :, 3 * D:4 * D]                             # (D, D)
        w1    = blk_w_ref[d, :, 4 * D:4 * D + MLP_HIDDEN]                # (D, 4D)
        w2    = blk_w2_ref[d]                                            # (4D, D)

        # --- multi-head self-attention branch ---
        h = _layernorm(x, ln1_w, ln1_b)                                  # (rows, D)
        qkv = jnp.dot(h, wqkv,
                      preferred_element_type=jnp.float32) + bqkv         # (rows, 3D)

        # static unroll over samples and heads: lane-sliced plain dots, no 3-D einsums
        sample_outs = []
        for b in range(n_samples):
            r0 = b * L_PAD
            head_outs = []
            for hh in range(NUM_HEADS):
                q = qkv[r0:r0 + L_PAD, hh * DH:(hh + 1) * DH]            # (L_PAD, DH)
                k = qkv[r0:r0 + L_PAD, D + hh * DH:D + (hh + 1) * DH]
                v = qkv[r0:r0 + L_PAD, 2 * D + hh * DH:2 * D + (hh + 1) * DH]
                # q @ k^T via contracting-dim dot_general (no materialized transpose)
                s = jax.lax.dot_general(
                    q, k, (((1,), (1,)), ((), ())),
                    preferred_element_type=jnp.float32) * ATTN_SCALE     # (L_PAD, L_PAD)
                s = s + key_bias                                          # mask pad keys
                s = s - jnp.max(s, axis=-1, keepdims=True)
                p = jnp.exp(s)
                p = p / jnp.sum(p, axis=-1, keepdims=True)               # exact divide
                head_outs.append(jnp.dot(p, v,
                                         preferred_element_type=jnp.float32))
            sample_outs.append(jnp.concatenate(head_outs, axis=-1))      # (L_PAD, D)
        attn = jnp.concatenate(sample_outs, axis=0)                      # (rows, D)
        attn = jnp.dot(attn, wproj,
                       preferred_element_type=jnp.float32) + bproj
        x = x + attn

        # --- MLP branch ---
        h2 = _layernorm(x, ln2_w, ln2_b)
        m = jnp.dot(h2, w1, preferred_element_type=jnp.float32) + b1
        m = _gelu_exact(m)
        m = jnp.dot(m, w2, preferred_element_type=jnp.float32) + b2
        x = x + m

    # ---- final norm on the cls rows (row NP=16 of each sample block) + head ----
    cls = jnp.concatenate(
        [x[b * L_PAD + NP:b * L_PAD + NP + 1, :] for b in range(n_samples)],
        axis=0)                                                          # (B, D)
    norm_w = head_ref[D + 1:D + 2, 0:D]
    norm_b = head_ref[D + 2:D + 3, 0:D]
    cls = _layernorm(cls, norm_w, norm_b)

    head_w = head_ref[0:D, :]                                            # (D, LANE)
    head_b = head_ref[D:D + 1, :]                                        # (1, LANE)
    # single lane-dense (B, LANE) store; wrapper slices the first NUM_CLASSES lanes
    o_ref[...] = (jnp.dot(cls, head_w,
                          preferred_element_type=jnp.float32)
                  + head_b).astype(o_ref.dtype)


# ---------------- pallas_call wrapper -----------------------------------------
def vit_forward(x, params):
    Bn = x.shape[0]
    rows = Bn * L_PAD

    # patch extraction (pure reshape/transpose glue): NCHW -> (B, NP, C*p*p),
    # flattened in (c, py, px) order; then pad the token axis to L_PAD
    # (cls row + pad rows are zeros — the in-kernel matmul leaves them at 0).
    xp = x.reshape(Bn, C, IMG // PATCH, PATCH, IMG // PATCH, PATCH)
    xp = xp.transpose(0, 2, 4, 1, 3, 5).reshape(Bn, NP, CPP)
    xp = jnp.pad(xp, ((0, 0), (0, L_PAD - NP), (0, 0))).reshape(rows, CPP)

    # patch-embed Conv2d weight (D, C, P, P) -> (CPP, D) matmul in (c, py, px) order
    patch_w = params["patch_w"].reshape(D, CPP).T

    # additive base tile (cls-last token order; pos_embed reordered to match):
    #   patch rows: conv bias + pos_embed[1:], cls row: cls_token + pos_embed[0]
    pos = params["pos_embed"][0]                                         # (L, D)
    base_tok = jnp.zeros((L_PAD, D), jnp.float32)
    base_tok = base_tok.at[:NP].set(pos[1:] + params["patch_b"][None, :])
    base_tok = base_tok.at[NP].set(pos[0] + params["cls_token"].reshape(D))
    base = jnp.tile(base_tok[None], (Bn, 1, 1)).reshape(rows, D)

    embed_slab = jnp.concatenate([patch_w, base], axis=0)                # (CPP+rows, D)

    # per-block matrix slab: [wqkv | wproj | w1] along lanes
    blk_w = jnp.concatenate(
        [params["wqkv"], params["wproj"], params["w1"]], axis=-1)        # (DEPTH, D, 256)
    blk_w2 = params["w2"]                                                # (DEPTH, 4D, D)

    # per-block vector slab: 8 rows (each zero-padded to LANE lanes)
    def _row(v):
        v = v.reshape(DEPTH, -1)
        return jnp.pad(v, ((0, 0), (0, LANE - v.shape[-1])))
    blk_vec = jnp.stack(
        [_row(params["ln1_w"]), _row(params["ln1_b"]),
         _row(params["ln2_w"]), _row(params["ln2_b"]),
         _row(params["bqkv"]), _row(params["bproj"]),
         _row(params["b1"]), _row(params["b2"])], axis=1)                # (DEPTH, 8, LANE)

    # head slab: rows [0:D] head_w (padded to LANE lanes), D: head_b, D+1: norm_w, D+2: norm_b
    head_slab = jnp.concatenate(
        [jnp.pad(params["head_w"], ((0, 0), (0, LANE - NUM_CLASSES))),
         jnp.pad(params["head_b"].reshape(1, -1), ((0, 0), (0, LANE - NUM_CLASSES))),
         jnp.pad(params["norm_w"].reshape(1, -1), ((0, 0), (0, LANE - D))),
         jnp.pad(params["norm_b"].reshape(1, -1), ((0, 0), (0, LANE - D)))],
        axis=0)                                                          # (D+3, LANE)

    inputs = [xp, embed_slab, blk_w, blk_w2, blk_vec, head_slab]
    in_specs = [pl.BlockSpec(a.shape, lambda i, _nd=a.ndim: (0,) * _nd) for a in inputs]

    out = pl.pallas_call(
        vit_fused_kernel,
        out_shape=jax.ShapeDtypeStruct((Bn, LANE), jnp.float32),
        grid=(1,),
        in_specs=in_specs,
        out_specs=pl.BlockSpec((Bn, LANE), lambda i: (0, 0)),
        compiler_params=pltpu.CompilerParams(
            dimension_semantics=("arbitrary",)),
    )(*inputs)
    return out[:, :NUM_CLASSES]


# ---------------- parameter init (deterministic, synthetic, module layout) ---
def init_params(key):
    keys = iter(jax.random.split(key, 32))

    def nrm(shape, s=0.02):
        return s * jax.random.normal(next(keys), shape, jnp.float32)

    def stack(fn):
        return jnp.stack([fn() for _ in range(DEPTH)], axis=0)

    return {
        # torch Conv2d patch-embed layout (D, C, P, P); flattened in the wrapper
        "patch_w": nrm((D, C, PATCH, PATCH)),
        "patch_b": jnp.zeros((D,), jnp.float32),
        "cls_token": nrm((1, 1, D)),
        "pos_embed": nrm((1, L, D)),
        # per-block weights stacked along a leading DEPTH axis
        "ln1_w": jnp.ones((DEPTH, D), jnp.float32),
        "ln1_b": jnp.zeros((DEPTH, D), jnp.float32),
        "wqkv":  stack(lambda: nrm((D, 3 * D))),
        "bqkv":  jnp.zeros((DEPTH, 3 * D), jnp.float32),
        "wproj": stack(lambda: nrm((D, D))),
        "bproj": jnp.zeros((DEPTH, D), jnp.float32),
        "ln2_w": jnp.ones((DEPTH, D), jnp.float32),
        "ln2_b": jnp.zeros((DEPTH, D), jnp.float32),
        "w1":    stack(lambda: nrm((D, MLP_HIDDEN))),
        "b1":    jnp.zeros((DEPTH, MLP_HIDDEN), jnp.float32),
        "w2":    stack(lambda: nrm((MLP_HIDDEN, D))),
        "b2":    jnp.zeros((DEPTH, D), jnp.float32),
        # final norm + head
        "norm_w": jnp.ones((D,), jnp.float32),
        "norm_b": jnp.zeros((D,), jnp.float32),
        "head_w": nrm((D, NUM_CLASSES)),
        "head_b": jnp.zeros((NUM_CLASSES,), jnp.float32),
    }


if __name__ == "__main__":
    key = jax.random.PRNGKey(0)
    kx, kp = jax.random.split(key)
    x = jax.random.normal(kx, (B, C, IMG, IMG), jnp.float32)
    params = init_params(kp)

    out = jax.jit(vit_forward)(x, params)
    out = jax.block_until_ready(out)
    assert out.shape == (B, NUM_CLASSES), out.shape
    assert jnp.all(jnp.isfinite(out))
    print("KERNEL_OK")
</pallas_src>

<mosaic_0001>
module attributes {stable_mosaic.version = 11 : i64} {
  func.func @vit_fused_kernel(%arg0: i32, %arg1: memref<48x64xf32, #tpu.memory_space<vmem>>, %arg2: memref<112x32xf32, #tpu.memory_space<vmem>>, %arg3: memref<2x32x256xf32, #tpu.memory_space<vmem>>, %arg4: memref<2x128x32xf32, #tpu.memory_space<vmem>>, %arg5: memref<2x8x128xf32, #tpu.memory_space<vmem>>, %arg6: memref<35x128xf32, #tpu.memory_space<vmem>>, %arg7: memref<2x128xf32, #tpu.memory_space<vmem>>) attributes {dimension_semantics = [#tpu.dimension_semantics<arbitrary>], iteration_bounds = array<i64: 1>, scalar_prefetch = 0 : i64, scratch_operands = 0 : i64, tpu.core_type = #tpu.core_type<tc>, window_params = [{pipeline_mode = #tpu.pipeline_mode<synchronous>, transform_indices = @transform_0, window_bounds = array<i64: 48, 64>}, {pipeline_mode = #tpu.pipeline_mode<synchronous>, transform_indices = @transform_1, window_bounds = array<i64: 112, 32>}, {pipeline_mode = #tpu.pipeline_mode<synchronous>, transform_indices = @transform_2, window_bounds = array<i64: 2, 32, 256>}, {pipeline_mode = #tpu.pipeline_mode<synchronous>, transform_indices = @transform_3, window_bounds = array<i64: 2, 128, 32>}, {pipeline_mode = #tpu.pipeline_mode<synchronous>, transform_indices = @transform_4, window_bounds = array<i64: 2, 8, 128>}, {pipeline_mode = #tpu.pipeline_mode<synchronous>, transform_indices = @transform_5, window_bounds = array<i64: 35, 128>}, {pipeline_mode = #tpu.pipeline_mode<synchronous>, transform_indices = @transform_6, window_bounds = array<i64: 2, 128>}]} {
    %c0 = arith.constant 0 : index
    %c0_0 = arith.constant 0 : index
    %0 = vector.load %arg2[%c0, %c0_0] : memref<112x32xf32, #tpu.memory_space<vmem>>, vector<64x32xf32>
    %c64 = arith.constant 64 : index
    %c0_1 = arith.constant 0 : index
    %1 = vector.load %arg2[%c64, %c0_1] : memref<112x32xf32, #tpu.memory_space<vmem>>, vector<48x32xf32>
    %c0_2 = arith.constant 0 : index
    %c0_3 = arith.constant 0 : index
    %2 = vector.load %arg1[%c0_2, %c0_3] : memref<48x64xf32, #tpu.memory_space<vmem>>, vector<48x64xf32>
    %cst = arith.constant dense<0.000000e+00> : vector<48x32xf32>
    %3 = tpu.matmul %2, %0, %cst {dimension_numbers = #tpu.dot_dimension_numbers<[1], [0], [0], [1], [0, 0, 1, 1], [], []>} : vector<48x64xf32>, vector<64x32xf32>, vector<48x32xf32> -> vector<48x32xf32>
    %4 = arith.addf %3, %1 : vector<48x32xf32>
    %5 = tpu.iota {dimensions = array<i32: 1>} : vector<1x24xi32>
    %c17_i32 = arith.constant 17 : i32
    %6 = vector.broadcast %c17_i32 : i32 to vector<1x24xi32>
    %7 = arith.cmpi slt, %5, %6 : vector<1x24xi32>
    %cst_4 = arith.constant 0.000000e+00 : f32
    %cst_5 = arith.constant -1.000000e+30 : f32
    %8 = vector.broadcast %cst_4 : f32 to vector<1x24xf32>
    %9 = vector.broadcast %cst_5 : f32 to vector<1x24xf32>
    %10 = arith.select %7, %8, %9 : vector<1x24xi1>, vector<1x24xf32>
    %c0_6 = arith.constant 0 : index
    %c0_7 = arith.constant 0 : index
    %c0_8 = arith.constant 0 : index
    %11 = vector.load %arg5[%c0_6, %c0_7, %c0_8] : memref<2x8x128xf32, #tpu.memory_space<vmem>>, vector<1x1x32xf32>
    %12 = vector.shape_cast %11 : vector<1x1x32xf32> to vector<1x32xf32>
    %c0_9 = arith.constant 0 : index
    %c1 = arith.constant 1 : index
    %c0_10 = arith.constant 0 : index
    %13 = vector.load %arg5[%c0_9, %c1, %c0_10] : memref<2x8x128xf32, #tpu.memory_space<vmem>>, vector<1x1x32xf32>
    %14 = vector.shape_cast %13 : vector<1x1x32xf32> to vector<1x32xf32>
    %c0_11 = arith.constant 0 : index
    %c2 = arith.constant 2 : index
    %c0_12 = arith.constant 0 : index
    %15 = vector.load %arg5[%c0_11, %c2, %c0_12] : memref<2x8x128xf32, #tpu.memory_space<vmem>>, vector<1x1x32xf32>
    %16 = vector.shape_cast %15 : vector<1x1x32xf32> to vector<1x32xf32>
    %c0_13 = arith.constant 0 : index
    %c3 = arith.constant 3 : index
    %c0_14 = arith.constant 0 : index
    %17 = vector.load %arg5[%c0_13, %c3, %c0_14] : memref<2x8x128xf32, #tpu.memory_space<vmem>>, vector<1x1x32xf32>
    %18 = vector.shape_cast %17 : vector<1x1x32xf32> to vector<1x32xf32>
    %c0_15 = arith.constant 0 : index
    %c4 = arith.constant 4 : index
    %c0_16 = arith.constant 0 : index
    %19 = vector.load %arg5[%c0_15, %c4, %c0_16] : memref<2x8x128xf32, #tpu.memory_space<vmem>>, vector<1x1x96xf32>
    %20 = vector.shape_cast %19 : vector<1x1x96xf32> to vector<1x96xf32>
    %c0_17 = arith.constant 0 : index
    %c5 = arith.constant 5 : index
    %c0_18 = arith.constant 0 : index
    %21 = vector.load %arg5[%c0_17, %c5, %c0_18] : memref<2x8x128xf32, #tpu.memory_space<vmem>>, vector<1x1x32xf32>
    %22 = vector.shape_cast %21 : vector<1x1x32xf32> to vector<1x32xf32>
    %c0_19 = arith.constant 0 : index
    %c6 = arith.constant 6 : index
    %c0_20 = arith.constant 0 : index
    %23 = vector.load %arg5[%c0_19, %c6, %c0_20] : memref<2x8x128xf32, #tpu.memory_space<vmem>>, vector<1x1x128xf32>
    %24 = vector.shape_cast %23 : vector<1x1x128xf32> to vector<1x128xf32>
    %c0_21 = arith.constant 0 : index
    %c7 = arith.constant 7 : index
    %c0_22 = arith.constant 0 : index
    %25 = vector.load %arg5[%c0_21, %c7, %c0_22] : memref<2x8x128xf32, #tpu.memory_space<vmem>>, vector<1x1x32xf32>
    %26 = vector.shape_cast %25 : vector<1x1x32xf32> to vector<1x32xf32>
    %c0_23 = arith.constant 0 : index
    %c0_24 = arith.constant 0 : index
    %c0_25 = arith.constant 0 : index
    %27 = vector.load %arg3[%c0_23, %c0_24, %c0_25] : memref<2x32x256xf32, #tpu.memory_space<vmem>>, vector<1x32x96xf32>
    %28 = vector.shape_cast %27 : vector<1x32x96xf32> to vector<32x96xf32>
    %c0_26 = arith.constant 0 : index
    %c0_27 = arith.constant 0 : index
    %c96 = arith.constant 96 : index
    %29 = vector.load %arg3[%c0_26, %c0_27, %c96] : memref<2x32x256xf32, #tpu.memory_space<vmem>>, vector<1x32x32xf32>
    %30 = vector.shape_cast %29 : vector<1x32x32xf32> to vector<32x32xf32>
    %c0_28 = arith.constant 0 : index
    %c0_29 = arith.constant 0 : index
    %c128 = arith.constant 128 : index
    %31 = vector.load %arg3[%c0_28, %c0_29, %c128] : memref<2x32x256xf32, #tpu.memory_space<vmem>>, vector<1x32x128xf32>
    %32 = vector.shape_cast %31 : vector<1x32x128xf32> to vector<32x128xf32>
    %c0_30 = arith.constant 0 : index
    %c0_31 = arith.constant 0 : index
    %c0_32 = arith.constant 0 : index
    %33 = vector.load %arg4[%c0_30, %c0_31, %c0_32] : memref<2x128x32xf32, #tpu.memory_space<vmem>>, vector<1x128x32xf32>
    %34 = vector.shape_cast %33 : vector<1x128x32xf32> to vector<128x32xf32>
    %cst_33 = arith.constant dense<0.000000e+00> : vector<48xf32>
    %35 = vector.multi_reduction <add>, %4, %cst_33 [1] : vector<48x32xf32> to vector<48xf32>
    %36 = vector.shape_cast %35 : vector<48xf32> to vector<48x1xf32>
    %cst_34 = arith.constant 3.200000e+01 : f32
    %37 = vector.broadcast %cst_34 : f32 to vector<48x1xf32>
    %38 = arith.divf %36, %37 : vector<48x1xf32>
    %39 = vector.broadcast %38 : vector<48x1xf32> to vector<48x32xf32>
    %40 = arith.subf %4, %39 : vector<48x32xf32>
    %41 = arith.mulf %40, %40 : vector<48x32xf32>
    %cst_35 = arith.constant dense<0.000000e+00> : vector<48xf32>
    %42 = vector.multi_reduction <add>, %41, %cst_35 [1] : vector<48x32xf32> to vector<48xf32>
    %43 = vector.shape_cast %42 : vector<48xf32> to vector<48x1xf32>
    %cst_36 = arith.constant 3.200000e+01 : f32
    %44 = vector.broadcast %cst_36 : f32 to vector<48x1xf32>
    %45 = arith.divf %43, %44 : vector<48x1xf32>
    %cst_37 = arith.constant 9.99999997E-7 : f32
    %46 = vector.broadcast %cst_37 : f32 to vector<48x1xf32>
    %47 = arith.addf %45, %46 : vector<48x1xf32>
    %48 = math.rsqrt %47 : vector<48x1xf32>
    %49 = vector.broadcast %48 : vector<48x1xf32> to vector<48x32xf32>
    %50 = arith.mulf %40, %49 : vector<48x32xf32>
    %51 = vector.broadcast %12 : vector<1x32xf32> to vector<48x32xf32>
    %52 = arith.mulf %50, %51 : vector<48x32xf32>
    %53 = vector.broadcast %14 : vector<1x32xf32> to vector<48x32xf32>
    %54 = arith.addf %52, %53 : vector<48x32xf32>
    %cst_38 = arith.constant dense<0.000000e+00> : vector<48x96xf32>
    %55 = tpu.matmul %54, %28, %cst_38 {dimension_numbers = #tpu.dot_dimension_numbers<[1], [0], [0], [1], [0, 0, 1, 1], [], []>} : vector<48x32xf32>, vector<32x96xf32>, vector<48x96xf32> -> vector<48x96xf32>
    %56 = vector.broadcast %20 : vector<1x96xf32> to vector<48x96xf32>
    %57 = arith.addf %55, %56 : vector<48x96xf32>
    %58 = vector.extract_strided_slice %57 {offsets = [0, 0], sizes = [24, 8], strides = [1, 1]} : vector<48x96xf32> to vector<24x8xf32>
    %59 = vector.extract_strided_slice %57 {offsets = [0, 32], sizes = [24, 8], strides = [1, 1]} : vector<48x96xf32> to vector<24x8xf32>
    %60 = vector.extract_strided_slice %57 {offsets = [0, 64], sizes = [24, 8], strides = [1, 1]} : vector<48x96xf32> to vector<24x8xf32>
    %cst_39 = arith.constant dense<0.000000e+00> : vector<24x24xf32>
    %61 = tpu.matmul %58, %59, %cst_39 {dimension_numbers = #tpu.dot_dimension_numbers<[1], [1], [0], [0], [0, 0, 1, 0], [], []>} : vector<24x8xf32>, vector<24x8xf32>, vector<24x24xf32> -> vector<24x24xf32>
    %cst_40 = arith.constant 0.353553385 : f32
    %62 = vector.broadcast %cst_40 : f32 to vector<24x24xf32>
    %63 = arith.mulf %61, %62 : vector<24x24xf32>
    %64 = vector.broadcast %10 : vector<1x24xf32> to vector<24x24xf32>
    %65 = arith.addf %63, %64 : vector<24x24xf32>
    %cst_41 = arith.constant dense<0xFF800000> : vector<24xf32>
    %66 = vector.multi_reduction <maximumf>, %65, %cst_41 [1] : vector<24x24xf32> to vector<24xf32>
    %67 = vector.shape_cast %66 : vector<24xf32> to vector<24x1xf32>
    %68 = vector.broadcast %67 : vector<24x1xf32> to vector<24x24xf32>
    %69 = arith.subf %65, %68 : vector<24x24xf32>
    %70 = math.exp %69 : vector<24x24xf32>
    %cst_42 = arith.constant dense<0.000000e+00> : vector<24xf32>
    %71 = vector.multi_reduction <add>, %70, %cst_42 [1] : vector<24x24xf32> to vector<24xf32>
    %72 = vector.shape_cast %71 : vector<24xf32> to vector<24x1xf32>
    %73 = vector.broadcast %72 : vector<24x1xf32> to vector<24x24xf32>
    %74 = arith.divf %70, %73 : vector<24x24xf32>
    %cst_43 = arith.constant dense<0.000000e+00> : vector<24x8xf32>
    %75 = tpu.matmul %74, %60, %cst_43 {dimension_numbers = #tpu.dot_dimension_numbers<[1], [0], [0], [1], [0, 0, 1, 1], [], []>} : vector<24x24xf32>, vector<24x8xf32>, vector<24x8xf32> -> vector<24x8xf32>
    %76 = vector.extract_strided_slice %57 {offsets = [0, 8], sizes = [24, 8], strides = [1, 1]} : vector<48x96xf32> to vector<24x8xf32>
    %77 = vector.extract_strided_slice %57 {offsets = [0, 40], sizes = [24, 8], strides = [1, 1]} : vector<48x96xf32> to vector<24x8xf32>
    %78 = vector.extract_strided_slice %57 {offsets = [0, 72], sizes = [24, 8], strides = [1, 1]} : vector<48x96xf32> to vector<24x8xf32>
    %cst_44 = arith.constant dense<0.000000e+00> : vector<24x24xf32>
    %79 = tpu.matmul %76, %77, %cst_44 {dimension_numbers = #tpu.dot_dimension_numbers<[1], [1], [0], [0], [0, 0, 1, 0], [], []>} : vector<24x8xf32>, vector<24x8xf32>, vector<24x24xf32> -> vector<24x24xf32>
    %cst_45 = arith.constant 0.353553385 : f32
    %80 = vector.broadcast %cst_45 : f32 to vector<24x24xf32>
    %81 = arith.mulf %79, %80 : vector<24x24xf32>
    %82 = vector.broadcast %10 : vector<1x24xf32> to vector<24x24xf32>
    %83 = arith.addf %81, %82 : vector<24x24xf32>
    %cst_46 = arith.constant dense<0xFF800000> : vector<24xf32>
    %84 = vector.multi_reduction <maximumf>, %83, %cst_46 [1] : vector<24x24xf32> to vector<24xf32>
    %85 = vector.shape_cast %84 : vector<24xf32> to vector<24x1xf32>
    %86 = vector.broadcast %85 : vector<24x1xf32> to vector<24x24xf32>
    %87 = arith.subf %83, %86 : vector<24x24xf32>
    %88 = math.exp %87 : vector<24x24xf32>
    %cst_47 = arith.constant dense<0.000000e+00> : vector<24xf32>
    %89 = vector.multi_reduction <add>, %88, %cst_47 [1] : vector<24x24xf32> to vector<24xf32>
    %90 = vector.shape_cast %89 : vector<24xf32> to vector<24x1xf32>
    %91 = vector.broadcast %90 : vector<24x1xf32> to vector<24x24xf32>
    %92 = arith.divf %88, %91 : vector<24x24xf32>
    %cst_48 = arith.constant dense<0.000000e+00> : vector<24x8xf32>
    %93 = tpu.matmul %92, %78, %cst_48 {dimension_numbers = #tpu.dot_dimension_numbers<[1], [0], [0], [1], [0, 0, 1, 1], [], []>} : vector<24x24xf32>, vector<24x8xf32>, vector<24x8xf32> -> vector<24x8xf32>
    %94 = vector.extract_strided_slice %57 {offsets = [0, 16], sizes = [24, 8], strides = [1, 1]} : vector<48x96xf32> to vector<24x8xf32>
    %95 = vector.extract_strided_slice %57 {offsets = [0, 48], sizes = [24, 8], strides = [1, 1]} : vector<48x96xf32> to vector<24x8xf32>
    %96 = vector.extract_strided_slice %57 {offsets = [0, 80], sizes = [24, 8], strides = [1, 1]} : vector<48x96xf32> to vector<24x8xf32>
    %cst_49 = arith.constant dense<0.000000e+00> : vector<24x24xf32>
    %97 = tpu.matmul %94, %95, %cst_49 {dimension_numbers = #tpu.dot_dimension_numbers<[1], [1], [0], [0], [0, 0, 1, 0], [], []>} : vector<24x8xf32>, vector<24x8xf32>, vector<24x24xf32> -> vector<24x24xf32>
    %cst_50 = arith.constant 0.353553385 : f32
    %98 = vector.broadcast %cst_50 : f32 to vector<24x24xf32>
    %99 = arith.mulf %97, %98 : vector<24x24xf32>
    %100 = vector.broadcast %10 : vector<1x24xf32> to vector<24x24xf32>
    %101 = arith.addf %99, %100 : vector<24x24xf32>
    %cst_51 = arith.constant dense<0xFF800000> : vector<24xf32>
    %102 = vector.multi_reduction <maximumf>, %101, %cst_51 [1] : vector<24x24xf32> to vector<24xf32>
    %103 = vector.shape_cast %102 : vector<24xf32> to vector<24x1xf32>
    %104 = vector.broadcast %103 : vector<24x1xf32> to vector<24x24xf32>
    %105 = arith.subf %101, %104 : vector<24x24xf32>
    %106 = math.exp %105 : vector<24x24xf32>
    %cst_52 = arith.constant dense<0.000000e+00> : vector<24xf32>
    %107 = vector.multi_reduction <add>, %106, %cst_52 [1] : vector<24x24xf32> to vector<24xf32>
    %108 = vector.shape_cast %107 : vector<24xf32> to vector<24x1xf32>
    %109 = vector.broadcast %108 : vector<24x1xf32> to vector<24x24xf32>
    %110 = arith.divf %106, %109 : vector<24x24xf32>
    %cst_53 = arith.constant dense<0.000000e+00> : vector<24x8xf32>
    %111 = tpu.matmul %110, %96, %cst_53 {dimension_numbers = #tpu.dot_dimension_numbers<[1], [0], [0], [1], [0, 0, 1, 1], [], []>} : vector<24x24xf32>, vector<24x8xf32>, vector<24x8xf32> -> vector<24x8xf32>
    %112 = vector.extract_strided_slice %57 {offsets = [0, 24], sizes = [24, 8], strides = [1, 1]} : vector<48x96xf32> to vector<24x8xf32>
    %113 = vector.extract_strided_slice %57 {offsets = [0, 56], sizes = [24, 8], strides = [1, 1]} : vector<48x96xf32> to vector<24x8xf32>
    %114 = vector.extract_strided_slice %57 {offsets = [0, 88], sizes = [24, 8], strides = [1, 1]} : vector<48x96xf32> to vector<24x8xf32>
    %cst_54 = arith.constant dense<0.000000e+00> : vector<24x24xf32>
    %115 = tpu.matmul %112, %113, %cst_54 {dimension_numbers = #tpu.dot_dimension_numbers<[1], [1], [0], [0], [0, 0, 1, 0], [], []>} : vector<24x8xf32>, vector<24x8xf32>, vector<24x24xf32> -> vector<24x24xf32>
    %cst_55 = arith.constant 0.353553385 : f32
    %116 = vector.broadcast %cst_55 : f32 to vector<24x24xf32>
    %117 = arith.mulf %115, %116 : vector<24x24xf32>
    %118 = vector.broadcast %10 : vector<1x24xf32> to vector<24x24xf32>
    %119 = arith.addf %117, %118 : vector<24x24xf32>
    %cst_56 = arith.constant dense<0xFF800000> : vector<24xf32>
    %120 = vector.multi_reduction <maximumf>, %119, %cst_56 [1] : vector<24x24xf32> to vector<24xf32>
    %121 = vector.shape_cast %120 : vector<24xf32> to vector<24x1xf32>
    %122 = vector.broadcast %121 : vector<24x1xf32> to vector<24x24xf32>
    %123 = arith.subf %119, %122 : vector<24x24xf32>
    %124 = math.exp %123 : vector<24x24xf32>
    %cst_57 = arith.constant dense<0.000000e+00> : vector<24xf32>
    %125 = vector.multi_reduction <add>, %124, %cst_57 [1] : vector<24x24xf32> to vector<24xf32>
    %126 = vector.shape_cast %125 : vector<24xf32> to vector<24x1xf32>
    %127 = vector.broadcast %126 : vector<24x1xf32> to vector<24x24xf32>
    %128 = arith.divf %124, %127 : vector<24x24xf32>
    %cst_58 = arith.constant dense<0.000000e+00> : vector<24x8xf32>
    %129 = tpu.matmul %128, %114, %cst_58 {dimension_numbers = #tpu.dot_dimension_numbers<[1], [0], [0], [1], [0, 0, 1, 1], [], []>} : vector<24x24xf32>, vector<24x8xf32>, vector<24x8xf32> -> vector<24x8xf32>
    %130 = tpu.concatenate %75, %93, %111, %129 in 1 : vector<24x8xf32>, vector<24x8xf32>, vector<24x8xf32>, vector<24x8xf32> -> vector<24x32xf32>
    %131 = vector.extract_strided_slice %57 {offsets = [24, 0], sizes = [24, 8], strides = [1, 1]} : vector<48x96xf32> to vector<24x8xf32>
    %132 = vector.extract_strided_slice %57 {offsets = [24, 32], sizes = [24, 8], strides = [1, 1]} : vector<48x96xf32> to vector<24x8xf32>
    %133 = vector.extract_strided_slice %57 {offsets = [24, 64], sizes = [24, 8], strides = [1, 1]} : vector<48x96xf32> to vector<24x8xf32>
    %cst_59 = arith.constant dense<0.000000e+00> : vector<24x24xf32>
    %134 = tpu.matmul %131, %132, %cst_59 {dimension_numbers = #tpu.dot_dimension_numbers<[1], [1], [0], [0], [0, 0, 1, 0], [], []>} : vector<24x8xf32>, vector<24x8xf32>, vector<24x24xf32> -> vector<24x24xf32>
    %cst_60 = arith.constant 0.353553385 : f32
    %135 = vector.broadcast %cst_60 : f32 to vector<24x24xf32>
    %136 = arith.mulf %134, %135 : vector<24x24xf32>
    %137 = vector.broadcast %10 : vector<1x24xf32> to vector<24x24xf32>
    %138 = arith.addf %136, %137 : vector<24x24xf32>
    %cst_61 = arith.constant dense<0xFF800000> : vector<24xf32>
    %139 = vector.multi_reduction <maximumf>, %138, %cst_61 [1] : vector<24x24xf32> to vector<24xf32>
    %140 = vector.shape_cast %139 : vector<24xf32> to vector<24x1xf32>
    %141 = vector.broadcast %140 : vector<24x1xf32> to vector<24x24xf32>
    %142 = arith.subf %138, %141 : vector<24x24xf32>
    %143 = math.exp %142 : vector<24x24xf32>
    %cst_62 = arith.constant dense<0.000000e+00> : vector<24xf32>
    %144 = vector.multi_reduction <add>, %143, %cst_62 [1] : vector<24x24xf32> to vector<24xf32>
    %145 = vector.shape_cast %144 : vector<24xf32> to vector<24x1xf32>
    %146 = vector.broadcast %145 : vector<24x1xf32> to vector<24x24xf32>
    %147 = arith.divf %143, %146 : vector<24x24xf32>
    %cst_63 = arith.constant dense<0.000000e+00> : vector<24x8xf32>
    %148 = tpu.matmul %147, %133, %cst_63 {dimension_numbers = #tpu.dot_dimension_numbers<[1], [0], [0], [1], [0, 0, 1, 1], [], []>} : vector<24x24xf32>, vector<24x8xf32>, vector<24x8xf32> -> vector<24x8xf32>
    %149 = vector.extract_strided_slice %57 {offsets = [24, 8], sizes = [24, 8], strides = [1, 1]} : vector<48x96xf32> to vector<24x8xf32>
    %150 = vector.extract_strided_slice %57 {offsets = [24, 40], sizes = [24, 8], strides = [1, 1]} : vector<48x96xf32> to vector<24x8xf32>
    %151 = vector.extract_strided_slice %57 {offsets = [24, 72], sizes = [24, 8], strides = [1, 1]} : vector<48x96xf32> to vector<24x8xf32>
    %cst_64 = arith.constant dense<0.000000e+00> : vector<24x24xf32>
    %152 = tpu.matmul %149, %150, %cst_64 {dimension_numbers = #tpu.dot_dimension_numbers<[1], [1], [0], [0], [0, 0, 1, 0], [], []>} : vector<24x8xf32>, vector<24x8xf32>, vector<24x24xf32> -> vector<24x24xf32>
    %cst_65 = arith.constant 0.353553385 : f32
    %153 = vector.broadcast %cst_65 : f32 to vector<24x24xf32>
    %154 = arith.mulf %152, %153 : vector<24x24xf32>
    %155 = vector.broadcast %10 : vector<1x24xf32> to vector<24x24xf32>
    %156 = arith.addf %154, %155 : vector<24x24xf32>
    %cst_66 = arith.constant dense<0xFF800000> : vector<24xf32>
    %157 = vector.multi_reduction <maximumf>, %156, %cst_66 [1] : vector<24x24xf32> to vector<24xf32>
    %158 = vector.shape_cast %157 : vector<24xf32> to vector<24x1xf32>
    %159 = vector.broadcast %158 : vector<24x1xf32> to vector<24x24xf32>
    %160 = arith.subf %156, %159 : vector<24x24xf32>
    %161 = math.exp %160 : vector<24x24xf32>
    %cst_67 = arith.constant dense<0.000000e+00> : vector<24xf32>
    %162 = vector.multi_reduction <add>, %161, %cst_67 [1] : vector<24x24xf32> to vector<24xf32>
    %163 = vector.shape_cast %162 : vector<24xf32> to vector<24x1xf32>
    %164 = vector.broadcast %163 : vector<24x1xf32> to vector<24x24xf32>
    %165 = arith.divf %161, %164 : vector<24x24xf32>
    %cst_68 = arith.constant dense<0.000000e+00> : vector<24x8xf32>
    %166 = tpu.matmul %165, %151, %cst_68 {dimension_numbers = #tpu.dot_dimension_numbers<[1], [0], [0], [1], [0, 0, 1, 1], [], []>} : vector<24x24xf32>, vector<24x8xf32>, vector<24x8xf32> -> vector<24x8xf32>
    %167 = vector.extract_strided_slice %57 {offsets = [24, 16], sizes = [24, 8], strides = [1, 1]} : vector<48x96xf32> to vector<24x8xf32>
    %168 = vector.extract_strided_slice %57 {offsets = [24, 48], sizes = [24, 8], strides = [1, 1]} : vector<48x96xf32> to vector<24x8xf32>
    %169 = vector.extract_strided_slice %57 {offsets = [24, 80], sizes = [24, 8], strides = [1, 1]} : vector<48x96xf32> to vector<24x8xf32>
    %cst_69 = arith.constant dense<0.000000e+00> : vector<24x24xf32>
    %170 = tpu.matmul %167, %168, %cst_69 {dimension_numbers = #tpu.dot_dimension_numbers<[1], [1], [0], [0], [0, 0, 1, 0], [], []>} : vector<24x8xf32>, vector<24x8xf32>, vector<24x24xf32> -> vector<24x24xf32>
    %cst_70 = arith.constant 0.353553385 : f32
    %171 = vector.broadcast %cst_70 : f32 to vector<24x24xf32>
    %172 = arith.mulf %170, %171 : vector<24x24xf32>
    %173 = vector.broadcast %10 : vector<1x24xf32> to vector<24x24xf32>
    %174 = arith.addf %172, %173 : vector<24x24xf32>
    %cst_71 = arith.constant dense<0xFF800000> : vector<24xf32>
    %175 = vector.multi_reduction <maximumf>, %174, %cst_71 [1] : vector<24x24xf32> to vector<24xf32>
    %176 = vector.shape_cast %175 : vector<24xf32> to vector<24x1xf32>
    %177 = vector.broadcast %176 : vector<24x1xf32> to vector<24x24xf32>
    %178 = arith.subf %174, %177 : vector<24x24xf32>
    %179 = math.exp %178 : vector<24x24xf32>
    %cst_72 = arith.constant dense<0.000000e+00> : vector<24xf32>
    %180 = vector.multi_reduction <add>, %179, %cst_72 [1] : vector<24x24xf32> to vector<24xf32>
    %181 = vector.shape_cast %180 : vector<24xf32> to vector<24x1xf32>
    %182 = vector.broadcast %181 : vector<24x1xf32> to vector<24x24xf32>
    %183 = arith.divf %179, %182 : vector<24x24xf32>
    %cst_73 = arith.constant dense<0.000000e+00> : vector<24x8xf32>
    %184 = tpu.matmul %183, %169, %cst_73 {dimension_numbers = #tpu.dot_dimension_numbers<[1], [0], [0], [1], [0, 0, 1, 1], [], []>} : vector<24x24xf32>, vector<24x8xf32>, vector<24x8xf32> -> vector<24x8xf32>
    %185 = vector.extract_strided_slice %57 {offsets = [24, 24], sizes = [24, 8], strides = [1, 1]} : vector<48x96xf32> to vector<24x8xf32>
    %186 = vector.extract_strided_slice %57 {offsets = [24, 56], sizes = [24, 8], strides = [1, 1]} : vector<48x96xf32> to vector<24x8xf32>
    %187 = vector.extract_strided_slice %57 {offsets = [24, 88], sizes = [24, 8], strides = [1, 1]} : vector<48x96xf32> to vector<24x8xf32>
    %cst_74 = arith.constant dense<0.000000e+00> : vector<24x24xf32>
    %188 = tpu.matmul %185, %186, %cst_74 {dimension_numbers = #tpu.dot_dimension_numbers<[1], [1], [0], [0], [0, 0, 1, 0], [], []>} : vector<24x8xf32>, vector<24x8xf32>, vector<24x24xf32> -> vector<24x24xf32>
    %cst_75 = arith.constant 0.353553385 : f32
    %189 = vector.broadcast %cst_75 : f32 to vector<24x24xf32>
    %190 = arith.mulf %188, %189 : vector<24x24xf32>
    %191 = vector.broadcast %10 : vector<1x24xf32> to vector<24x24xf32>
    %192 = arith.addf %190, %191 : vector<24x24xf32>
    %cst_76 = arith.constant dense<0xFF800000> : vector<24xf32>
    %193 = vector.multi_reduction <maximumf>, %192, %cst_76 [1] : vector<24x24xf32> to vector<24xf32>
    %194 = vector.shape_cast %193 : vector<24xf32> to vector<24x1xf32>
    %195 = vector.broadcast %194 : vector<24x1xf32> to vector<24x24xf32>
    %196 = arith.subf %192, %195 : vector<24x24xf32>
    %197 = math.exp %196 : vector<24x24xf32>
    %cst_77 = arith.constant dense<0.000000e+00> : vector<24xf32>
    %198 = vector.multi_reduction <add>, %197, %cst_77 [1] : vector<24x24xf32> to vector<24xf32>
    %199 = vector.shape_cast %198 : vector<24xf32> to vector<24x1xf32>
    %200 = vector.broadcast %199 : vector<24x1xf32> to vector<24x24xf32>
    %201 = arith.divf %197, %200 : vector<24x24xf32>
    %cst_78 = arith.constant dense<0.000000e+00> : vector<24x8xf32>
    %202 = tpu.matmul %201, %187, %cst_78 {dimension_numbers = #tpu.dot_dimension_numbers<[1], [0], [0], [1], [0, 0, 1, 1], [], []>} : vector<24x24xf32>, vector<24x8xf32>, vector<24x8xf32> -> vector<24x8xf32>
    %203 = tpu.concatenate %148, %166, %184, %202 in 1 : vector<24x8xf32>, vector<24x8xf32>, vector<24x8xf32>, vector<24x8xf32> -> vector<24x32xf32>
    %204 = tpu.concatenate %130, %203 in 0 : vector<24x32xf32>, vector<24x32xf32> -> vector<48x32xf32>
    %cst_79 = arith.constant dense<0.000000e+00> : vector<48x32xf32>
    %205 = tpu.matmul %204, %30, %cst_79 {dimension_numbers = #tpu.dot_dimension_numbers<[1], [0], [0], [1], [0, 0, 1, 1], [], []>} : vector<48x32xf32>, vector<32x32xf32>, vector<48x32xf32> -> vector<48x32xf32>
    %206 = vector.broadcast %22 : vector<1x32xf32> to vector<48x32xf32>
    %207 = arith.addf %205, %206 : vector<48x32xf32>
    %208 = arith.addf %4, %207 : vector<48x32xf32>
    %cst_80 = arith.constant dense<0.000000e+00> : vector<48xf32>
    %209 = vector.multi_reduction <add>, %208, %cst_80 [1] : vector<48x32xf32> to vector<48xf32>
    %210 = vector.shape_cast %209 : vector<48xf32> to vector<48x1xf32>
    %cst_81 = arith.constant 3.200000e+01 : f32
    %211 = vector.broadcast %cst_81 : f32 to vector<48x1xf32>
    %212 = arith.divf %210, %211 : vector<48x1xf32>
    %213 = vector.broadcast %212 : vector<48x1xf32> to vector<48x32xf32>
    %214 = arith.subf %208, %213 : vector<48x32xf32>
    %215 = arith.mulf %214, %214 : vector<48x32xf32>
    %cst_82 = arith.constant dense<0.000000e+00> : vector<48xf32>
    %216 = vector.multi_reduction <add>, %215, %cst_82 [1] : vector<48x32xf32> to vector<48xf32>
    %217 = vector.shape_cast %216 : vector<48xf32> to vector<48x1xf32>
    %cst_83 = arith.constant 3.200000e+01 : f32
    %218 = vector.broadcast %cst_83 : f32 to vector<48x1xf32>
    %219 = arith.divf %217, %218 : vector<48x1xf32>
    %cst_84 = arith.constant 9.99999997E-7 : f32
    %220 = vector.broadcast %cst_84 : f32 to vector<48x1xf32>
    %221 = arith.addf %219, %220 : vector<48x1xf32>
    %222 = math.rsqrt %221 : vector<48x1xf32>
    %223 = vector.broadcast %222 : vector<48x1xf32> to vector<48x32xf32>
    %224 = arith.mulf %214, %223 : vector<48x32xf32>
    %225 = vector.broadcast %16 : vector<1x32xf32> to vector<48x32xf32>
    %226 = arith.mulf %224, %225 : vector<48x32xf32>
    %227 = vector.broadcast %18 : vector<1x32xf32> to vector<48x32xf32>
    %228 = arith.addf %226, %227 : vector<48x32xf32>
    %cst_85 = arith.constant dense<0.000000e+00> : vector<48x128xf32>
    %229 = tpu.matmul %228, %32, %cst_85 {dimension_numbers = #tpu.dot_dimension_numbers<[1], [0], [0], [1], [0, 0, 1, 1], [], []>} : vector<48x32xf32>, vector<32x128xf32>, vector<48x128xf32> -> vector<48x128xf32>
    %230 = vector.broadcast %24 : vector<1x128xf32> to vector<48x128xf32>
    %231 = arith.addf %229, %230 : vector<48x128xf32>
    %cst_86 = arith.constant 5.000000e-01 : f32
    %232 = vector.broadcast %cst_86 : f32 to vector<48x128xf32>
    %233 = arith.mulf %232, %231 : vector<48x128xf32>
    %cst_87 = arith.constant 0.707106769 : f32
    %234 = vector.broadcast %cst_87 : f32 to vector<48x128xf32>
    %235 = arith.mulf %231, %234 : vector<48x128xf32>
    %236 = math.erf %235 : vector<48x128xf32>
    %cst_88 = arith.constant 1.000000e+00 : f32
    %237 = vector.broadcast %cst_88 : f32 to vector<48x128xf32>
    %238 = arith.addf %237, %236 : vector<48x128xf32>
    %239 = arith.mulf %233, %238 : vector<48x128xf32>
    %cst_89 = arith.constant dense<0.000000e+00> : vector<48x32xf32>
    %240 = tpu.matmul %239, %34, %cst_89 {dimension_numbers = #tpu.dot_dimension_numbers<[1], [0], [0], [1], [0, 0, 1, 1], [], []>} : vector<48x128xf32>, vector<128x32xf32>, vector<48x32xf32> -> vector<48x32xf32>
    %241 = vector.broadcast %26 : vector<1x32xf32> to vector<48x32xf32>
    %242 = arith.addf %240, %241 : vector<48x32xf32>
    %243 = arith.addf %208, %242 : vector<48x32xf32>
    %c1_90 = arith.constant 1 : index
    %c0_91 = arith.constant 0 : index
    %c0_92 = arith.constant 0 : index
    %244 = vector.load %arg5[%c1_90, %c0_91, %c0_92] : memref<2x8x128xf32, #tpu.memory_space<vmem>>, vector<1x1x32xf32>
    %245 = vector.shape_cast %244 : vector<1x1x32xf32> to vector<1x32xf32>
    %c1_93 = arith.constant 1 : index
    %c1_94 = arith.constant 1 : index
    %c0_95 = arith.constant 0 : index
    %246 = vector.load %arg5[%c1_93, %c1_94, %c0_95] : memref<2x8x128xf32, #tpu.memory_space<vmem>>, vector<1x1x32xf32>
    %247 = vector.shape_cast %246 : vector<1x1x32xf32> to vector<1x32xf32>
    %c1_96 = arith.constant 1 : index
    %c2_97 = arith.constant 2 : index
    %c0_98 = arith.constant 0 : index
    %248 = vector.load %arg5[%c1_96, %c2_97, %c0_98] : memref<2x8x128xf32, #tpu.memory_space<vmem>>, vector<1x1x32xf32>
    %249 = vector.shape_cast %248 : vector<1x1x32xf32> to vector<1x32xf32>
    %c1_99 = arith.constant 1 : index
    %c3_100 = arith.constant 3 : index
    %c0_101 = arith.constant 0 : index
    %250 = vector.load %arg5[%c1_99, %c3_100, %c0_101] : memref<2x8x128xf32, #tpu.memory_space<vmem>>, vector<1x1x32xf32>
    %251 = vector.shape_cast %250 : vector<1x1x32xf32> to vector<1x32xf32>
    %c1_102 = arith.constant 1 : index
    %c4_103 = arith.constant 4 : index
    %c0_104 = arith.constant 0 : index
    %252 = vector.load %arg5[%c1_102, %c4_103, %c0_104] : memref<2x8x128xf32, #tpu.memory_space<vmem>>, vector<1x1x96xf32>
    %253 = vector.shape_cast %252 : vector<1x1x96xf32> to vector<1x96xf32>
    %c1_105 = arith.constant 1 : index
    %c5_106 = arith.constant 5 : index
    %c0_107 = arith.constant 0 : index
    %254 = vector.load %arg5[%c1_105, %c5_106, %c0_107] : memref<2x8x128xf32, #tpu.memory_space<vmem>>, vector<1x1x32xf32>
    %255 = vector.shape_cast %254 : vector<1x1x32xf32> to vector<1x32xf32>
    %c1_108 = arith.constant 1 : index
    %c6_109 = arith.constant 6 : index
    %c0_110 = arith.constant 0 : index
    %256 = vector.load %arg5[%c1_108, %c6_109, %c0_110] : memref<2x8x128xf32, #tpu.memory_space<vmem>>, vector<1x1x128xf32>
    %257 = vector.shape_cast %256 : vector<1x1x128xf32> to vector<1x128xf32>
    %c1_111 = arith.constant 1 : index
    %c7_112 = arith.constant 7 : index
    %c0_113 = arith.constant 0 : index
    %258 = vector.load %arg5[%c1_111, %c7_112, %c0_113] : memref<2x8x128xf32, #tpu.memory_space<vmem>>, vector<1x1x32xf32>
    %259 = vector.shape_cast %258 : vector<1x1x32xf32> to vector<1x32xf32>
    %c1_114 = arith.constant 1 : index
    %c0_115 = arith.constant 0 : index
    %c0_116 = arith.constant 0 : index
    %260 = vector.load %arg3[%c1_114, %c0_115, %c0_116] : memref<2x32x256xf32, #tpu.memory_space<vmem>>, vector<1x32x96xf32>
    %261 = vector.shape_cast %260 : vector<1x32x96xf32> to vector<32x96xf32>
    %c1_117 = arith.constant 1 : index
    %c0_118 = arith.constant 0 : index
    %c96_119 = arith.constant 96 : index
    %262 = vector.load %arg3[%c1_117, %c0_118, %c96_119] : memref<2x32x256xf32, #tpu.memory_space<vmem>>, vector<1x32x32xf32>
    %263 = vector.shape_cast %262 : vector<1x32x32xf32> to vector<32x32xf32>
    %c1_120 = arith.constant 1 : index
    %c0_121 = arith.constant 0 : index
    %c128_122 = arith.constant 128 : index
    %264 = vector.load %arg3[%c1_120, %c0_121, %c128_122] : memref<2x32x256xf32, #tpu.memory_space<vmem>>, vector<1x32x128xf32>
    %265 = vector.shape_cast %264 : vector<1x32x128xf32> to vector<32x128xf32>
    %c1_123 = arith.constant 1 : index
    %c0_124 = arith.constant 0 : index
    %c0_125 = arith.constant 0 : index
    %266 = vector.load %arg4[%c1_123, %c0_124, %c0_125] : memref<2x128x32xf32, #tpu.memory_space<vmem>>, vector<1x128x32xf32>
    %267 = vector.shape_cast %266 : vector<1x128x32xf32> to vector<128x32xf32>
    %cst_126 = arith.constant dense<0.000000e+00> : vector<48xf32>
    %268 = vector.multi_reduction <add>, %243, %cst_126 [1] : vector<48x32xf32> to vector<48xf32>
    %269 = vector.shape_cast %268 : vector<48xf32> to vector<48x1xf32>
    %cst_127 = arith.constant 3.200000e+01 : f32
    %270 = vector.broadcast %cst_127 : f32 to vector<48x1xf32>
    %271 = arith.divf %269, %270 : vector<48x1xf32>
    %272 = vector.broadcast %271 : vector<48x1xf32> to vector<48x32xf32>
    %273 = arith.subf %243, %272 : vector<48x32xf32>
    %274 = arith.mulf %273, %273 : vector<48x32xf32>
    %cst_128 = arith.constant dense<0.000000e+00> : vector<48xf32>
    %275 = vector.multi_reduction <add>, %274, %cst_128 [1] : vector<48x32xf32> to vector<48xf32>
    %276 = vector.shape_cast %275 : vector<48xf32> to vector<48x1xf32>
    %cst_129 = arith.constant 3.200000e+01 : f32
    %277 = vector.broadcast %cst_129 : f32 to vector<48x1xf32>
    %278 = arith.divf %276, %277 : vector<48x1xf32>
    %cst_130 = arith.constant 9.99999997E-7 : f32
    %279 = vector.broadcast %cst_130 : f32 to vector<48x1xf32>
    %280 = arith.addf %278, %279 : vector<48x1xf32>
    %281 = math.rsqrt %280 : vector<48x1xf32>
    %282 = vector.broadcast %281 : vector<48x1xf32> to vector<48x32xf32>
    %283 = arith.mulf %273, %282 : vector<48x32xf32>
    %284 = vector.broadcast %245 : vector<1x32xf32> to vector<48x32xf32>
    %285 = arith.mulf %283, %284 : vector<48x32xf32>
    %286 = vector.broadcast %247 : vector<1x32xf32> to vector<48x32xf32>
    %287 = arith.addf %285, %286 : vector<48x32xf32>
    %cst_131 = arith.constant dense<0.000000e+00> : vector<48x96xf32>
    %288 = tpu.matmul %287, %261, %cst_131 {dimension_numbers = #tpu.dot_dimension_numbers<[1], [0], [0], [1], [0, 0, 1, 1], [], []>} : vector<48x32xf32>, vector<32x96xf32>, vector<48x96xf32> -> vector<48x96xf32>
    %289 = vector.broadcast %253 : vector<1x96xf32> to vector<48x96xf32>
    %290 = arith.addf %288, %289 : vector<48x96xf32>
    %291 = vector.extract_strided_slice %290 {offsets = [0, 0], sizes = [24, 8], strides = [1, 1]} : vector<48x96xf32> to vector<24x8xf32>
    %292 = vector.extract_strided_slice %290 {offsets = [0, 32], sizes = [24, 8], strides = [1, 1]} : vector<48x96xf32> to vector<24x8xf32>
    %293 = vector.extract_strided_slice %290 {offsets = [0, 64], sizes = [24, 8], strides = [1, 1]} : vector<48x96xf32> to vector<24x8xf32>
    %cst_132 = arith.constant dense<0.000000e+00> : vector<24x24xf32>
    %294 = tpu.matmul %291, %292, %cst_132 {dimension_numbers = #tpu.dot_dimension_numbers<[1], [1], [0], [0], [0, 0, 1, 0], [], []>} : vector<24x8xf32>, vector<24x8xf32>, vector<24x24xf32> -> vector<24x24xf32>
    %cst_133 = arith.constant 0.353553385 : f32
    %295 = vector.broadcast %cst_133 : f32 to vector<24x24xf32>
    %296 = arith.mulf %294, %295 : vector<24x24xf32>
    %297 = vector.broadcast %10 : vector<1x24xf32> to vector<24x24xf32>
    %298 = arith.addf %296, %297 : vector<24x24xf32>
    %cst_134 = arith.constant dense<0xFF800000> : vector<24xf32>
    %299 = vector.multi_reduction <maximumf>, %298, %cst_134 [1] : vector<24x24xf32> to vector<24xf32>
    %300 = vector.shape_cast %299 : vector<24xf32> to vector<24x1xf32>
    %301 = vector.broadcast %300 : vector<24x1xf32> to vector<24x24xf32>
    %302 = arith.subf %298, %301 : vector<24x24xf32>
    %303 = math.exp %302 : vector<24x24xf32>
    %cst_135 = arith.constant dense<0.000000e+00> : vector<24xf32>
    %304 = vector.multi_reduction <add>, %303, %cst_135 [1] : vector<24x24xf32> to vector<24xf32>
    %305 = vector.shape_cast %304 : vector<24xf32> to vector<24x1xf32>
    %306 = vector.broadcast %305 : vector<24x1xf32> to vector<24x24xf32>
    %307 = arith.divf %303, %306 : vector<24x24xf32>
    %cst_136 = arith.constant dense<0.000000e+00> : vector<24x8xf32>
    %308 = tpu.matmul %307, %293, %cst_136 {dimension_numbers = #tpu.dot_dimension_numbers<[1], [0], [0], [1], [0, 0, 1, 1], [], []>} : vector<24x24xf32>, vector<24x8xf32>, vector<24x8xf32> -> vector<24x8xf32>
    %309 = vector.extract_strided_slice %290 {offsets = [0, 8], sizes = [24, 8], strides = [1, 1]} : vector<48x96xf32> to vector<24x8xf32>
    %310 = vector.extract_strided_slice %290 {offsets = [0, 40], sizes = [24, 8], strides = [1, 1]} : vector<48x96xf32> to vector<24x8xf32>
    %311 = vector.extract_strided_slice %290 {offsets = [0, 72], sizes = [24, 8], strides = [1, 1]} : vector<48x96xf32> to vector<24x8xf32>
    %cst_137 = arith.constant dense<0.000000e+00> : vector<24x24xf32>
    %312 = tpu.matmul %309, %310, %cst_137 {dimension_numbers = #tpu.dot_dimension_numbers<[1], [1], [0], [0], [0, 0, 1, 0], [], []>} : vector<24x8xf32>, vector<24x8xf32>, vector<24x24xf32> -> vector<24x24xf32>
    %cst_138 = arith.constant 0.353553385 : f32
    %313 = vector.broadcast %cst_138 : f32 to vector<24x24xf32>
    %314 = arith.mulf %312, %313 : vector<24x24xf32>
    %315 = vector.broadcast %10 : vector<1x24xf32> to vector<24x24xf32>
    %316 = arith.addf %314, %315 : vector<24x24xf32>
    %cst_139 = arith.constant dense<0xFF800000> : vector<24xf32>
    %317 = vector.multi_reduction <maximumf>, %316, %cst_139 [1] : vector<24x24xf32> to vector<24xf32>
    %318 = vector.shape_cast %317 : vector<24xf32> to vector<24x1xf32>
    %319 = vector.broadcast %318 : vector<24x1xf32> to vector<24x24xf32>
    %320 = arith.subf %316, %319 : vector<24x24xf32>
    %321 = math.exp %320 : vector<24x24xf32>
    %cst_140 = arith.constant dense<0.000000e+00> : vector<24xf32>
    %322 = vector.multi_reduction <add>, %321, %cst_140 [1] : vector<24x24xf32> to vector<24xf32>
    %323 = vector.shape_cast %322 : vector<24xf32> to vector<24x1xf32>
    %324 = vector.broadcast %323 : vector<24x1xf32> to vector<24x24xf32>
    %325 = arith.divf %321, %324 : vector<24x24xf32>
    %cst_141 = arith.constant dense<0.000000e+00> : vector<24x8xf32>
    %326 = tpu.matmul %325, %311, %cst_141 {dimension_numbers = #tpu.dot_dimension_numbers<[1], [0], [0], [1], [0, 0, 1, 1], [], []>} : vector<24x24xf32>, vector<24x8xf32>, vector<24x8xf32> -> vector<24x8xf32>
    %327 = vector.extract_strided_slice %290 {offsets = [0, 16], sizes = [24, 8], strides = [1, 1]} : vector<48x96xf32> to vector<24x8xf32>
    %328 = vector.extract_strided_slice %290 {offsets = [0, 48], sizes = [24, 8], strides = [1, 1]} : vector<48x96xf32> to vector<24x8xf32>
    %329 = vector.extract_strided_slice %290 {offsets = [0, 80], sizes = [24, 8], strides = [1, 1]} : vector<48x96xf32> to vector<24x8xf32>
    %cst_142 = arith.constant dense<0.000000e+00> : vector<24x24xf32>
    %330 = tpu.matmul %327, %328, %cst_142 {dimension_numbers = #tpu.dot_dimension_numbers<[1], [1], [0], [0], [0, 0, 1, 0], [], []>} : vector<24x8xf32>, vector<24x8xf32>, vector<24x24xf32> -> vector<24x24xf32>
    %cst_143 = arith.constant 0.353553385 : f32
    %331 = vector.broadcast %cst_143 : f32 to vector<24x24xf32>
    %332 = arith.mulf %330, %331 : vector<24x24xf32>
    %333 = vector.broadcast %10 : vector<1x24xf32> to vector<24x24xf32>
    %334 = arith.addf %332, %333 : vector<24x24xf32>
    %cst_144 = arith.constant dense<0xFF800000> : vector<24xf32>
    %335 = vector.multi_reduction <maximumf>, %334, %cst_144 [1] : vector<24x24xf32> to vector<24xf32>
    %336 = vector.shape_cast %335 : vector<24xf32> to vector<24x1xf32>
    %337 = vector.broadcast %336 : vector<24x1xf32> to vector<24x24xf32>
    %338 = arith.subf %334, %337 : vector<24x24xf32>
    %339 = math.exp %338 : vector<24x24xf32>
    %cst_145 = arith.constant dense<0.000000e+00> : vector<24xf32>
    %340 = vector.multi_reduction <add>, %339, %cst_145 [1] : vector<24x24xf32> to vector<24xf32>
    %341 = vector.shape_cast %340 : vector<24xf32> to vector<24x1xf32>
    %342 = vector.broadcast %341 : vector<24x1xf32> to vector<24x24xf32>
    %343 = arith.divf %339, %342 : vector<24x24xf32>
    %cst_146 = arith.constant dense<0.000000e+00> : vector<24x8xf32>
    %344 = tpu.matmul %343, %329, %cst_146 {dimension_numbers = #tpu.dot_dimension_numbers<[1], [0], [0], [1], [0, 0, 1, 1], [], []>} : vector<24x24xf32>, vector<24x8xf32>, vector<24x8xf32> -> vector<24x8xf32>
    %345 = vector.extract_strided_slice %290 {offsets = [0, 24], sizes = [24, 8], strides = [1, 1]} : vector<48x96xf32> to vector<24x8xf32>
    %346 = vector.extract_strided_slice %290 {offsets = [0, 56], sizes = [24, 8], strides = [1, 1]} : vector<48x96xf32> to vector<24x8xf32>
    %347 = vector.extract_strided_slice %290 {offsets = [0, 88], sizes = [24, 8], strides = [1, 1]} : vector<48x96xf32> to vector<24x8xf32>
    %cst_147 = arith.constant dense<0.000000e+00> : vector<24x24xf32>
    %348 = tpu.matmul %345, %346, %cst_147 {dimension_numbers = #tpu.dot_dimension_numbers<[1], [1], [0], [0], [0, 0, 1, 0], [], []>} : vector<24x8xf32>, vector<24x8xf32>, vector<24x24xf32> -> vector<24x24xf32>
    %cst_148 = arith.constant 0.353553385 : f32
    %349 = vector.broadcast %cst_148 : f32 to vector<24x24xf32>
    %350 = arith.mulf %348, %349 : vector<24x24xf32>
    %351 = vector.broadcast %10 : vector<1x24xf32> to vector<24x24xf32>
    %352 = arith.addf %350, %351 : vector<24x24xf32>
    %cst_149 = arith.constant dense<0xFF800000> : vector<24xf32>
    %353 = vector.multi_reduction <maximumf>, %352, %cst_149 [1] : vector<24x24xf32> to vector<24xf32>
    %354 = vector.shape_cast %353 : vector<24xf32> to vector<24x1xf32>
    %355 = vector.broadcast %354 : vector<24x1xf32> to vector<24x24xf32>
    %356 = arith.subf %352, %355 : vector<24x24xf32>
    %357 = math.exp %356 : vector<24x24xf32>
    %cst_150 = arith.constant dense<0.000000e+00> : vector<24xf32>
    %358 = vector.multi_reduction <add>, %357, %cst_150 [1] : vector<24x24xf32> to vector<24xf32>
    %359 = vector.shape_cast %358 : vector<24xf32> to vector<24x1xf32>
    %360 = vector.broadcast %359 : vector<24x1xf32> to vector<24x24xf32>
    %361 = arith.divf %357, %360 : vector<24x24xf32>
    %cst_151 = arith.constant dense<0.000000e+00> : vector<24x8xf32>
    %362 = tpu.matmul %361, %347, %cst_151 {dimension_numbers = #tpu.dot_dimension_numbers<[1], [0], [0], [1], [0, 0, 1, 1], [], []>} : vector<24x24xf32>, vector<24x8xf32>, vector<24x8xf32> -> vector<24x8xf32>
    %363 = tpu.concatenate %308, %326, %344, %362 in 1 : vector<24x8xf32>, vector<24x8xf32>, vector<24x8xf32>, vector<24x8xf32> -> vector<24x32xf32>
    %364 = vector.extract_strided_slice %290 {offsets = [24, 0], sizes = [24, 8], strides = [1, 1]} : vector<48x96xf32> to vector<24x8xf32>
    %365 = vector.extract_strided_slice %290 {offsets = [24, 32], sizes = [24, 8], strides = [1, 1]} : vector<48x96xf32> to vector<24x8xf32>
    %366 = vector.extract_strided_slice %290 {offsets = [24, 64], sizes = [24, 8], strides = [1, 1]} : vector<48x96xf32> to vector<24x8xf32>
    %cst_152 = arith.constant dense<0.000000e+00> : vector<24x24xf32>
    %367 = tpu.matmul %364, %365, %cst_152 {dimension_numbers = #tpu.dot_dimension_numbers<[1], [1], [0], [0], [0, 0, 1, 0], [], []>} : vector<24x8xf32>, vector<24x8xf32>, vector<24x24xf32> -> vector<24x24xf32>
    %cst_153 = arith.constant 0.353553385 : f32
    %368 = vector.broadcast %cst_153 : f32 to vector<24x24xf32>
    %369 = arith.mulf %367, %368 : vector<24x24xf32>
    %370 = vector.broadcast %10 : vector<1x24xf32> to vector<24x24xf32>
    %371 = arith.addf %369, %370 : vector<24x24xf32>
    %cst_154 = arith.constant dense<0xFF800000> : vector<24xf32>
    %372 = vector.multi_reduction <maximumf>, %371, %cst_154 [1] : vector<24x24xf32> to vector<24xf32>
    %373 = vector.shape_cast %372 : vector<24xf32> to vector<24x1xf32>
    %374 = vector.broadcast %373 : vector<24x1xf32> to vector<24x24xf32>
    %375 = arith.subf %371, %374 : vector<24x24xf32>
    %376 = math.exp %375 : vector<24x24xf32>
    %cst_155 = arith.constant dense<0.000000e+00> : vector<24xf32>
    %377 = vector.multi_reduction <add>, %376, %cst_155 [1] : vector<24x24xf32> to vector<24xf32>
    %378 = vector.shape_cast %377 : vector<24xf32> to vector<24x1xf32>
    %379 = vector.broadcast %378 : vector<24x1xf32> to vector<24x24xf32>
    %380 = arith.divf %376, %379 : vector<24x24xf32>
    %cst_156 = arith.constant dense<0.000000e+00> : vector<24x8xf32>
    %381 = tpu.matmul %380, %366, %cst_156 {dimension_numbers = #tpu.dot_dimension_numbers<[1], [0], [0], [1], [0, 0, 1, 1], [], []>} : vector<24x24xf32>, vector<24x8xf32>, vector<24x8xf32> -> vector<24x8xf32>
    %382 = vector.extract_strided_slice %290 {offsets = [24, 8], sizes = [24, 8], strides = [1, 1]} : vector<48x96xf32> to vector<24x8xf32>
    %383 = vector.extract_strided_slice %290 {offsets = [24, 40], sizes = [24, 8], strides = [1, 1]} : vector<48x96xf32> to vector<24x8xf32>
    %384 = vector.extract_strided_slice %290 {offsets = [24, 72], sizes = [24, 8], strides = [1, 1]} : vector<48x96xf32> to vector<24x8xf32>
    %cst_157 = arith.constant dense<0.000000e+00> : vector<24x24xf32>
    %385 = tpu.matmul %382, %383, %cst_157 {dimension_numbers = #tpu.dot_dimension_numbers<[1], [1], [0], [0], [0, 0, 1, 0], [], []>} : vector<24x8xf32>, vector<24x8xf32>, vector<24x24xf32> -> vector<24x24xf32>
    %cst_158 = arith.constant 0.353553385 : f32
    %386 = vector.broadcast %cst_158 : f32 to vector<24x24xf32>
    %387 = arith.mulf %385, %386 : vector<24x24xf32>
    %388 = vector.broadcast %10 : vector<1x24xf32> to vector<24x24xf32>
    %389 = arith.addf %387, %388 : vector<24x24xf32>
    %cst_159 = arith.constant dense<0xFF800000> : vector<24xf32>
    %390 = vector.multi_reduction <maximumf>, %389, %cst_159 [1] : vector<24x24xf32> to vector<24xf32>
    %391 = vector.shape_cast %390 : vector<24xf32> to vector<24x1xf32>
    %392 = vector.broadcast %391 : vector<24x1xf32> to vector<24x24xf32>
    %393 = arith.subf %389, %392 : vector<24x24xf32>
    %394 = math.exp %393 : vector<24x24xf32>
    %cst_160 = arith.constant dense<0.000000e+00> : vector<24xf32>
    %395 = vector.multi_reduction <add>, %394, %cst_160 [1] : vector<24x24xf32> to vector<24xf32>
    %396 = vector.shape_cast %395 : vector<24xf32> to vector<24x1xf32>
    %397 = vector.broadcast %396 : vector<24x1xf32> to vector<24x24xf32>
    %398 = arith.divf %394, %397 : vector<24x24xf32>
    %cst_161 = arith.constant dense<0.000000e+00> : vector<24x8xf32>
    %399 = tpu.matmul %398, %384, %cst_161 {dimension_numbers = #tpu.dot_dimension_numbers<[1], [0], [0], [1], [0, 0, 1, 1], [], []>} : vector<24x24xf32>, vector<24x8xf32>, vector<24x8xf32> -> vector<24x8xf32>
    %400 = vector.extract_strided_slice %290 {offsets = [24, 16], sizes = [24, 8], strides = [1, 1]} : vector<48x96xf32> to vector<24x8xf32>
    %401 = vector.extract_strided_slice %290 {offsets = [24, 48], sizes = [24, 8], strides = [1, 1]} : vector<48x96xf32> to vector<24x8xf32>
    %402 = vector.extract_strided_slice %290 {offsets = [24, 80], sizes = [24, 8], strides = [1, 1]} : vector<48x96xf32> to vector<24x8xf32>
    %cst_162 = arith.constant dense<0.000000e+00> : vector<24x24xf32>
    %403 = tpu.matmul %400, %401, %cst_162 {dimension_numbers = #tpu.dot_dimension_numbers<[1], [1], [0], [0], [0, 0, 1, 0], [], []>} : vector<24x8xf32>, vector<24x8xf32>, vector<24x24xf32> -> vector<24x24xf32>
    %cst_163 = arith.constant 0.353553385 : f32
    %404 = vector.broadcast %cst_163 : f32 to vector<24x24xf32>
    %405 = arith.mulf %403, %404 : vector<24x24xf32>
    %406 = vector.broadcast %10 : vector<1x24xf32> to vector<24x24xf32>
    %407 = arith.addf %405, %406 : vector<24x24xf32>
    %cst_164 = arith.constant dense<0xFF800000> : vector<24xf32>
    %408 = vector.multi_reduction <maximumf>, %407, %cst_164 [1] : vector<24x24xf32> to vector<24xf32>
    %409 = vector.shape_cast %408 : vector<24xf32> to vector<24x1xf32>
    %410 = vector.broadcast %409 : vector<24x1xf32> to vector<24x24xf32>
    %411 = arith.subf %407, %410 : vector<24x24xf32>
    %412 = math.exp %411 : vector<24x24xf32>
    %cst_165 = arith.constant dense<0.000000e+00> : vector<24xf32>
    %413 = vector.multi_reduction <add>, %412, %cst_165 [1] : vector<24x24xf32> to vector<24xf32>
    %414 = vector.shape_cast %413 : vector<24xf32> to vector<24x1xf32>
    %415 = vector.broadcast %414 : vector<24x1xf32> to vector<24x24xf32>
    %416 = arith.divf %412, %415 : vector<24x24xf32>
    %cst_166 = arith.constant dense<0.000000e+00> : vector<24x8xf32>
    %417 = tpu.matmul %416, %402, %cst_166 {dimension_numbers = #tpu.dot_dimension_numbers<[1], [0], [0], [1], [0, 0, 1, 1], [], []>} : vector<24x24xf32>, vector<24x8xf32>, vector<24x8xf32> -> vector<24x8xf32>
    %418 = vector.extract_strided_slice %290 {offsets = [24, 24], sizes = [24, 8], strides = [1, 1]} : vector<48x96xf32> to vector<24x8xf32>
    %419 = vector.extract_strided_slice %290 {offsets = [24, 56], sizes = [24, 8], strides = [1, 1]} : vector<48x96xf32> to vector<24x8xf32>
    %420 = vector.extract_strided_slice %290 {offsets = [24, 88], sizes = [24, 8], strides = [1, 1]} : vector<48x96xf32> to vector<24x8xf32>
    %cst_167 = arith.constant dense<0.000000e+00> : vector<24x24xf32>
    %421 = tpu.matmul %418, %419, %cst_167 {dimension_numbers = #tpu.dot_dimension_numbers<[1], [1], [0], [0], [0, 0, 1, 0], [], []>} : vector<24x8xf32>, vector<24x8xf32>, vector<24x24xf32> -> vector<24x24xf32>
    %cst_168 = arith.constant 0.353553385 : f32
    %422 = vector.broadcast %cst_168 : f32 to vector<24x24xf32>
    %423 = arith.mulf %421, %422 : vector<24x24xf32>
    %424 = vector.broadcast %10 : vector<1x24xf32> to vector<24x24xf32>
    %425 = arith.addf %423, %424 : vector<24x24xf32>
    %cst_169 = arith.constant dense<0xFF800000> : vector<24xf32>
    %426 = vector.multi_reduction <maximumf>, %425, %cst_169 [1] : vector<24x24xf32> to vector<24xf32>
    %427 = vector.shape_cast %426 : vector<24xf32> to vector<24x1xf32>
    %428 = vector.broadcast %427 : vector<24x1xf32> to vector<24x24xf32>
    %429 = arith.subf %425, %428 : vector<24x24xf32>
    %430 = math.exp %429 : vector<24x24xf32>
    %cst_170 = arith.constant dense<0.000000e+00> : vector<24xf32>
    %431 = vector.multi_reduction <add>, %430, %cst_170 [1] : vector<24x24xf32> to vector<24xf32>
    %432 = vector.shape_cast %431 : vector<24xf32> to vector<24x1xf32>
    %433 = vector.broadcast %432 : vector<24x1xf32> to vector<24x24xf32>
    %434 = arith.divf %430, %433 : vector<24x24xf32>
    %cst_171 = arith.constant dense<0.000000e+00> : vector<24x8xf32>
    %435 = tpu.matmul %434, %420, %cst_171 {dimension_numbers = #tpu.dot_dimension_numbers<[1], [0], [0], [1], [0, 0, 1, 1], [], []>} : vector<24x24xf32>, vector<24x8xf32>, vector<24x8xf32> -> vector<24x8xf32>
    %436 = tpu.concatenate %381, %399, %417, %435 in 1 : vector<24x8xf32>, vector<24x8xf32>, vector<24x8xf32>, vector<24x8xf32> -> vector<24x32xf32>
    %437 = tpu.concatenate %363, %436 in 0 : vector<24x32xf32>, vector<24x32xf32> -> vector<48x32xf32>
    %cst_172 = arith.constant dense<0.000000e+00> : vector<48x32xf32>
    %438 = tpu.matmul %437, %263, %cst_172 {dimension_numbers = #tpu.dot_dimension_numbers<[1], [0], [0], [1], [0, 0, 1, 1], [], []>} : vector<48x32xf32>, vector<32x32xf32>, vector<48x32xf32> -> vector<48x32xf32>
    %439 = vector.broadcast %255 : vector<1x32xf32> to vector<48x32xf32>
    %440 = arith.addf %438, %439 : vector<48x32xf32>
    %441 = arith.addf %243, %440 : vector<48x32xf32>
    %cst_173 = arith.constant dense<0.000000e+00> : vector<48xf32>
    %442 = vector.multi_reduction <add>, %441, %cst_173 [1] : vector<48x32xf32> to vector<48xf32>
    %443 = vector.shape_cast %442 : vector<48xf32> to vector<48x1xf32>
    %cst_174 = arith.constant 3.200000e+01 : f32
    %444 = vector.broadcast %cst_174 : f32 to vector<48x1xf32>
    %445 = arith.divf %443, %444 : vector<48x1xf32>
    %446 = vector.broadcast %445 : vector<48x1xf32> to vector<48x32xf32>
    %447 = arith.subf %441, %446 : vector<48x32xf32>
    %448 = arith.mulf %447, %447 : vector<48x32xf32>
    %cst_175 = arith.constant dense<0.000000e+00> : vector<48xf32>
    %449 = vector.multi_reduction <add>, %448, %cst_175 [1] : vector<48x32xf32> to vector<48xf32>
    %450 = vector.shape_cast %449 : vector<48xf32> to vector<48x1xf32>
    %cst_176 = arith.constant 3.200000e+01 : f32
    %451 = vector.broadcast %cst_176 : f32 to vector<48x1xf32>
    %452 = arith.divf %450, %451 : vector<48x1xf32>
    %cst_177 = arith.constant 9.99999997E-7 : f32
    %453 = vector.broadcast %cst_177 : f32 to vector<48x1xf32>
    %454 = arith.addf %452, %453 : vector<48x1xf32>
    %455 = math.rsqrt %454 : vector<48x1xf32>
    %456 = vector.broadcast %455 : vector<48x1xf32> to vector<48x32xf32>
    %457 = arith.mulf %447, %456 : vector<48x32xf32>
    %458 = vector.broadcast %249 : vector<1x32xf32> to vector<48x32xf32>
    %459 = arith.mulf %457, %458 : vector<48x32xf32>
    %460 = vector.broadcast %251 : vector<1x32xf32> to vector<48x32xf32>
    %461 = arith.addf %459, %460 : vector<48x32xf32>
    %cst_178 = arith.constant dense<0.000000e+00> : vector<48x128xf32>
    %462 = tpu.matmul %461, %265, %cst_178 {dimension_numbers = #tpu.dot_dimension_numbers<[1], [0], [0], [1], [0, 0, 1, 1], [], []>} : vector<48x32xf32>, vector<32x128xf32>, vector<48x128xf32> -> vector<48x128xf32>
    %463 = vector.broadcast %257 : vector<1x128xf32> to vector<48x128xf32>
    %464 = arith.addf %462, %463 : vector<48x128xf32>
    %cst_179 = arith.constant 5.000000e-01 : f32
    %465 = vector.broadcast %cst_179 : f32 to vector<48x128xf32>
    %466 = arith.mulf %465, %464 : vector<48x128xf32>
    %cst_180 = arith.constant 0.707106769 : f32
    %467 = vector.broadcast %cst_180 : f32 to vector<48x128xf32>
    %468 = arith.mulf %464, %467 : vector<48x128xf32>
    %469 = math.erf %468 : vector<48x128xf32>
    %cst_181 = arith.constant 1.000000e+00 : f32
    %470 = vector.broadcast %cst_181 : f32 to vector<48x128xf32>
    %471 = arith.addf %470, %469 : vector<48x128xf32>
    %472 = arith.mulf %466, %471 : vector<48x128xf32>
    %cst_182 = arith.constant dense<0.000000e+00> : vector<48x32xf32>
    %473 = tpu.matmul %472, %267, %cst_182 {dimension_numbers = #tpu.dot_dimension_numbers<[1], [0], [0], [1], [0, 0, 1, 1], [], []>} : vector<48x128xf32>, vector<128x32xf32>, vector<48x32xf32> -> vector<48x32xf32>
    %474 = vector.broadcast %259 : vector<1x32xf32> to vector<48x32xf32>
    %475 = arith.addf %473, %474 : vector<48x32xf32>
    %476 = arith.addf %441, %475 : vector<48x32xf32>
    %477 = vector.extract_strided_slice %476 {offsets = [16, 0], sizes = [1, 32], strides = [1, 1]} : vector<48x32xf32> to vector<1x32xf32>
    %478 = vector.extract_strided_slice %476 {offsets = [40, 0], sizes = [1, 32], strides = [1, 1]} : vector<48x32xf32> to vector<1x32xf32>
    %479 = tpu.concatenate %477, %478 in 0 : vector<1x32xf32>, vector<1x32xf32> -> vector<2x32xf32>
    %c33 = arith.constant 33 : index
    %c0_183 = arith.constant 0 : index
    %480 = vector.load %arg6[%c33, %c0_183] : memref<35x128xf32, #tpu.memory_space<vmem>>, vector<1x32xf32>
    %c34 = arith.constant 34 : index
    %c0_184 = arith.constant 0 : index
    %481 = vector.load %arg6[%c34, %c0_184] : memref<35x128xf32, #tpu.memory_space<vmem>>, vector<1x32xf32>
    %cst_185 = arith.constant dense<0.000000e+00> : vector<2xf32>
    %482 = vector.multi_reduction <add>, %479, %cst_185 [1] : vector<2x32xf32> to vector<2xf32>
    %483 = vector.shape_cast %482 : vector<2xf32> to vector<2x1xf32>
    %cst_186 = arith.constant 3.200000e+01 : f32
    %484 = vector.broadcast %cst_186 : f32 to vector<2x1xf32>
    %485 = arith.divf %483, %484 : vector<2x1xf32>
    %486 = vector.broadcast %485 : vector<2x1xf32> to vector<2x32xf32>
    %487 = arith.subf %479, %486 : vector<2x32xf32>
    %488 = arith.mulf %487, %487 : vector<2x32xf32>
    %cst_187 = arith.constant dense<0.000000e+00> : vector<2xf32>
    %489 = vector.multi_reduction <add>, %488, %cst_187 [1] : vector<2x32xf32> to vector<2xf32>
    %490 = vector.shape_cast %489 : vector<2xf32> to vector<2x1xf32>
    %cst_188 = arith.constant 3.200000e+01 : f32
    %491 = vector.broadcast %cst_188 : f32 to vector<2x1xf32>
    %492 = arith.divf %490, %491 : vector<2x1xf32>
    %cst_189 = arith.constant 9.99999997E-7 : f32
    %493 = vector.broadcast %cst_189 : f32 to vector<2x1xf32>
    %494 = arith.addf %492, %493 : vector<2x1xf32>
    %495 = math.rsqrt %494 : vector<2x1xf32>
    %496 = vector.broadcast %495 : vector<2x1xf32> to vector<2x32xf32>
    %497 = arith.mulf %487, %496 : vector<2x32xf32>
    %498 = vector.broadcast %480 : vector<1x32xf32> to vector<2x32xf32>
    %499 = arith.mulf %497, %498 : vector<2x32xf32>
    %500 = vector.broadcast %481 : vector<1x32xf32> to vector<2x32xf32>
    %501 = arith.addf %499, %500 : vector<2x32xf32>
    %c0_190 = arith.constant 0 : index
    %c0_191 = arith.constant 0 : index
    %502 = vector.load %arg6[%c0_190, %c0_191] : memref<35x128xf32, #tpu.memory_space<vmem>>, vector<32x128xf32>
    %c32 = arith.constant 32 : index
    %c0_192 = arith.constant 0 : index
    %503 = vector.load %arg6[%c32, %c0_192] : memref<35x128xf32, #tpu.memory_space<vmem>>, vector<1x128xf32>
    %cst_193 = arith.constant dense<0.000000e+00> : vector<2x128xf32>
    %504 = tpu.matmul %501, %502, %cst_193 {dimension_numbers = #tpu.dot_dimension_numbers<[1], [0], [0], [1], [0, 0, 1, 1], [], []>} : vector<2x32xf32>, vector<32x128xf32>, vector<2x128xf32> -> vector<2x128xf32>
    %505 = vector.broadcast %503 : vector<1x128xf32> to vector<2x128xf32>
    %506 = arith.addf %504, %505 : vector<2x128xf32>
    %c0_194 = arith.constant 0 : index
    %c0_195 = arith.constant 0 : index
    %507 = vector.load %arg7[%c0_194, %c0_195] : memref<2x128xf32, #tpu.memory_space<vmem>>, vector<2x128xf32>
    tpu.vector_store %arg7[%c0_194, %c0_195], %506 {strides = array<i32>} : memref<2x128xf32, #tpu.memory_space<vmem>>, vector<2x128xf32>,
    return
  }
  func.func @transform_0(%arg0: i32) -> (i32, i32) {
    %c0_i32 = arith.constant 0 : i32
    %c0_i32_0 = arith.constant 0 : i32
    %c0_i32_1 = arith.constant 0 : i32
    return %c0_i32, %c0_i32_0 : i32, i32
  }
  func.func @transform_1(%arg0: i32) -> (i32, i32) {
    %c0_i32 = arith.constant 0 : i32
    %c0_i32_0 = arith.constant 0 : i32
    %c0_i32_1 = arith.constant 0 : i32
    return %c0_i32, %c0_i32_0 : i32, i32
  }
  func.func @transform_2(%arg0: i32) -> (i32, i32, i32) {
    %c0_i32 = arith.constant 0 : i32
    %c0_i32_0 = arith.constant 0 : i32
    %c0_i32_1 = arith.constant 0 : i32
    %c0_i32_2 = arith.constant 0 : i32
    return %c0_i32, %c0_i32_0, %c0_i32_1 : i32, i32, i32
  }
  func.func @transform_3(%arg0: i32) -> (i32, i32, i32) {
    %c0_i32 = arith.constant 0 : i32
    %c0_i32_0 = arith.constant 0 : i32
    %c0_i32_1 = arith.constant 0 : i32
    %c0_i32_2 = arith.constant 0 : i32
    return %c0_i32, %c0_i32_0, %c0_i32_1 : i32, i32, i32
  }
  func.func @transform_4(%arg0: i32) -> (i32, i32, i32) {
    %c0_i32 = arith.constant 0 : i32
    %c0_i32_0 = arith.constant 0 : i32
    %c0_i32_1 = arith.constant 0 : i32
    %c0_i32_2 = arith.constant 0 : i32
    return %c0_i32, %c0_i32_0, %c0_i32_1 : i32, i32, i32
  }
  func.func @transform_5(%arg0: i32) -> (i32, i32) {
    %c0_i32 = arith.constant 0 : i32
    %c0_i32_0 = arith.constant 0 : i32
    %c0_i32_1 = arith.constant 0 : i32
    return %c0_i32, %c0_i32_0 : i32, i32
  }
  func.func @transform_6(%arg0: i32) -> (i32, i32) {
    %c0_i32 = arith.constant 0 : i32
    %c0_i32_0 = arith.constant 0 : i32
    %c0_i32_1 = arith.constant 0 : i32
    return %c0_i32, %c0_i32_0 : i32, i32
  }
}

</mosaic_0001>

<llo_original>
// kernel: vit_forward.1
$region0: #{vit_forward.1}
  #allocation0 [shape = 'u32[]', space=smem, size = 0x4, offset = 0x4, fixed_abs, tag = 'smem constant byte address 0x4 - core index']
  #allocation1 [shape = 'u32[72,128]{1,0:T(1,128)}', space=vmem, size = 0x9000, scoped, tag = 'internal scratch']
  %s0 = inlined_call_operand.vmem [shape: f32[48,64], index: 0, kind: input, shape index: {}]
  %s1 = inlined_call_operand.vmem [shape: f32[112,32], index: 1, kind: input, shape index: {}]
  %s2 = inlined_call_operand.vmem [shape: f32[2,32,256], index: 2, kind: input, shape index: {}]
  %s3 = inlined_call_operand.vmem [shape: f32[2,128,32], index: 3, kind: input, shape index: {}]
  %s4 = inlined_call_operand.vmem [shape: f32[2,8,128], index: 4, kind: input, shape index: {}]
  %s5 = inlined_call_operand.vmem [shape: f32[35,128], index: 5, kind: input, shape index: {}]
  %s6 = inlined_call_operand.hbm [shape: f32[2,128], index: 6, kind: output, shape index: {}]
  %s7 = sld [smem:[#allocation0]]
  $region34: #{vit_forward.1} parent=0
    _
  %s9 = ssub.s32 1, %s7
  %s10 = scalar_select 0, %s9, %s7
  $region1: #{vit_forward.1} parent=0
    #allocation2 [shape = 'u8[1024]{0}', space=vmem, size = 0x400, scoped, tag = 'output window, operand 0, single buffered']
    #allocation3 [shape = 's32[1]{0}', space=sflag, size = 0x4, scoped, tag = 'scoped memory for vit_forward.1']
    %11 = vsyncpa [#allocation3], 0
    // Predicated region
    $region2: #{vit_forward.1} parent=1 // pred_check
      _
    $region3: #{vit_forward.1} parent=1 // pred_check_branch
      %13 = sbr.rel (0) target = $region5
    $region4: #{vit_forward.1} parent=1 // pred_region
      _
    $region5: #{vit_forward.1} parent=1 // pred_fallthru
      _
    // Predicated region
    $region6: #{vit_forward.1} parent=1 // pred_check
      _
    $region7: #{vit_forward.1} parent=1 // pred_check_branch
      %15 = sbr.rel (0) target = $region9
    $region8: #{vit_forward.1} parent=1 // pred_region
      _
    $region9: #{vit_forward.1} parent=1 // pred_fallthru
      _
    // Predicated region
    $region10: #{vit_forward.1} parent=1 // pred_check
      _
    $region11: #{vit_forward.1} parent=1 // pred_check_branch
      %17 = sbr.rel (0) target = $region13
    $region12: #{vit_forward.1} parent=1 // pred_region
      _
    $region13: #{vit_forward.1} parent=1 // pred_fallthru
      _
    // Predicated region
    $region14: #{vit_forward.1} parent=1 // pred_check
      _
    $region15: #{vit_forward.1} parent=1 // pred_check_branch
      %19 = sbr.rel (0) target = $region17
    $region16: #{vit_forward.1} parent=1 // pred_region
      _
    $region17: #{vit_forward.1} parent=1 // pred_fallthru
      _
    // Predicated region
    $region18: #{vit_forward.1} parent=1 // pred_check
      _
    $region19: #{vit_forward.1} parent=1 // pred_check_branch
      %21 = sbr.rel (0) target = $region21
    $region20: #{vit_forward.1} parent=1 // pred_region
      _
    $region21: #{vit_forward.1} parent=1 // pred_fallthru
      _
    // Predicated region
    $region22: #{vit_forward.1} parent=1 // pred_check
      _
    $region23: #{vit_forward.1} parent=1 // pred_check_branch
      %23 = sbr.rel (0) target = $region25
    $region24: #{vit_forward.1} parent=1 // pred_region
      _
    $region25: #{vit_forward.1} parent=1 // pred_fallthru
      _
    %v24 = vld [vmem:[%s1] sm:$0xff]
    %v25 = vld [vmem:[%s1 + $0x8] sm:$0xff]
    %v26 = vld [vmem:[%s1 + $0x10] sm:$0xff]
    %v27 = vld [vmem:[%s1 + $0x18] sm:$0xff]
    %v28 = vld [vmem:[%s1 + $0x20] sm:$0xff]
    %v29 = vld [vmem:[%s1 + $0x28] sm:$0xff]
    %v30 = vld [vmem:[%s1 + $0x30] sm:$0xff]
    %v31 = vld [vmem:[%s1 + $0x38] sm:$0xff]
    %v32 = vld [vmem:[%s1 + $0x40] sm:$0xff]
    %v33 = vld [vmem:[%s1 + $0x48] sm:$0xff]
    %v34 = vld [vmem:[%s1 + $0x50] sm:$0xff]
    %v35 = vld [vmem:[%s1 + $0x58] sm:$0xff]
    %v36 = vld [vmem:[%s1 + $0x60] sm:$0xff]
    %v37 = vld [vmem:[%s1 + $0x68] sm:$0xff]
    %v38 = vld [vmem:[%s0] sm:$0xff]
    %v39 = vld [vmem:[%s0 + $0x8] sm:$0xff]
    %v40 = vld [vmem:[%s0 + $0x10] sm:$0xff]
    %v41 = vld [vmem:[%s0 + $0x18] sm:$0xff]
    %v42 = vld [vmem:[%s0 + $0x20] sm:$0xff]
    %v43 = vld [vmem:[%s0 + $0x28] sm:$0xff]
    %vm44 = vcmask 523264
    %v46 = vsel %vm44, %v38, 0
    %v49 = vsel %vm44, %v39, 0
    %v52 = vsel %vm44, %v40, 0
    %v55 = vsel %vm44, %v41, 0
    %v58 = vsel %vm44, %v42, 0
    %v61 = vsel %vm44, %v43, 0
    %63 = vmatpush.msra.mxu0 0.0
    %64 = vmatpush.msra.mxu0 0.0
    %65 = vmatpush.msra.mxu0 0.0
    %66 = vmatpush.msra.mxu0 0.0
    %67 = vmatpush.msra.mxu0 0.0
    %68 = vmatpush.msra.mxu0 0.0
    %69 = vmatpush.msra.mxu0 0.0
    %70 = vmatpush.msra.mxu0 0.0
    %71 = vmatpush.msra.mxu0 %v31
    %72 = vmatpush.msra.mxu0 %v30
    %73 = vmatpush.msra.mxu0 %v29
    %74 = vmatpush.msra.mxu0 %v28
    %75 = vmatpush.msra.mxu0 %v27
    %76 = vmatpush.msra.mxu0 %v26
    %77 = vmatpush.msra.mxu0 %v25
    %78 = vmatpush.msra.mxu0 %v24
    %79 = vmatmul.f32.gmra.mxu0 %v46
    %v80 = vpop.f32.mrf.mxu0
    %v81 = vadd.f32 %v32, %v80
    %82 = vmatmul.f32.gmra.mxu0 %v49
    %v83 = vpop.f32.mrf.mxu0
    %v84 = vadd.f32 %v33, %v83
    %85 = vmatmul.f32.gmra.mxu0 %v52
    %v86 = vpop.f32.mrf.mxu0
    %v87 = vadd.f32 %v34, %v86
    %88 = vmatmul.f32.gmra.mxu0 %v55
    %v89 = vpop.f32.mrf.mxu0
    %v90 = vadd.f32 %v35, %v89
    %91 = vmatmul.f32.gmra.mxu0 %v58
    %v92 = vpop.f32.mrf.mxu0
    %v93 = vadd.f32 %v36, %v92
    %94 = vmatmul.f32.gmra.mxu0 %v61
    %v95 = vpop.f32.mrf.mxu0
    %v96 = vadd.f32 %v37, %v95
    %97 = vdwg.mxu0
    %v98 = vlaneseq
    %v99 = vand.u32 %v98, 127
    %vm100 = vcmp.lt.s32.totalorder %v99, 17
    %v101 = vsel %vm100, 0.0, -1e+30
    %v102 = vld [vmem:[%s4] sm:$0x1]
    %v103 = vld [vmem:[%s4 + $0x1] sm:$0x1]
    %v104 = vld [vmem:[%s4 + $0x2] sm:$0x1]
    %v105 = vld [vmem:[%s4 + $0x3] sm:$0x1]
    %v106 = vld [vmem:[%s4 + $0x4] sm:$0x1]
    %v107 = vld [vmem:[%s4 + $0x5] sm:$0x1]
    %v108 = vld [vmem:[%s4 + $0x6] sm:$0x1]
    %v109 = vld [vmem:[%s4 + $0x7] sm:$0x1]
    %v110 = vld [vmem:[%s2] sm:$0xff]
    %v111 = vld [vmem:[%s2 + $0x10] sm:$0xff]
    %v112 = vld [vmem:[%s2 + $0x20] sm:$0xff]
    %v113 = vld [vmem:[%s2 + $0x30] sm:$0xff]
    %v114 = vld [vmem:[%s2 + $0x8] sm:$0xff]
    %v115 = vld [vmem:[%s2 + $0x18] sm:$0xff]
    %v116 = vld [vmem:[%s2 + $0x28] sm:$0xff]
    %v117 = vld [vmem:[%s2 + $0x38] sm:$0xff]
    %v118 = vld [vmem:[%s3] sm:$0xff]
    %v119 = vld [vmem:[%s3 + $0x8] sm:$0xff]
    %v120 = vld [vmem:[%s3 + $0x10] sm:$0xff]
    %v121 = vld [vmem:[%s3 + $0x18] sm:$0xff]
    %v122 = vld [vmem:[%s3 + $0x20] sm:$0xff]
    %v123 = vld [vmem:[%s3 + $0x28] sm:$0xff]
    %v124 = vld [vmem:[%s3 + $0x30] sm:$0xff]
    %v125 = vld [vmem:[%s3 + $0x38] sm:$0xff]
    %v126 = vld [vmem:[%s3 + $0x40] sm:$0xff]
    %v127 = vld [vmem:[%s3 + $0x48] sm:$0xff]
    %v128 = vld [vmem:[%s3 + $0x50] sm:$0xff]
    %v129 = vld [vmem:[%s3 + $0x58] sm:$0xff]
    %v130 = vld [vmem:[%s3 + $0x60] sm:$0xff]
    %v131 = vld [vmem:[%s3 + $0x68] sm:$0xff]
    %v132 = vld [vmem:[%s3 + $0x70] sm:$0xff]
    %v133 = vld [vmem:[%s3 + $0x78] sm:$0xff]
    %vm134 = vcmask 261120
    %v135 = vsel %vm134, %v81, 0.0
    %136 = vadd.xlane.f32.xlu0 %v135
    %v137 = vpop.xlane.xlu0 %136
    %v138 = vsel %vm134, %v84, 0.0
    %139 = vadd.xlane.f32.xlu0 %v138
    %v140 = vpop.xlane.xlu0 %139
    %v141 = vsel %vm134, %v87, 0.0
    %142 = vadd.xlane.f32.xlu0 %v141
    %v143 = vpop.xlane.xlu0 %142
    %v144 = vsel %vm134, %v90, 0.0
    %145 = vadd.xlane.f32.xlu0 %v144
    %v146 = vpop.xlane.xlu0 %145
    %v147 = vsel %vm134, %v93, 0.0
    %148 = vadd.xlane.f32.xlu0 %v147
    %v149 = vpop.xlane.xlu0 %148
    %v150 = vsel %vm134, %v96, 0.0
    %151 = vadd.xlane.f32.xlu0 %v150
    %v152 = vpop.xlane.xlu0 %151
    %v153 = vrcp.pop 32.0
    %v154 = vmul.f32 32.0, %v153
    %v155 = vsub.f32 1.0, %v154
    %v156 = vmul.f32 %v153, %v155
    %v157 = vadd.f32 %v153, %v156
    %vm158 = vweird.f32 %v153
    %v159 = vsel %vm158, %v153, %v157
    %v160 = vmul.f32 %v137, %v159
    %v161 = vmul.f32 %v140, %v159
    %v162 = vmul.f32 %v143, %v159
    %v163 = vmul.f32 %v146, %v159
    %v164 = vmul.f32 %v149, %v159
    %v165 = vmul.f32 %v152, %v159
    %v166 = vsub.f32 %v81, %v160
    %v167 = vsub.f32 %v84, %v161
    %v168 = vsub.f32 %v87, %v162
    %v169 = vsub.f32 %v90, %v163
    %v170 = vsub.f32 %v93, %v164
    %v171 = vsub.f32 %v96, %v165
    %v172 = vmul.f32 %v166, %v166
    %v173 = vmul.f32 %v167, %v167
    %v174 = vmul.f32 %v168, %v168
    %v175 = vmul.f32 %v169, %v169
    %v176 = vmul.f32 %v170, %v170
    %v177 = vmul.f32 %v171, %v171
    %v178 = vsel %vm134, %v172, 0.0
    %179 = vadd.xlane.f32.xlu0 %v178
    %v180 = vpop.xlane.xlu0 %179
    %v181 = vsel %vm134, %v173, 0.0
    %182 = vadd.xlane.f32.xlu0 %v181
    %v183 = vpop.xlane.xlu0 %182
    %v184 = vsel %vm134, %v174, 0.0
    %185 = vadd.xlane.f32.xlu0 %v184
    %v186 = vpop.xlane.xlu0 %185
    %v187 = vsel %vm134, %v175, 0.0
    %188 = vadd.xlane.f32.xlu0 %v187
    %v189 = vpop.xlane.xlu0 %188
    %v190 = vsel %vm134, %v176, 0.0
    %191 = vadd.xlane.f32.xlu0 %v190
    %v192 = vpop.xlane.xlu0 %191
    %v193 = vsel %vm134, %v177, 0.0
    %194 = vadd.xlane.f32.xlu0 %v193
    %v195 = vpop.xlane.xlu0 %194
    %v196 = vmul.f32 %v180, %v159
    %v197 = vmul.f32 %v183, %v159
    %v198 = vmul.f32 %v186, %v159
    %v199 = vmul.f32 %v189, %v159
    %v200 = vmul.f32 %v192, %v159
    %v201 = vmul.f32 %v195, %v159
    %v202 = vadd.f32 %v196, 1e-06
    %v203 = vadd.f32 %v197, 1e-06
    %v204 = vadd.f32 %v198, 1e-06
    %v205 = vadd.f32 %v199, 1e-06
    %v206 = vadd.f32 %v200, 1e-06
    %v207 = vadd.f32 %v201, 1e-06
    %v208 = vrsqrt.pop %v202
    %v209 = vmul.f32 %v208, %v202
    %v210 = vmul.f32 %v209, %v208
    %v211 = vmul.f32 0.5, %v210
    %v212 = vsub.f32 1.5, %v211
    %v213 = vmul.f32 %v208, %v212
    %vm214 = vweird.f32 %v202
    %vm215 = vweird.f32 %v208
    %vm216 = vmor %vm214, %vm215
    %v217 = vsel %vm216, %v208, %v213
    %v218 = vrsqrt.pop %v203
    %v219 = vmul.f32 %v218, %v203
    %v220 = vmul.f32 %v219, %v218
    %v221 = vmul.f32 0.5, %v220
    %v222 = vsub.f32 1.5, %v221
    %v223 = vmul.f32 %v218, %v222
    %vm224 = vweird.f32 %v203
    %vm225 = vweird.f32 %v218
    %vm226 = vmor %vm224, %vm225
    %v227 = vsel %vm226, %v218, %v223
    %v228 = vrsqrt.pop %v204
    %v229 = vmul.f32 %v228, %v204
    %v230 = vmul.f32 %v229, %v228
    %v231 = vmul.f32 0.5, %v230
    %v232 = vsub.f32 1.5, %v231
    %v233 = vmul.f32 %v228, %v232
    %vm234 = vweird.f32 %v204
    %vm235 = vweird.f32 %v228
    %vm236 = vmor %vm234, %vm235
    %v237 = vsel %vm236, %v228, %v233
    %v238 = vrsqrt.pop %v205
    %v239 = vmul.f32 %v238, %v205
    %v240 = vmul.f32 %v239, %v238
    %v241 = vmul.f32 0.5, %v240
    %v242 = vsub.f32 1.5, %v241
    %v243 = vmul.f32 %v238, %v242
    %vm244 = vweird.f32 %v205
    %vm245 = vweird.f32 %v238
    %vm246 = vmor %vm244, %vm245
    %v247 = vsel %vm246, %v238, %v243
    %v248 = vrsqrt.pop %v206
    %v249 = vmul.f32 %v248, %v206
    %v250 = vmul.f32 %v249, %v248
    %v251 = vmul.f32 0.5, %v250
    %v252 = vsub.f32 1.5, %v251
    %v253 = vmul.f32 %v248, %v252
    %vm254 = vweird.f32 %v206
    %vm255 = vweird.f32 %v248
    %vm256 = vmor %vm254, %vm255
    %v257 = vsel %vm256, %v248, %v253
    %v258 = vrsqrt.pop %v207
    %v259 = vmul.f32 %v258, %v207
    %v260 = vmul.f32 %v259, %v258
    %v261 = vmul.f32 0.5, %v260
    %v262 = vsub.f32 1.5, %v261
    %v263 = vmul.f32 %v258, %v262
    %vm264 = vweird.f32 %v207
    %vm265 = vweird.f32 %v258
    %vm266 = vmor %vm264, %vm265
    %v267 = vsel %vm266, %v258, %v263
    %v268 = vmul.f32 %v166, %v217
    %v269 = vmul.f32 %v167, %v227
    %v270 = vmul.f32 %v168, %v237
    %v271 = vmul.f32 %v169, %v247
    %v272 = vmul.f32 %v170, %v257
    %v273 = vmul.f32 %v171, %v267
    %v274 = vperm.slane %v102, 0
    %v275 = vmul.f32 %v268, %v274
    %v276 = vmul.f32 %v269, %v274
    %v277 = vmul.f32 %v270, %v274
    %v278 = vmul.f32 %v271, %v274
    %v279 = vmul.f32 %v272, %v274
    %v280 = vmul.f32 %v273, %v274
    %v281 = vperm.slane %v103, 0
    %v282 = vadd.f32 %v275, %v281
    %v283 = vadd.f32 %v276, %v281
    %v284 = vadd.f32 %v277, %v281
    %v285 = vadd.f32 %v278, %v281
    %v286 = vadd.f32 %v279, %v281
    %v287 = vadd.f32 %v280, %v281
    %v288 = vperm.slane %v106, 0
    %v290 = vsel %vm134, %v282, 0
    %v293 = vsel %vm134, %v283, 0
    %v296 = vsel %vm134, %v284, 0
    %v299 = vsel %vm134, %v285, 0
    %v302 = vsel %vm134, %v286, 0
    %v305 = vsel %vm134, %v287, 0
    %307 = vmatpush.msra.mxu0 0.0
    %308 = vmatpush.msra.mxu0 0.0
    %309 = vmatpush.msra.mxu0 0.0
    %310 = vmatpush.msra.mxu0 0.0
    %311 = vmatpush.msra.mxu0 0.0
    %312 = vmatpush.msra.mxu0 0.0
    %313 = vmatpush.msra.mxu0 0.0
    %314 = vmatpush.msra.mxu0 0.0
    %315 = vmatpush.msra.mxu0 0.0
    %316 = vmatpush.msra.mxu0 0.0
    %317 = vmatpush.msra.mxu0 0.0
    %318 = vmatpush.msra.mxu0 0.0
    %319 = vmatpush.msra.mxu0 %v113
    %320 = vmatpush.msra.mxu0 %v112
    %321 = vmatpush.msra.mxu0 %v111
    %322 = vmatpush.msra.mxu0 %v110
    %323 = vmatmul.f32.gmra.mxu0 %v290
    %v324 = vpop.f32.mrf.mxu0
    %v325 = vadd.f32 %v288, %v324
    %326 = vmatmul.f32.gmra.mxu0 %v293
    %v327 = vpop.f32.mrf.mxu0
    %v328 = vadd.f32 %v288, %v327
    %329 = vmatmul.f32.gmra.mxu0 %v296
    %v330 = vpop.f32.mrf.mxu0
    %v331 = vadd.f32 %v288, %v330
    %332 = vmatmul.f32.gmra.mxu0 %v299
    %v333 = vpop.f32.mrf.mxu0
    %v334 = vadd.f32 %v288, %v333
    %335 = vmatmul.f32.gmra.mxu0 %v302
    %v336 = vpop.f32.mrf.mxu0
    %v337 = vadd.f32 %v288, %v336
    %338 = vmatmul.f32.gmra.mxu0 %v305
    %v339 = vpop.f32.mrf.mxu0
    %v340 = vadd.f32 %v288, %v339
    %341 = vdwg.mxu0
    %345 = vrot.lane.b32.xlu0 %v325, 96
    %v346 = vpop.permute.xlu0 %345
    %347 = vrot.lane.b32.xlu0 %v328, 96
    %v348 = vpop.permute.xlu0 %347
    %349 = vrot.lane.b32.xlu0 %v331, 96
    %v350 = vpop.permute.xlu0 %349
    %vm351 = vcmask 64512
    %v352 = vsel %vm351, %v325, 0
    %v354 = vsel %vm351, %v328, 0
    %v356 = vsel %vm351, %v331, 0
    %v358 = vsel %vm351, %v346, 0
    %v360 = vsel %vm351, %v348, 0
    %v362 = vsel %vm351, %v350, 0
    %364 = vmatpush.xpose.msra.mxu0 0.0
    %365 = vmatpush.xpose.msra.mxu0 0.0
    %366 = vmatpush.xpose.msra.mxu0 0.0
    %367 = vmatpush.xpose.msra.mxu0 0.0
    %368 = vmatpush.xpose.msra.mxu0 0.0
    %369 = vmatpush.xpose.msra.mxu0 0.0
    %370 = vmatpush.xpose.msra.mxu0 0.0
    %371 = vmatpush.xpose.msra.mxu0 0.0
    %372 = vmatpush.xpose.msra.mxu0 0.0
    %373 = vmatpush.xpose.msra.mxu0 0.0
    %374 = vmatpush.xpose.msra.mxu0 0.0
    %375 = vmatpush.xpose.msra.mxu0 0.0
    %376 = vmatpush.xpose.msra.mxu0 0.0
    %377 = vmatpush.xpose.msra.mxu0 %v362
    %378 = vmatpush.xpose.msra.mxu0 %v360
    %379 = vmatpush.xpose.msra.mxu0 %v358
    %380 = vmatmul.f32.gmra.mxu0 %v352
    %v381 = vpop.f32.mrf.mxu0
    %v382 = vadd.f32 0.0, %v381
    %383 = vmatmul.f32.gmra.mxu0 %v354
    %v384 = vpop.f32.mrf.mxu0
    %v385 = vadd.f32 0.0, %v384
    %386 = vmatmul.f32.gmra.mxu0 %v356
    %v387 = vpop.f32.mrf.mxu0
    %v388 = vadd.f32 0.0, %v387
    %389 = vdwg.mxu0
    %v390 = vmul.f32 %v382, 0.35355338
    %v391 = vmul.f32 %v385, 0.35355338
    %v392 = vmul.f32 %v388, 0.35355338
    %v393 = vadd.f32 %v390, %v101
    %v394 = vadd.f32 %v391, %v101
    %v395 = vadd.f32 %v392, %v101
    %vm396 = vcmask 195584
    %v397 = vsel %vm396, %v393, -inf
    %398 = vmax.xlane.f32.xlu0 %v397
    %v399 = vpop.xlane.xlu0 %398
    %v400 = vsel %vm396, %v394, -inf
    %401 = vmax.xlane.f32.xlu0 %v400
    %v402 = vpop.xlane.xlu0 %401
    %v403 = vsel %vm396, %v395, -inf
    %404 = vmax.xlane.f32.xlu0 %v403
    %v405 = vpop.xlane.xlu0 %404
    %v406 = vsub.f32 %v393, %v399
    %v407 = vsub.f32 %v394, %v402
    %v408 = vsub.f32 %v395, %v405
    %v409 = vmul.f32 %v406, 1.442695
    %v410 = vpow.pop %v409
    %v411 = vmul.f32 %v407, 1.442695
    %v412 = vpow.pop %v411
    %v413 = vmul.f32 %v408, 1.442695
    %v414 = vpow.pop %v413
    %v415 = vsel %vm396, %v410, 0.0
    %416 = vadd.xlane.f32.xlu0 %v415
    %v417 = vpop.xlane.xlu0 %416
    %v418 = vsel %vm396, %v412, 0.0
    %419 = vadd.xlane.f32.xlu0 %v418
    %v420 = vpop.xlane.xlu0 %419
    %v421 = vsel %vm396, %v414, 0.0
    %422 = vadd.xlane.f32.xlu0 %v421
    %v423 = vpop.xlane.xlu0 %422
    %v424 = vrcp.pop %v417
    %v425 = vmul.f32 %v417, %v424
    %v426 = vsub.f32 1.0, %v425
    %v427 = vmul.f32 %v424, %v426
    %v428 = vadd.f32 %v424, %v427
    %vm429 = vweird.f32 %v417
    %vm430 = vweird.f32 %v424
    %vm431 = vmor %vm429, %vm430
    %v432 = vsel %vm431, %v424, %v428
    %v433 = vand.u32 2147483647, %v417
    %vm434 = vcmp.eq.f32.partialorder %v433, 8.507059e+37
    %v435 = vand.u32 %v417, 2147483648
    %v436 = vor.u32 1.1754944e-38, %v435
    %v437 = vsel %vm434, %v436, %v432
    %v438 = vmul.f32 %v410, %v437
    %v439 = vrcp.pop %v420
    %v440 = vmul.f32 %v420, %v439
    %v441 = vsub.f32 1.0, %v440
    %v442 = vmul.f32 %v439, %v441
    %v443 = vadd.f32 %v439, %v442
    %vm444 = vweird.f32 %v420
    %vm445 = vweird.f32 %v439
    %vm446 = vmor %vm444, %vm445
    %v447 = vsel %vm446, %v439, %v443
    %v448 = vand.u32 2147483647, %v420
    %vm449 = vcmp.eq.f32.partialorder %v448, 8.507059e+37
    %v450 = vand.u32 %v420, 2147483648
    %v451 = vor.u32 1.1754944e-38, %v450
    %v452 = vsel %vm449, %v451, %v447
    %v453 = vmul.f32 %v412, %v452
    %v454 = vrcp.pop %v423
    %v455 = vmul.f32 %v423, %v454
    %v456 = vsub.f32 1.0, %v455
    %v457 = vmul.f32 %v454, %v456
    %v458 = vadd.f32 %v454, %v457
    %vm459 = vweird.f32 %v423
    %vm460 = vweird.f32 %v454
    %vm461 = vmor %vm459, %vm460
    %v462 = vsel %vm461, %v454, %v458
    %v463 = vand.u32 2147483647, %v423
    %vm464 = vcmp.eq.f32.partialorder %v463, 8.507059e+37
    %v465 = vand.u32 %v423, 2147483648
    %v466 = vor.u32 1.1754944e-38, %v465
    %v467 = vsel %vm464, %v466, %v462
    %v468 = vmul.f32 %v414, %v467
    %469 = vrot.lane.b32.xlu0 %v325, 64
    %v470 = vpop.permute.xlu0 %469
    %471 = vrot.lane.b32.xlu0 %v328, 64
    %v472 = vpop.permute.xlu0 %471
    %473 = vrot.lane.b32.xlu0 %v331, 64
    %v474 = vpop.permute.xlu0 %473
    %v479 = vsel %vm396, %v438, 0
    %v482 = vsel %vm396, %v453, 0
    %v485 = vsel %vm396, %v468, 0
    %487 = vmatpush.msra.mxu0 0.0
    %488 = vmatpush.msra.mxu0 0.0
    %489 = vmatpush.msra.mxu0 0.0
    %490 = vmatpush.msra.mxu0 0.0
    %491 = vmatpush.msra.mxu0 0.0
    %492 = vmatpush.msra.mxu0 0.0
    %493 = vmatpush.msra.mxu0 0.0
    %494 = vmatpush.msra.mxu0 0.0
    %495 = vmatpush.msra.mxu0 0.0
    %496 = vmatpush.msra.mxu0 0.0
    %497 = vmatpush.msra.mxu0 0.0
    %498 = vmatpush.msra.mxu0 0.0
    %499 = vmatpush.msra.mxu0 0.0
    %500 = vmatpush.msra.mxu0 %v474
    %501 = vmatpush.msra.mxu0 %v472
    %502 = vmatpush.msra.mxu0 %v470
    %503 = vmatmul.f32.gmra.mxu0 %v479
    %v504 = vpop.f32.mrf.mxu0
    %v505 = vadd.f32 0.0, %v504
    %506 = vmatmul.f32.gmra.mxu0 %v482
    %v507 = vpop.f32.mrf.mxu0
    %v508 = vadd.f32 0.0, %v507
    %509 = vmatmul.f32.gmra.mxu0 %v485
    %v510 = vpop.f32.mrf.mxu0
    %v511 = vadd.f32 0.0, %v510
    %512 = vdwg.mxu0
    %513 = vrot.lane.b32.xlu0 %v325, 120
    %v514 = vpop.permute.xlu0 %513
    %515 = vrot.lane.b32.xlu0 %v328, 120
    %v516 = vpop.permute.xlu0 %515
    %517 = vrot.lane.b32.xlu0 %v331, 120
    %v518 = vpop.permute.xlu0 %517
    %519 = vrot.lane.b32.xlu0 %v325, 88
    %v520 = vpop.permute.xlu0 %519
    %521 = vrot.lane.b32.xlu0 %v328, 88
    %v522 = vpop.permute.xlu0 %521
    %523 = vrot.lane.b32.xlu0 %v331, 88
    %v524 = vpop.permute.xlu0 %523
    %v525 = vsel %vm351, %v514, 0
    %v527 = vsel %vm351, %v516, 0
    %v529 = vsel %vm351, %v518, 0
    %v531 = vsel %vm351, %v520, 0
    %v533 = vsel %vm351, %v522, 0
    %v535 = vsel %vm351, %v524, 0
    %537 = vmatpush.xpose.msra.mxu0 0.0
    %538 = vmatpush.xpose.msra.mxu0 0.0
    %539 = vmatpush.xpose.msra.mxu0 0.0
    %540 = vmatpush.xpose.msra.mxu0 0.0
    %541 = vmatpush.xpose.msra.mxu0 0.0
    %542 = vmatpush.xpose.msra.mxu0 0.0
    %543 = vmatpush.xpose.msra.mxu0 0.0
    %544 = vmatpush.xpose.msra.mxu0 0.0
    %545 = vmatpush.xpose.msra.mxu0 0.0
    %546 = vmatpush.xpose.msra.mxu0 0.0
    %547 = vmatpush.xpose.msra.mxu0 0.0
    %548 = vmatpush.xpose.msra.mxu0 0.0
    %549 = vmatpush.xpose.msra.mxu0 0.0
    %550 = vmatpush.xpose.msra.mxu0 %v535
    %551 = vmatpush.xpose.msra.mxu0 %v533
    %552 = vmatpush.xpose.msra.mxu0 %v531
    %553 = vmatmul.f32.gmra.mxu0 %v525
    %v554 = vpop.f32.mrf.mxu0
    %v555 = vadd.f32 0.0, %v554
    %556 = vmatmul.f32.gmra.mxu0 %v527
    %v557 = vpop.f32.mrf.mxu0
    %v558 = vadd.f32 0.0, %v557
    %559 = vmatmul.f32.gmra.mxu0 %v529
    %v560 = vpop.f32.mrf.mxu0
    %v561 = vadd.f32 0.0, %v560
    %562 = vdwg.mxu0
    %v563 = vmul.f32 %v555, 0.35355338
    %v564 = vmul.f32 %v558, 0.35355338
    %v565 = vmul.f32 %v561, 0.35355338
    %v566 = vadd.f32 %v563, %v101
    %v567 = vadd.f32 %v564, %v101
    %v568 = vadd.f32 %v565, %v101
    %v569 = vsel %vm396, %v566, -inf
    %570 = vmax.xlane.f32.xlu0 %v569
    %v571 = vpop.xlane.xlu0 %570
    %v572 = vsel %vm396, %v567, -inf
    %573 = vmax.xlane.f32.xlu0 %v572
    %v574 = vpop.xlane.xlu0 %573
    %v575 = vsel %vm396, %v568, -inf
    %576 = vmax.xlane.f32.xlu0 %v575
    %v577 = vpop.xlane.xlu0 %576
    %v578 = vsub.f32 %v566, %v571
    %v579 = vsub.f32 %v567, %v574
    %v580 = vsub.f32 %v568, %v577
    %v581 = vmul.f32 %v578, 1.442695
    %v582 = vpow.pop %v581
    %v583 = vmul.f32 %v579, 1.442695
    %v584 = vpow.pop %v583
    %v585 = vmul.f32 %v580, 1.442695
    %v586 = vpow.pop %v585
    %v587 = vsel %vm396, %v582, 0.0
    %588 = vadd.xlane.f32.xlu0 %v587
    %v589 = vpop.xlane.xlu0 %588
    %v590 = vsel %vm396, %v584, 0.0
    %591 = vadd.xlane.f32.xlu0 %v590
    %v592 = vpop.xlane.xlu0 %591
    %v593 = vsel %vm396, %v586, 0.0
    %594 = vadd.xlane.f32.xlu0 %v593
    %v595 = vpop.xlane.xlu0 %594
    %v596 = vrcp.pop %v589
    %v597 = vmul.f32 %v589, %v596
    %v598 = vsub.f32 1.0, %v597
    %v599 = vmul.f32 %v596, %v598
    %v600 = vadd.f32 %v596, %v599
    %vm601 = vweird.f32 %v589
    %vm602 = vweird.f32 %v596
    %vm603 = vmor %vm601, %vm602
    %v604 = vsel %vm603, %v596, %v600
    %v605 = vand.u32 2147483647, %v589
    %vm606 = vcmp.eq.f32.partialorder %v605, 8.507059e+37
    %v607 = vand.u32 %v589, 2147483648
    %v608 = vor.u32 1.1754944e-38, %v607
    %v609 = vsel %vm606, %v608, %v604
    %v610 = vmul.f32 %v582, %v609
    %v611 = vrcp.pop %v592
    %v612 = vmul.f32 %v592, %v611
    %v613 = vsub.f32 1.0, %v612
    %v614 = vmul.f32 %v611, %v613
    %v615 = vadd.f32 %v611, %v614
    %vm616 = vweird.f32 %v592
    %vm617 = vweird.f32 %v611
    %vm618 = vmor %vm616, %vm617
    %v619 = vsel %vm618, %v611, %v615
    %v620 = vand.u32 2147483647, %v592
    %vm621 = vcmp.eq.f32.partialorder %v620, 8.507059e+37
    %v622 = vand.u32 %v592, 2147483648
    %v623 = vor.u32 1.1754944e-38, %v622
    %v624 = vsel %vm621, %v623, %v619
    %v625 = vmul.f32 %v584, %v624
    %v626 = vrcp.pop %v595
    %v627 = vmul.f32 %v595, %v626
    %v628 = vsub.f32 1.0, %v627
    %v629 = vmul.f32 %v626, %v628
    %v630 = vadd.f32 %v626, %v629
    %vm631 = vweird.f32 %v595
    %vm632 = vweird.f32 %v626
    %vm633 = vmor %vm631, %vm632
    %v634 = vsel %vm633, %v626, %v630
    %v635 = vand.u32 2147483647, %v595
    %vm636 = vcmp.eq.f32.partialorder %v635, 8.507059e+37
    %v637 = vand.u32 %v595, 2147483648
    %v638 = vor.u32 1.1754944e-38, %v637
    %v639 = vsel %vm636, %v638, %v634
    %v640 = vmul.f32 %v586, %v639
    %641 = vrot.lane.b32.xlu0 %v325, 56
    %v642 = vpop.permute.xlu0 %641
    %643 = vrot.lane.b32.xlu0 %v328, 56
    %v644 = vpop.permute.xlu0 %643
    %645 = vrot.lane.b32.xlu0 %v331, 56
    %v646 = vpop.permute.xlu0 %645
    %v651 = vsel %vm396, %v610, 0
    %v654 = vsel %vm396, %v625, 0
    %v657 = vsel %vm396, %v640, 0
    %659 = vmatpush.msra.mxu0 0.0
    %660 = vmatpush.msra.mxu0 0.0
    %661 = vmatpush.msra.mxu0 0.0
    %662 = vmatpush.msra.mxu0 0.0
    %663 = vmatpush.msra.mxu0 0.0
    %664 = vmatpush.msra.mxu0 0.0
    %665 = vmatpush.msra.mxu0 0.0
    %666 = vmatpush.msra.mxu0 0.0
    %667 = vmatpush.msra.mxu0 0.0
    %668 = vmatpush.msra.mxu0 0.0
    %669 = vmatpush.msra.mxu0 0.0
    %670 = vmatpush.msra.mxu0 0.0
    %671 = vmatpush.msra.mxu0 0.0
    %672 = vmatpush.msra.mxu0 %v646
    %673 = vmatpush.msra.mxu0 %v644
    %674 = vmatpush.msra.mxu0 %v642
    %675 = vmatmul.f32.gmra.mxu0 %v651
    %v676 = vpop.f32.mrf.mxu0
    %v677 = vadd.f32 0.0, %v676
    %678 = vmatmul.f32.gmra.mxu0 %v654
    %v679 = vpop.f32.mrf.mxu0
    %v680 = vadd.f32 0.0, %v679
    %681 = vmatmul.f32.gmra.mxu0 %v657
    %v682 = vpop.f32.mrf.mxu0
    %v683 = vadd.f32 0.0, %v682
    %684 = vdwg.mxu0
    %685 = vrot.lane.b32.xlu0 %v325, 112
    %v686 = vpop.permute.xlu0 %685
    %687 = vrot.lane.b32.xlu0 %v328, 112
    %v688 = vpop.permute.xlu0 %687
    %689 = vrot.lane.b32.xlu0 %v331, 112
    %v690 = vpop.permute.xlu0 %689
    %691 = vrot.lane.b32.xlu0 %v325, 80
    %v692 = vpop.permute.xlu0 %691
    %693 = vrot.lane.b32.xlu0 %v328, 80
    %v694 = vpop.permute.xlu0 %693
    %695 = vrot.lane.b32.xlu0 %v331, 80
    %v696 = vpop.permute.xlu0 %695
    %v697 = vsel %vm351, %v686, 0
    %v699 = vsel %vm351, %v688, 0
    %v701 = vsel %vm351, %v690, 0
    %v703 = vsel %vm351, %v692, 0
    %v705 = vsel %vm351, %v694, 0
    %v707 = vsel %vm351, %v696, 0
    %709 = vmatpush.xpose.msra.mxu0 0.0
    %710 = vmatpush.xpose.msra.mxu0 0.0
    %711 = vmatpush.xpose.msra.mxu0 0.0
    %712 = vmatpush.xpose.msra.mxu0 0.0
    %713 = vmatpush.xpose.msra.mxu0 0.0
    %714 = vmatpush.xpose.msra.mxu0 0.0
    %715 = vmatpush.xpose.msra.mxu0 0.0
    %716 = vmatpush.xpose.msra.mxu0 0.0
    %717 = vmatpush.xpose.msra.mxu0 0.0
    %718 = vmatpush.xpose.msra.mxu0 0.0
    %719 = vmatpush.xpose.msra.mxu0 0.0
    %720 = vmatpush.xpose.msra.mxu0 0.0
    %721 = vmatpush.xpose.msra.mxu0 0.0
    %722 = vmatpush.xpose.msra.mxu0 %v707
    %723 = vmatpush.xpose.msra.mxu0 %v705
    %724 = vmatpush.xpose.msra.mxu0 %v703
    %725 = vmatmul.f32.gmra.mxu0 %v697
    %v726 = vpop.f32.mrf.mxu0
    %v727 = vadd.f32 0.0, %v726
    %728 = vmatmul.f32.gmra.mxu0 %v699
    %v729 = vpop.f32.mrf.mxu0
    %v730 = vadd.f32 0.0, %v729
    %731 = vmatmul.f32.gmra.mxu0 %v701
    %v732 = vpop.f32.mrf.mxu0
    %v733 = vadd.f32 0.0, %v732
    %734 = vdwg.mxu0
    %v735 = vmul.f32 %v727, 0.35355338
    %v736 = vmul.f32 %v730, 0.35355338
    %v737 = vmul.f32 %v733, 0.35355338
    %v738 = vadd.f32 %v735, %v101
    %v739 = vadd.f32 %v736, %v101
    %v740 = vadd.f32 %v737, %v101
    %v741 = vsel %vm396, %v738, -inf
    %742 = vmax.xlane.f32.xlu0 %v741
    %v743 = vpop.xlane.xlu0 %742
    %v744 = vsel %vm396, %v739, -inf
    %745 = vmax.xlane.f32.xlu0 %v744
    %v746 = vpop.xlane.xlu0 %745
    %v747 = vsel %vm396, %v740, -inf
    %748 = vmax.xlane.f32.xlu0 %v747
    %v749 = vpop.xlane.xlu0 %748
    %v750 = vsub.f32 %v738, %v743
    %v751 = vsub.f32 %v739, %v746
    %v752 = vsub.f32 %v740, %v749
    %v753 = vmul.f32 %v750, 1.442695
    %v754 = vpow.pop %v753
    %v755 = vmul.f32 %v751, 1.442695
    %v756 = vpow.pop %v755
    %v757 = vmul.f32 %v752, 1.442695
    %v758 = vpow.pop %v757
    %v759 = vsel %vm396, %v754, 0.0
    %760 = vadd.xlane.f32.xlu0 %v759
    %v761 = vpop.xlane.xlu0 %760
    %v762 = vsel %vm396, %v756, 0.0
    %763 = vadd.xlane.f32.xlu0 %v762
    %v764 = vpop.xlane.xlu0 %763
    %v765 = vsel %vm396, %v758, 0.0
    %766 = vadd.xlane.f32.xlu0 %v765
    %v767 = vpop.xlane.xlu0 %766
    %v768 = vrcp.pop %v761
    %v769 = vmul.f32 %v761, %v768
    %v770 = vsub.f32 1.0, %v769
    %v771 = vmul.f32 %v768, %v770
    %v772 = vadd.f32 %v768, %v771
    %vm773 = vweird.f32 %v761
    %vm774 = vweird.f32 %v768
    %vm775 = vmor %vm773, %vm774
    %v776 = vsel %vm775, %v768, %v772
    %v777 = vand.u32 2147483647, %v761
    %vm778 = vcmp.eq.f32.partialorder %v777, 8.507059e+37
    %v779 = vand.u32 %v761, 2147483648
    %v780 = vor.u32 1.1754944e-38, %v779
    %v781 = vsel %vm778, %v780, %v776
    %v782 = vmul.f32 %v754, %v781
    %v783 = vrcp.pop %v764
    %v784 = vmul.f32 %v764, %v783
    %v785 = vsub.f32 1.0, %v784
    %v786 = vmul.f32 %v783, %v785
    %v787 = vadd.f32 %v783, %v786
    %vm788 = vweird.f32 %v764
    %vm789 = vweird.f32 %v783
    %vm790 = vmor %vm788, %vm789
    %v791 = vsel %vm790, %v783, %v787
    %v792 = vand.u32 2147483647, %v764
    %vm793 = vcmp.eq.f32.partialorder %v792, 8.507059e+37
    %v794 = vand.u32 %v764, 2147483648
    %v795 = vor.u32 1.1754944e-38, %v794
    %v796 = vsel %vm793, %v795, %v791
    %v797 = vmul.f32 %v756, %v796
    %v798 = vrcp.pop %v767
    %v799 = vmul.f32 %v767, %v798
    %v800 = vsub.f32 1.0, %v799
    %v801 = vmul.f32 %v798, %v800
    %v802 = vadd.f32 %v798, %v801
    %vm803 = vweird.f32 %v767
    %vm804 = vweird.f32 %v798
    %vm805 = vmor %vm803, %vm804
    %v806 = vsel %vm805, %v798, %v802
    %v807 = vand.u32 2147483647, %v767
    %vm808 = vcmp.eq.f32.partialorder %v807, 8.507059e+37
    %v809 = vand.u32 %v767, 2147483648
    %v810 = vor.u32 1.1754944e-38, %v809
    %v811 = vsel %vm808, %v810, %v806
    %v812 = vmul.f32 %v758, %v811
    %813 = vrot.lane.b32.xlu0 %v325, 48
    %v814 = vpop.permute.xlu0 %813
    %815 = vrot.lane.b32.xlu0 %v328, 48
    %v816 = vpop.permute.xlu0 %815
    %817 = vrot.lane.b32.xlu0 %v331, 48
    %v818 = vpop.permute.xlu0 %817
    %v823 = vsel %vm396, %v782, 0
    %v826 = vsel %vm396, %v797, 0
    %v829 = vsel %vm396, %v812, 0
    %831 = vmatpush.msra.mxu0 0.0
    %832 = vmatpush.msra.mxu0 0.0
    %833 = vmatpush.msra.mxu0 0.0
    %834 = vmatpush.msra.mxu0 0.0
    %835 = vmatpush.msra.mxu0 0.0
    %836 = vmatpush.msra.mxu0 0.0
    %837 = vmatpush.msra.mxu0 0.0
    %838 = vmatpush.msra.mxu0 0.0
    %839 = vmatpush.msra.mxu0 0.0
    %840 = vmatpush.msra.mxu0 0.0
    %841 = vmatpush.msra.mxu0 0.0
    %842 = vmatpush.msra.mxu0 0.0
    %843 = vmatpush.msra.mxu0 0.0
    %844 = vmatpush.msra.mxu0 %v818
    %845 = vmatpush.msra.mxu0 %v816
    %846 = vmatpush.msra.mxu0 %v814
    %847 = vmatmul.f32.gmra.mxu0 %v823
    %v848 = vpop.f32.mrf.mxu0
    %v849 = vadd.f32 0.0, %v848
    %850 = vmatmul.f32.gmra.mxu0 %v826
    %v851 = vpop.f32.mrf.mxu0
    %v852 = vadd.f32 0.0, %v851
    %853 = vmatmul.f32.gmra.mxu0 %v829
    %v854 = vpop.f32.mrf.mxu0
    %v855 = vadd.f32 0.0, %v854
    %856 = vdwg.mxu0
    %857 = vrot.lane.b32.xlu0 %v325, 104
    %v858 = vpop.permute.xlu0 %857
    %859 = vrot.lane.b32.xlu0 %v328, 104
    %v860 = vpop.permute.xlu0 %859
    %861 = vrot.lane.b32.xlu0 %v331, 104
    %v862 = vpop.permute.xlu0 %861
    %863 = vrot.lane.b32.xlu0 %v325, 72
    %v864 = vpop.permute.xlu0 %863
    %865 = vrot.lane.b32.xlu0 %v328, 72
    %v866 = vpop.permute.xlu0 %865
    %867 = vrot.lane.b32.xlu0 %v331, 72
    %v868 = vpop.permute.xlu0 %867
    %v869 = vsel %vm351, %v858, 0
    %v871 = vsel %vm351, %v860, 0
    %v873 = vsel %vm351, %v862, 0
    %v875 = vsel %vm351, %v864, 0
    %v877 = vsel %vm351, %v866, 0
    %v879 = vsel %vm351, %v868, 0
    %881 = vmatpush.xpose.msra.mxu0 0.0
    %882 = vmatpush.xpose.msra.mxu0 0.0
    %883 = vmatpush.xpose.msra.mxu0 0.0
    %884 = vmatpush.xpose.msra.mxu0 0.0
    %885 = vmatpush.xpose.msra.mxu0 0.0
    %886 = vmatpush.xpose.msra.mxu0 0.0
    %887 = vmatpush.xpose.msra.mxu0 0.0
    %888 = vmatpush.xpose.msra.mxu0 0.0
    %889 = vmatpush.xpose.msra.mxu0 0.0
    %890 = vmatpush.xpose.msra.mxu0 0.0
    %891 = vmatpush.xpose.msra.mxu0 0.0
    %892 = vmatpush.xpose.msra.mxu0 0.0
    %893 = vmatpush.xpose.msra.mxu0 0.0
    %894 = vmatpush.xpose.msra.mxu0 %v879
    %895 = vmatpush.xpose.msra.mxu0 %v877
    %896 = vmatpush.xpose.msra.mxu0 %v875
    %897 = vmatmul.f32.gmra.mxu0 %v869
    %v898 = vpop.f32.mrf.mxu0
    %v899 = vadd.f32 0.0, %v898
    %900 = vmatmul.f32.gmra.mxu0 %v871
    %v901 = vpop.f32.mrf.mxu0
    %v902 = vadd.f32 0.0, %v901
    %903 = vmatmul.f32.gmra.mxu0 %v873
    %v904 = vpop.f32.mrf.mxu0
    %v905 = vadd.f32 0.0, %v904
    %906 = vdwg.mxu0
    %v907 = vmul.f32 %v899, 0.35355338
    %v908 = vmul.f32 %v902, 0.35355338
    %v909 = vmul.f32 %v905, 0.35355338
    %v910 = vadd.f32 %v907, %v101
    %v911 = vadd.f32 %v908, %v101
    %v912 = vadd.f32 %v909, %v101
    %v913 = vsel %vm396, %v910, -inf
    %914 = vmax.xlane.f32.xlu0 %v913
    %v915 = vpop.xlane.xlu0 %914
    %v916 = vsel %vm396, %v911, -inf
    %917 = vmax.xlane.f32.xlu0 %v916
    %v918 = vpop.xlane.xlu0 %917
    %v919 = vsel %vm396, %v912, -inf
    %920 = vmax.xlane.f32.xlu0 %v919
    %v921 = vpop.xlane.xlu0 %920
    %v922 = vsub.f32 %v910, %v915
    %v923 = vsub.f32 %v911, %v918
    %v924 = vsub.f32 %v912, %v921
    %v925 = vmul.f32 %v922, 1.442695
    %v926 = vpow.pop %v925
    %v927 = vmul.f32 %v923, 1.442695
    %v928 = vpow.pop %v927
    %v929 = vmul.f32 %v924, 1.442695
    %v930 = vpow.pop %v929
    %v931 = vsel %vm396, %v926, 0.0
    %932 = vadd.xlane.f32.xlu0 %v931
    %v933 = vpop.xlane.xlu0 %932
    %v934 = vsel %vm396, %v928, 0.0
    %935 = vadd.xlane.f32.xlu0 %v934
    %v936 = vpop.xlane.xlu0 %935
    %v937 = vsel %vm396, %v930, 0.0
    %938 = vadd.xlane.f32.xlu0 %v937
    %v939 = vpop.xlane.xlu0 %938
    %v940 = vrcp.pop %v933
    %v941 = vmul.f32 %v933, %v940
    %v942 = vsub.f32 1.0, %v941
    %v943 = vmul.f32 %v940, %v942
    %v944 = vadd.f32 %v940, %v943
    %vm945 = vweird.f32 %v933
    %vm946 = vweird.f32 %v940
    %vm947 = vmor %vm945, %vm946
    %v948 = vsel %vm947, %v940, %v944
    %v949 = vand.u32 2147483647, %v933
    %vm950 = vcmp.eq.f32.partialorder %v949, 8.507059e+37
    %v951 = vand.u32 %v933, 2147483648
    %v952 = vor.u32 1.1754944e-38, %v951
    %v953 = vsel %vm950, %v952, %v948
    %v954 = vmul.f32 %v926, %v953
    %v955 = vrcp.pop %v936
    %v956 = vmul.f32 %v936, %v955
    %v957 = vsub.f32 1.0, %v956
    %v958 = vmul.f32 %v955, %v957
    %v959 = vadd.f32 %v955, %v958
    %vm960 = vweird.f32 %v936
    %vm961 = vweird.f32 %v955
    %vm962 = vmor %vm960, %vm961
    %v963 = vsel %vm962, %v955, %v959
    %v964 = vand.u32 2147483647, %v936
    %vm965 = vcmp.eq.f32.partialorder %v964, 8.507059e+37
    %v966 = vand.u32 %v936, 2147483648
    %v967 = vor.u32 1.1754944e-38, %v966
    %v968 = vsel %vm965, %v967, %v963
    %v969 = vmul.f32 %v928, %v968
    %v970 = vrcp.pop %v939
    %v971 = vmul.f32 %v939, %v970
    %v972 = vsub.f32 1.0, %v971
    %v973 = vmul.f32 %v970, %v972
    %v974 = vadd.f32 %v970, %v973
    %vm975 = vweird.f32 %v939
    %vm976 = vweird.f32 %v970
    %vm977 = vmor %vm975, %vm976
    %v978 = vsel %vm977, %v970, %v974
    %v979 = vand.u32 2147483647, %v939
    %vm980 = vcmp.eq.f32.partialorder %v979, 8.507059e+37
    %v981 = vand.u32 %v939, 2147483648
    %v982 = vor.u32 1.1754944e-38, %v981
    %v983 = vsel %vm980, %v982, %v978
    %v984 = vmul.f32 %v930, %v983
    %985 = vrot.lane.b32.xlu0 %v325, 40
    %v986 = vpop.permute.xlu0 %985
    %987 = vrot.lane.b32.xlu0 %v328, 40
    %v988 = vpop.permute.xlu0 %987
    %989 = vrot.lane.b32.xlu0 %v331, 40
    %v990 = vpop.permute.xlu0 %989
    %v995 = vsel %vm396, %v954, 0
    %v998 = vsel %vm396, %v969, 0
    %v1001 = vsel %vm396, %v984, 0
    %1003 = vmatpush.msra.mxu0 0.0
    %1004 = vmatpush.msra.mxu0 0.0
    %1005 = vmatpush.msra.mxu0 0.0
    %1006 = vmatpush.msra.mxu0 0.0
    %1007 = vmatpush.msra.mxu0 0.0
    %1008 = vmatpush.msra.mxu0 0.0
    %1009 = vmatpush.msra.mxu0 0.0
    %1010 = vmatpush.msra.mxu0 0.0
    %1011 = vmatpush.msra.mxu0 0.0
    %1012 = vmatpush.msra.mxu0 0.0
    %1013 = vmatpush.msra.mxu0 0.0
    %1014 = vmatpush.msra.mxu0 0.0
    %1015 = vmatpush.msra.mxu0 0.0
    %1016 = vmatpush.msra.mxu0 %v990
    %1017 = vmatpush.msra.mxu0 %v988
    %1018 = vmatpush.msra.mxu0 %v986
    %1019 = vmatmul.f32.gmra.mxu0 %v995
    %v1020 = vpop.f32.mrf.mxu0
    %v1021 = vadd.f32 0.0, %v1020
    %1022 = vmatmul.f32.gmra.mxu0 %v998
    %v1023 = vpop.f32.mrf.mxu0
    %v1024 = vadd.f32 0.0, %v1023
    %1025 = vmatmul.f32.gmra.mxu0 %v1001
    %v1026 = vpop.f32.mrf.mxu0
    %v1027 = vadd.f32 0.0, %v1026
    %1028 = vdwg.mxu0
    %1032 = vrot.lane.b32.xlu0 %v677, 8
    %v1033 = vpop.permute.xlu0 %1032
    %1034 = vrot.lane.b32.xlu0 %v680, 8
    %v1035 = vpop.permute.xlu0 %1034
    %1036 = vrot.lane.b32.xlu0 %v683, 8
    %v1037 = vpop.permute.xlu0 %1036
    %1044 = vrot.lane.b32.xlu0 %v849, 16
    %v1045 = vpop.permute.xlu0 %1044
    %1046 = vrot.lane.b32.xlu0 %v852, 16
    %v1047 = vpop.permute.xlu0 %1046
    %1048 = vrot.lane.b32.xlu0 %v855, 16
    %v1049 = vpop.permute.xlu0 %1048
    %1056 = vrot.lane.b32.xlu0 %v1021, 24
    %v1057 = vpop.permute.xlu0 %1056
    %1058 = vrot.lane.b32.xlu0 %v1024, 24
    %v1059 = vpop.permute.xlu0 %1058
    %1060 = vrot.lane.b32.xlu0 %v1027, 24
    %v1061 = vpop.permute.xlu0 %1060
    %v1065 = vsel %vm351, %v505, %v1033
    %v1066 = vsel %vm351, %v508, %v1035
    %v1067 = vsel %vm351, %v511, %v1037
    %vm1068 = vcmask 130048
    %v1069 = vsel %vm1068, %v1065, %v1045
    %v1070 = vsel %vm1068, %v1066, %v1047
    %v1071 = vsel %vm1068, %v1067, %v1049
    %v1072 = vsel %vm396, %v1069, %v1057
    %v1073 = vsel %vm396, %v1070, %v1059
    %v1074 = vsel %vm396, %v1071, %v1061
    %1078 = vrot.lane.b32.xlu0 %v334, 96
    %v1079 = vpop.permute.xlu0 %1078
    %1080 = vrot.lane.b32.xlu0 %v337, 96
    %v1081 = vpop.permute.xlu0 %1080
    %1082 = vrot.lane.b32.xlu0 %v340, 96
    %v1083 = vpop.permute.xlu0 %1082
    %v1084 = vsel %vm351, %v334, 0
    %v1086 = vsel %vm351, %v337, 0
    %v1088 = vsel %vm351, %v340, 0
    %v1090 = vsel %vm351, %v1079, 0
    %v1092 = vsel %vm351, %v1081, 0
    %v1094 = vsel %vm351, %v1083, 0
    %1096 = vmatpush.xpose.msra.mxu0 0.0
    %1097 = vmatpush.xpose.msra.mxu0 0.0
    %1098 = vmatpush.xpose.msra.mxu0 0.0
    %1099 = vmatpush.xpose.msra.mxu0 0.0
    %1100 = vmatpush.xpose.msra.mxu0 0.0
    %1101 = vmatpush.xpose.msra.mxu0 0.0
    %1102 = vmatpush.xpose.msra.mxu0 0.0
    %1103 = vmatpush.xpose.msra.mxu0 0.0
    %1104 = vmatpush.xpose.msra.mxu0 0.0
    %1105 = vmatpush.xpose.msra.mxu0 0.0
    %1106 = vmatpush.xpose.msra.mxu0 0.0
    %1107 = vmatpush.xpose.msra.mxu0 0.0
    %1108 = vmatpush.xpose.msra.mxu0 0.0
    %1109 = vmatpush.xpose.msra.mxu0 %v1094
    %1110 = vmatpush.xpose.msra.mxu0 %v1092
    %1111 = vmatpush.xpose.msra.mxu0 %v1090
    %1112 = vmatmul.f32.gmra.mxu0 %v1084
    %v1113 = vpop.f32.mrf.mxu0
    %v1114 = vadd.f32 0.0, %v1113
    %1115 = vmatmul.f32.gmra.mxu0 %v1086
    %v1116 = vpop.f32.mrf.mxu0
    %v1117 = vadd.f32 0.0, %v1116
    %1118 = vmatmul.f32.gmra.mxu0 %v1088
    %v1119 = vpop.f32.mrf.mxu0
    %v1120 = vadd.f32 0.0, %v1119
    %1121 = vdwg.mxu0
    %v1122 = vmul.f32 %v1114, 0.35355338
    %v1123 = vmul.f32 %v1117, 0.35355338
    %v1124 = vmul.f32 %v1120, 0.35355338
    %v1125 = vadd.f32 %v1122, %v101
    %v1126 = vadd.f32 %v1123, %v101
    %v1127 = vadd.f32 %v1124, %v101
    %v1128 = vsel %vm396, %v1125, -inf
    %1129 = vmax.xlane.f32.xlu0 %v1128
    %v1130 = vpop.xlane.xlu0 %1129
    %v1131 = vsel %vm396, %v1126, -inf
    %1132 = vmax.xlane.f32.xlu0 %v1131
    %v1133 = vpop.xlane.xlu0 %1132
    %v1134 = vsel %vm396, %v1127, -inf
    %1135 = vmax.xlane.f32.xlu0 %v1134
    %v1136 = vpop.xlane.xlu0 %1135
    %v1137 = vsub.f32 %v1125, %v1130
    %v1138 = vsub.f32 %v1126, %v1133
    %v1139 = vsub.f32 %v1127, %v1136
    %v1140 = vmul.f32 %v1137, 1.442695
    %v1141 = vpow.pop %v1140
    %v1142 = vmul.f32 %v1138, 1.442695
    %v1143 = vpow.pop %v1142
    %v1144 = vmul.f32 %v1139, 1.442695
    %v1145 = vpow.pop %v1144
    %v1146 = vsel %vm396, %v1141, 0.0
    %1147 = vadd.xlane.f32.xlu0 %v1146
    %v1148 = vpop.xlane.xlu0 %1147
    %v1149 = vsel %vm396, %v1143, 0.0
    %1150 = vadd.xlane.f32.xlu0 %v1149
    %v1151 = vpop.xlane.xlu0 %1150
    %v1152 = vsel %vm396, %v1145, 0.0
    %1153 = vadd.xlane.f32.xlu0 %v1152
    %v1154 = vpop.xlane.xlu0 %1153
    %v1155 = vrcp.pop %v1148
    %v1156 = vmul.f32 %v1148, %v1155
    %v1157 = vsub.f32 1.0, %v1156
    %v1158 = vmul.f32 %v1155, %v1157
    %v1159 = vadd.f32 %v1155, %v1158
    %vm1160 = vweird.f32 %v1148
    %vm1161 = vweird.f32 %v1155
    %vm1162 = vmor %vm1160, %vm1161
    %v1163 = vsel %vm1162, %v1155, %v1159
    %v1164 = vand.u32 2147483647, %v1148
    %vm1165 = vcmp.eq.f32.partialorder %v1164, 8.507059e+37
    %v1166 = vand.u32 %v1148, 2147483648
    %v1167 = vor.u32 1.1754944e-38, %v1166
    %v1168 = vsel %vm1165, %v1167, %v1163
    %v1169 = vmul.f32 %v1141, %v1168
    %v1170 = vrcp.pop %v1151
    %v1171 = vmul.f32 %v1151, %v1170
    %v1172 = vsub.f32 1.0, %v1171
    %v1173 = vmul.f32 %v1170, %v1172
    %v1174 = vadd.f32 %v1170, %v1173
    %vm1175 = vweird.f32 %v1151
    %vm1176 = vweird.f32 %v1170
    %vm1177 = vmor %vm1175, %vm1176
    %v1178 = vsel %vm1177, %v1170, %v1174
    %v1179 = vand.u32 2147483647, %v1151
    %vm1180 = vcmp.eq.f32.partialorder %v1179, 8.507059e+37
    %v1181 = vand.u32 %v1151, 2147483648
    %v1182 = vor.u32 1.1754944e-38, %v1181
    %v1183 = vsel %vm1180, %v1182, %v1178
    %v1184 = vmul.f32 %v1143, %v1183
    %v1185 = vrcp.pop %v1154
    %v1186 = vmul.f32 %v1154, %v1185
    %v1187 = vsub.f32 1.0, %v1186
    %v1188 = vmul.f32 %v1185, %v1187
    %v1189 = vadd.f32 %v1185, %v1188
    %vm1190 = vweird.f32 %v1154
    %vm1191 = vweird.f32 %v1185
    %vm1192 = vmor %vm1190, %vm1191
    %v1193 = vsel %vm1192, %v1185, %v1189
    %v1194 = vand.u32 2147483647, %v1154
    %vm1195 = vcmp.eq.f32.partialorder %v1194, 8.507059e+37
    %v1196 = vand.u32 %v1154, 2147483648
    %v1197 = vor.u32 1.1754944e-38, %v1196
    %v1198 = vsel %vm1195, %v1197, %v1193
    %v1199 = vmul.f32 %v1145, %v1198
    %1200 = vrot.lane.b32.xlu0 %v334, 64
    %v1201 = vpop.permute.xlu0 %1200
    %1202 = vrot.lane.b32.xlu0 %v337, 64
    %v1203 = vpop.permute.xlu0 %1202
    %1204 = vrot.lane.b32.xlu0 %v340, 64
    %v1205 = vpop.permute.xlu0 %1204
    %v1210 = vsel %vm396, %v1169, 0
    %v1213 = vsel %vm396, %v1184, 0
    %v1216 = vsel %vm396, %v1199, 0
    %1218 = vmatpush.msra.mxu0 0.0
    %1219 = vmatpush.msra.mxu0 0.0
    %1220 = vmatpush.msra.mxu0 0.0
    %1221 = vmatpush.msra.mxu0 0.0
    %1222 = vmatpush.msra.mxu0 0.0
    %1223 = vmatpush.msra.mxu0 0.0
    %1224 = vmatpush.msra.mxu0 0.0
    %1225 = vmatpush.msra.mxu0 0.0
    %1226 = vmatpush.msra.mxu0 0.0
    %1227 = vmatpush.msra.mxu0 0.0
    %1228 = vmatpush.msra.mxu0 0.0
    %1229 = vmatpush.msra.mxu0 0.0
    %1230 = vmatpush.msra.mxu0 0.0
    %1231 = vmatpush.msra.mxu0 %v1205
    %1232 = vmatpush.msra.mxu0 %v1203
    %1233 = vmatpush.msra.mxu0 %v1201
    %1234 = vmatmul.f32.gmra.mxu0 %v1210
    %v1235 = vpop.f32.mrf.mxu0
    %v1236 = vadd.f32 0.0, %v1235
    %1237 = vmatmul.f32.gmra.mxu0 %v1213
    %v1238 = vpop.f32.mrf.mxu0
    %v1239 = vadd.f32 0.0, %v1238
    %1240 = vmatmul.f32.gmra.mxu0 %v1216
    %v1241 = vpop.f32.mrf.mxu0
    %v1242 = vadd.f32 0.0, %v1241
    %1243 = vdwg.mxu0
    %1244 = vrot.lane.b32.xlu0 %v334, 120
    %v1245 = vpop.permute.xlu0 %1244
    %1246 = vrot.lane.b32.xlu0 %v337, 120
    %v1247 = vpop.permute.xlu0 %1246
    %1248 = vrot.lane.b32.xlu0 %v340, 120
    %v1249 = vpop.permute.xlu0 %1248
    %1250 = vrot.lane.b32.xlu0 %v334, 88
    %v1251 = vpop.permute.xlu0 %1250
    %1252 = vrot.lane.b32.xlu0 %v337, 88
    %v1253 = vpop.permute.xlu0 %1252
    %1254 = vrot.lane.b32.xlu0 %v340, 88
    %v1255 = vpop.permute.xlu0 %1254
    %v1256 = vsel %vm351, %v1245, 0
    %v1258 = vsel %vm351, %v1247, 0
    %v1260 = vsel %vm351, %v1249, 0
    %v1262 = vsel %vm351, %v1251, 0
    %v1264 = vsel %vm351, %v1253, 0
    %v1266 = vsel %vm351, %v1255, 0
    %1268 = vmatpush.xpose.msra.mxu0 0.0
    %1269 = vmatpush.xpose.msra.mxu0 0.0
    %1270 = vmatpush.xpose.msra.mxu0 0.0
    %1271 = vmatpush.xpose.msra.mxu0 0.0
    %1272 = vmatpush.xpose.msra.mxu0 0.0
    %1273 = vmatpush.xpose.msra.mxu0 0.0
    %1274 = vmatpush.xpose.msra.mxu0 0.0
    %1275 = vmatpush.xpose.msra.mxu0 0.0
    %1276 = vmatpush.xpose.msra.mxu0 0.0
    %1277 = vmatpush.xpose.msra.mxu0 0.0
    %1278 = vmatpush.xpose.msra.mxu0 0.0
    %1279 = vmatpush.xpose.msra.mxu0 0.0
    %1280 = vmatpush.xpose.msra.mxu0 0.0
    %1281 = vmatpush.xpose.msra.mxu0 %v1266
    %1282 = vmatpush.xpose.msra.mxu0 %v1264
    %1283 = vmatpush.xpose.msra.mxu0 %v1262
    %1284 = vmatmul.f32.gmra.mxu0 %v1256
    %v1285 = vpop.f32.mrf.mxu0
    %v1286 = vadd.f32 0.0, %v1285
    %1287 = vmatmul.f32.gmra.mxu0 %v1258
    %v1288 = vpop.f32.mrf.mxu0
    %v1289 = vadd.f32 0.0, %v1288
    %1290 = vmatmul.f32.gmra.mxu0 %v1260
    %v1291 = vpop.f32.mrf.mxu0
    %v1292 = vadd.f32 0.0, %v1291
    %1293 = vdwg.mxu0
    %v1294 = vmul.f32 %v1286, 0.35355338
    %v1295 = vmul.f32 %v1289, 0.35355338
    %v1296 = vmul.f32 %v1292, 0.35355338
    %v1297 = vadd.f32 %v1294, %v101
    %v1298 = vadd.f32 %v1295, %v101
    %v1299 = vadd.f32 %v1296, %v101
    %v1300 = vsel %vm396, %v1297, -inf
    %1301 = vmax.xlane.f32.xlu0 %v1300
    %v1302 = vpop.xlane.xlu0 %1301
    %v1303 = vsel %vm396, %v1298, -inf
    %1304 = vmax.xlane.f32.xlu0 %v1303
    %v1305 = vpop.xlane.xlu0 %1304
    %v1306 = vsel %vm396, %v1299, -inf
    %1307 = vmax.xlane.f32.xlu0 %v1306
    %v1308 = vpop.xlane.xlu0 %1307
    %v1309 = vsub.f32 %v1297, %v1302
    %v1310 = vsub.f32 %v1298, %v1305
    %v1311 = vsub.f32 %v1299, %v1308
    %v1312 = vmul.f32 %v1309, 1.442695
    %v1313 = vpow.pop %v1312
    %v1314 = vmul.f32 %v1310, 1.442695
    %v1315 = vpow.pop %v1314
    %v1316 = vmul.f32 %v1311, 1.442695
    %v1317 = vpow.pop %v1316
    %v1318 = vsel %vm396, %v1313, 0.0
    %1319 = vadd.xlane.f32.xlu0 %v1318
    %v1320 = vpop.xlane.xlu0 %1319
    %v1321 = vsel %vm396, %v1315, 0.0
    %1322 = vadd.xlane.f32.xlu0 %v1321
    %v1323 = vpop.xlane.xlu0 %1322
    %v1324 = vsel %vm396, %v1317, 0.0
    %1325 = vadd.xlane.f32.xlu0 %v1324
    %v1326 = vpop.xlane.xlu0 %1325
    %v1327 = vrcp.pop %v1320
    %v1328 = vmul.f32 %v1320, %v1327
    %v1329 = vsub.f32 1.0, %v1328
    %v1330 = vmul.f32 %v1327, %v1329
    %v1331 = vadd.f32 %v1327, %v1330
    %vm1332 = vweird.f32 %v1320
    %vm1333 = vweird.f32 %v1327
    %vm1334 = vmor %vm1332, %vm1333
    %v1335 = vsel %vm1334, %v1327, %v1331
    %v1336 = vand.u32 2147483647, %v1320
    %vm1337 = vcmp.eq.f32.partialorder %v1336, 8.507059e+37
    %v1338 = vand.u32 %v1320, 2147483648
    %v1339 = vor.u32 1.1754944e-38, %v1338
    %v1340 = vsel %vm1337, %v1339, %v1335
    %v1341 = vmul.f32 %v1313, %v1340
    %v1342 = vrcp.pop %v1323
    %v1343 = vmul.f32 %v1323, %v1342
    %v1344 = vsub.f32 1.0, %v1343
    %v1345 = vmul.f32 %v1342, %v1344
    %v1346 = vadd.f32 %v1342, %v1345
    %vm1347 = vweird.f32 %v1323
    %vm1348 = vweird.f32 %v1342
    %vm1349 = vmor %vm1347, %vm1348
    %v1350 = vsel %vm1349, %v1342, %v1346
    %v1351 = vand.u32 2147483647, %v1323
    %vm1352 = vcmp.eq.f32.partialorder %v1351, 8.507059e+37
    %v1353 = vand.u32 %v1323, 2147483648
    %v1354 = vor.u32 1.1754944e-38, %v1353
    %v1355 = vsel %vm1352, %v1354, %v1350
    %v1356 = vmul.f32 %v1315, %v1355
    %v1357 = vrcp.pop %v1326
    %v1358 = vmul.f32 %v1326, %v1357
    %v1359 = vsub.f32 1.0, %v1358
    %v1360 = vmul.f32 %v1357, %v1359
    %v1361 = vadd.f32 %v1357, %v1360
    %vm1362 = vweird.f32 %v1326
    %vm1363 = vweird.f32 %v1357
    %vm1364 = vmor %vm1362, %vm1363
    %v1365 = vsel %vm1364, %v1357, %v1361
    %v1366 = vand.u32 2147483647, %v1326
    %vm1367 = vcmp.eq.f32.partialorder %v1366, 8.507059e+37
    %v1368 = vand.u32 %v1326, 2147483648
    %v1369 = vor.u32 1.1754944e-38, %v1368
    %v1370 = vsel %vm1367, %v1369, %v1365
    %v1371 = vmul.f32 %v1317, %v1370
    %1372 = vrot.lane.b32.xlu0 %v334, 56
    %v1373 = vpop.permute.xlu0 %1372
    %1374 = vrot.lane.b32.xlu0 %v337, 56
    %v1375 = vpop.permute.xlu0 %1374
    %1376 = vrot.lane.b32.xlu0 %v340, 56
    %v1377 = vpop.permute.xlu0 %1376
    %v1382 = vsel %vm396, %v1341, 0
    %v1385 = vsel %vm396, %v1356, 0
    %v1388 = vsel %vm396, %v1371, 0
    %1390 = vmatpush.msra.mxu0 0.0
    %1391 = vmatpush.msra.mxu0 0.0
    %1392 = vmatpush.msra.mxu0 0.0
    %1393 = vmatpush.msra.mxu0 0.0
    %1394 = vmatpush.msra.mxu0 0.0
    %1395 = vmatpush.msra.mxu0 0.0
    %1396 = vmatpush.msra.mxu0 0.0
    %1397 = vmatpush.msra.mxu0 0.0
    %1398 = vmatpush.msra.mxu0 0.0
    %1399 = vmatpush.msra.mxu0 0.0
    %1400 = vmatpush.msra.mxu0 0.0
    %1401 = vmatpush.msra.mxu0 0.0
    %1402 = vmatpush.msra.mxu0 0.0
    %1403 = vmatpush.msra.mxu0 %v1377
    %1404 = vmatpush.msra.mxu0 %v1375
    %1405 = vmatpush.msra.mxu0 %v1373
    %1406 = vmatmul.f32.gmra.mxu0 %v1382
    %v1407 = vpop.f32.mrf.mxu0
    %v1408 = vadd.f32 0.0, %v1407
    %1409 = vmatmul.f32.gmra.mxu0 %v1385
    %v1410 = vpop.f32.mrf.mxu0
    %v1411 = vadd.f32 0.0, %v1410
    %1412 = vmatmul.f32.gmra.mxu0 %v1388
    %v1413 = vpop.f32.mrf.mxu0
    %v1414 = vadd.f32 0.0, %v1413
    %1415 = vdwg.mxu0
    %1416 = vrot.lane.b32.xlu0 %v334, 112
    %v1417 = vpop.permute.xlu0 %1416
    %1418 = vrot.lane.b32.xlu0 %v337, 112
    %v1419 = vpop.permute.xlu0 %1418
    %1420 = vrot.lane.b32.xlu0 %v340, 112
    %v1421 = vpop.permute.xlu0 %1420
    %1422 = vrot.lane.b32.xlu0 %v334, 80
    %v1423 = vpop.permute.xlu0 %1422
    %1424 = vrot.lane.b32.xlu0 %v337, 80
    %v1425 = vpop.permute.xlu0 %1424
    %1426 = vrot.lane.b32.xlu0 %v340, 80
    %v1427 = vpop.permute.xlu0 %1426
    %v1428 = vsel %vm351, %v1417, 0
    %v1430 = vsel %vm351, %v1419, 0
    %v1432 = vsel %vm351, %v1421, 0
    %v1434 = vsel %vm351, %v1423, 0
    %v1436 = vsel %vm351, %v1425, 0
    %v1438 = vsel %vm351, %v1427, 0
    %1440 = vmatpush.xpose.msra.mxu0 0.0
    %1441 = vmatpush.xpose.msra.mxu0 0.0
    %1442 = vmatpush.xpose.msra.mxu0 0.0
    %1443 = vmatpush.xpose.msra.mxu0 0.0
    %1444 = vmatpush.xpose.msra.mxu0 0.0
    %1445 = vmatpush.xpose.msra.mxu0 0.0
    %1446 = vmatpush.xpose.msra.mxu0 0.0
    %1447 = vmatpush.xpose.msra.mxu0 0.0
    %1448 = vmatpush.xpose.msra.mxu0 0.0
    %1449 = vmatpush.xpose.msra.mxu0 0.0
    %1450 = vmatpush.xpose.msra.mxu0 0.0
    %1451 = vmatpush.xpose.msra.mxu0 0.0
    %1452 = vmatpush.xpose.msra.mxu0 0.0
    %1453 = vmatpush.xpose.msra.mxu0 %v1438
    %1454 = vmatpush.xpose.msra.mxu0 %v1436
    %1455 = vmatpush.xpose.msra.mxu0 %v1434
    %1456 = vmatmul.f32.gmra.mxu0 %v1428
    %v1457 = vpop.f32.mrf.mxu0
    %v1458 = vadd.f32 0.0, %v1457
    %1459 = vmatmul.f32.gmra.mxu0 %v1430
    %v1460 = vpop.f32.mrf.mxu0
    %v1461 = vadd.f32 0.0, %v1460
    %1462 = vmatmul.f32.gmra.mxu0 %v1432
    %v1463 = vpop.f32.mrf.mxu0
    %v1464 = vadd.f32 0.0, %v1463
    %1465 = vdwg.mxu0
    %v1466 = vmul.f32 %v1458, 0.35355338
    %v1467 = vmul.f32 %v1461, 0.35355338
    %v1468 = vmul.f32 %v1464, 0.35355338
    %v1469 = vadd.f32 %v1466, %v101
    %v1470 = vadd.f32 %v1467, %v101
    %v1471 = vadd.f32 %v1468, %v101
    %v1472 = vsel %vm396, %v1469, -inf
    %1473 = vmax.xlane.f32.xlu0 %v1472
    %v1474 = vpop.xlane.xlu0 %1473
    %v1475 = vsel %vm396, %v1470, -inf
    %1476 = vmax.xlane.f32.xlu0 %v1475
    %v1477 = vpop.xlane.xlu0 %1476
    %v1478 = vsel %vm396, %v1471, -inf
    %1479 = vmax.xlane.f32.xlu0 %v1478
    %v1480 = vpop.xlane.xlu0 %1479
    %v1481 = vsub.f32 %v1469, %v1474
    %v1482 = vsub.f32 %v1470, %v1477
    %v1483 = vsub.f32 %v1471, %v1480
    %v1484 = vmul.f32 %v1481, 1.442695
    %v1485 = vpow.pop %v1484
    %v1486 = vmul.f32 %v1482, 1.442695
    %v1487 = vpow.pop %v1486
    %v1488 = vmul.f32 %v1483, 1.442695
    %v1489 = vpow.pop %v1488
    %v1490 = vsel %vm396, %v1485, 0.0
    %1491 = vadd.xlane.f32.xlu0 %v1490
    %v1492 = vpop.xlane.xlu0 %1491
    %v1493 = vsel %vm396, %v1487, 0.0
    %1494 = vadd.xlane.f32.xlu0 %v1493
    %v1495 = vpop.xlane.xlu0 %1494
    %v1496 = vsel %vm396, %v1489, 0.0
    %1497 = vadd.xlane.f32.xlu0 %v1496
    %v1498 = vpop.xlane.xlu0 %1497
    %v1499 = vrcp.pop %v1492
    %v1500 = vmul.f32 %v1492, %v1499
    %v1501 = vsub.f32 1.0, %v1500
    %v1502 = vmul.f32 %v1499, %v1501
    %v1503 = vadd.f32 %v1499, %v1502
    %vm1504 = vweird.f32 %v1492
    %vm1505 = vweird.f32 %v1499
    %vm1506 = vmor %vm1504, %vm1505
    %v1507 = vsel %vm1506, %v1499, %v1503
    %v1508 = vand.u32 2147483647, %v1492
    %vm1509 = vcmp.eq.f32.partialorder %v1508, 8.507059e+37
    %v1510 = vand.u32 %v1492, 2147483648
    %v1511 = vor.u32 1.1754944e-38, %v1510
    %v1512 = vsel %vm1509, %v1511, %v1507
    %v1513 = vmul.f32 %v1485, %v1512
    %v1514 = vrcp.pop %v1495
    %v1515 = vmul.f32 %v1495, %v1514
    %v1516 = vsub.f32 1.0, %v1515
    %v1517 = vmul.f32 %v1514, %v1516
    %v1518 = vadd.f32 %v1514, %v1517
    %vm1519 = vweird.f32 %v1495
    %vm1520 = vweird.f32 %v1514
    %vm1521 = vmor %vm1519, %vm1520
    %v1522 = vsel %vm1521, %v1514, %v1518
    %v1523 = vand.u32 2147483647, %v1495
    %vm1524 = vcmp.eq.f32.partialorder %v1523, 8.507059e+37
    %v1525 = vand.u32 %v1495, 2147483648
    %v1526 = vor.u32 1.1754944e-38, %v1525
    %v1527 = vsel %vm1524, %v1526, %v1522
    %v1528 = vmul.f32 %v1487, %v1527
    %v1529 = vrcp.pop %v1498
    %v1530 = vmul.f32 %v1498, %v1529
    %v1531 = vsub.f32 1.0, %v1530
    %v1532 = vmul.f32 %v1529, %v1531
    %v1533 = vadd.f32 %v1529, %v1532
    %vm1534 = vweird.f32 %v1498
    %vm1535 = vweird.f32 %v1529
    %vm1536 = vmor %vm1534, %vm1535
    %v1537 = vsel %vm1536, %v1529, %v1533
    %v1538 = vand.u32 2147483647, %v1498
    %vm1539 = vcmp.eq.f32.partialorder %v1538, 8.507059e+37
    %v1540 = vand.u32 %v1498, 2147483648
    %v1541 = vor.u32 1.1754944e-38, %v1540
    %v1542 = vsel %vm1539, %v1541, %v1537
    %v1543 = vmul.f32 %v1489, %v1542
    %1544 = vrot.lane.b32.xlu0 %v334, 48
    %v1545 = vpop.permute.xlu0 %1544
    %1546 = vrot.lane.b32.xlu0 %v337, 48
    %v1547 = vpop.permute.xlu0 %1546
    %1548 = vrot.lane.b32.xlu0 %v340, 48
    %v1549 = vpop.permute.xlu0 %1548
    %v1554 = vsel %vm396, %v1513, 0
    %v1557 = vsel %vm396, %v1528, 0
    %v1560 = vsel %vm396, %v1543, 0
    %1562 = vmatpush.msra.mxu0 0.0
    %1563 = vmatpush.msra.mxu0 0.0
    %1564 = vmatpush.msra.mxu0 0.0
    %1565 = vmatpush.msra.mxu0 0.0
    %1566 = vmatpush.msra.mxu0 0.0
    %1567 = vmatpush.msra.mxu0 0.0
    %1568 = vmatpush.msra.mxu0 0.0
    %1569 = vmatpush.msra.mxu0 0.0
    %1570 = vmatpush.msra.mxu0 0.0
    %1571 = vmatpush.msra.mxu0 0.0
    %1572 = vmatpush.msra.mxu0 0.0
    %1573 = vmatpush.msra.mxu0 0.0
    %1574 = vmatpush.msra.mxu0 0.0
    %1575 = vmatpush.msra.mxu0 %v1549
    %1576 = vmatpush.msra.mxu0 %v1547
    %1577 = vmatpush.msra.mxu0 %v1545
    %1578 = vmatmul.f32.gmra.mxu0 %v1554
    %v1579 = vpop.f32.mrf.mxu0
    %v1580 = vadd.f32 0.0, %v1579
    %1581 = vmatmul.f32.gmra.mxu0 %v1557
    %v1582 = vpop.f32.mrf.mxu0
    %v1583 = vadd.f32 0.0, %v1582
    %1584 = vmatmul.f32.gmra.mxu0 %v1560
    %v1585 = vpop.f32.mrf.mxu0
    %v1586 = vadd.f32 0.0, %v1585
    %1587 = vdwg.mxu0
    %1588 = vrot.lane.b32.xlu0 %v334, 104
    %v1589 = vpop.permute.xlu0 %1588
    %1590 = vrot.lane.b32.xlu0 %v337, 104
    %v1591 = vpop.permute.xlu0 %1590
    %1592 = vrot.lane.b32.xlu0 %v340, 104
    %v1593 = vpop.permute.xlu0 %1592
    %1594 = vrot.lane.b32.xlu0 %v334, 72
    %v1595 = vpop.permute.xlu0 %1594
    %1596 = vrot.lane.b32.xlu0 %v337, 72
    %v1597 = vpop.permute.xlu0 %1596
    %1598 = vrot.lane.b32.xlu0 %v340, 72
    %v1599 = vpop.permute.xlu0 %1598
    %v1600 = vsel %vm351, %v1589, 0
    %v1602 = vsel %vm351, %v1591, 0
    %v1604 = vsel %vm351, %v1593, 0
    %v1606 = vsel %vm351, %v1595, 0
    %v1608 = vsel %vm351, %v1597, 0
    %v1610 = vsel %vm351, %v1599, 0
    %1612 = vmatpush.xpose.msra.mxu0 0.0
    %1613 = vmatpush.xpose.msra.mxu0 0.0
    %1614 = vmatpush.xpose.msra.mxu0 0.0
    %1615 = vmatpush.xpose.msra.mxu0 0.0
    %1616 = vmatpush.xpose.msra.mxu0 0.0
    %1617 = vmatpush.xpose.msra.mxu0 0.0
    %1618 = vmatpush.xpose.msra.mxu0 0.0
    %1619 = vmatpush.xpose.msra.mxu0 0.0
    %1620 = vmatpush.xpose.msra.mxu0 0.0
    %1621 = vmatpush.xpose.msra.mxu0 0.0
    %1622 = vmatpush.xpose.msra.mxu0 0.0
    %1623 = vmatpush.xpose.msra.mxu0 0.0
    %1624 = vmatpush.xpose.msra.mxu0 0.0
    %1625 = vmatpush.xpose.msra.mxu0 %v1610
    %1626 = vmatpush.xpose.msra.mxu0 %v1608
    %1627 = vmatpush.xpose.msra.mxu0 %v1606
    %1628 = vmatmul.f32.gmra.mxu0 %v1600
    %v1629 = vpop.f32.mrf.mxu0
    %v1630 = vadd.f32 0.0, %v1629
    %1631 = vmatmul.f32.gmra.mxu0 %v1602
    %v1632 = vpop.f32.mrf.mxu0
    %v1633 = vadd.f32 0.0, %v1632
    %1634 = vmatmul.f32.gmra.mxu0 %v1604
    %v1635 = vpop.f32.mrf.mxu0
    %v1636 = vadd.f32 0.0, %v1635
    %1637 = vdwg.mxu0
    %v1638 = vmul.f32 %v1630, 0.35355338
    %v1639 = vmul.f32 %v1633, 0.35355338
    %v1640 = vmul.f32 %v1636, 0.35355338
    %v1641 = vadd.f32 %v1638, %v101
    %v1642 = vadd.f32 %v1639, %v101
    %v1643 = vadd.f32 %v1640, %v101
    %v1644 = vsel %vm396, %v1641, -inf
    %1645 = vmax.xlane.f32.xlu0 %v1644
    %v1646 = vpop.xlane.xlu0 %1645
    %v1647 = vsel %vm396, %v1642, -inf
    %1648 = vmax.xlane.f32.xlu0 %v1647
    %v1649 = vpop.xlane.xlu0 %1648
    %v1650 = vsel %vm396, %v1643, -inf
    %1651 = vmax.xlane.f32.xlu0 %v1650
    %v1652 = vpop.xlane.xlu0 %1651
    %v1653 = vsub.f32 %v1641, %v1646
    %v1654 = vsub.f32 %v1642, %v1649
    %v1655 = vsub.f32 %v1643, %v1652
    %v1656 = vmul.f32 %v1653, 1.442695
    %v1657 = vpow.pop %v1656
    %v1658 = vmul.f32 %v1654, 1.442695
    %v1659 = vpow.pop %v1658
    %v1660 = vmul.f32 %v1655, 1.442695
    %v1661 = vpow.pop %v1660
    %v1662 = vsel %vm396, %v1657, 0.0
    %1663 = vadd.xlane.f32.xlu0 %v1662
    %v1664 = vpop.xlane.xlu0 %1663
    %v1665 = vsel %vm396, %v1659, 0.0
    %1666 = vadd.xlane.f32.xlu0 %v1665
    %v1667 = vpop.xlane.xlu0 %1666
    %v1668 = vsel %vm396, %v1661, 0.0
    %1669 = vadd.xlane.f32.xlu0 %v1668
    %v1670 = vpop.xlane.xlu0 %1669
    %v1671 = vrcp.pop %v1664
    %v1672 = vmul.f32 %v1664, %v1671
    %v1673 = vsub.f32 1.0, %v1672
    %v1674 = vmul.f32 %v1671, %v1673
    %v1675 = vadd.f32 %v1671, %v1674
    %vm1676 = vweird.f32 %v1664
    %vm1677 = vweird.f32 %v1671
    %vm1678 = vmor %vm1676, %vm1677
    %v1679 = vsel %vm1678, %v1671, %v1675
    %v1680 = vand.u32 2147483647, %v1664
    %vm1681 = vcmp.eq.f32.partialorder %v1680, 8.507059e+37
    %v1682 = vand.u32 %v1664, 2147483648
    %v1683 = vor.u32 1.1754944e-38, %v1682
    %v1684 = vsel %vm1681, %v1683, %v1679
    %v1685 = vmul.f32 %v1657, %v1684
    %v1686 = vrcp.pop %v1667
    %v1687 = vmul.f32 %v1667, %v1686
    %v1688 = vsub.f32 1.0, %v1687
    %v1689 = vmul.f32 %v1686, %v1688
    %v1690 = vadd.f32 %v1686, %v1689
    %vm1691 = vweird.f32 %v1667
    %vm1692 = vweird.f32 %v1686
    %vm1693 = vmor %vm1691, %vm1692
    %v1694 = vsel %vm1693, %v1686, %v1690
    %v1695 = vand.u32 2147483647, %v1667
    %vm1696 = vcmp.eq.f32.partialorder %v1695, 8.507059e+37
    %v1697 = vand.u32 %v1667, 2147483648
    %v1698 = vor.u32 1.1754944e-38, %v1697
    %v1699 = vsel %vm1696, %v1698, %v1694
    %v1700 = vmul.f32 %v1659, %v1699
    %v1701 = vrcp.pop %v1670
    %v1702 = vmul.f32 %v1670, %v1701
    %v1703 = vsub.f32 1.0, %v1702
    %v1704 = vmul.f32 %v1701, %v1703
    %v1705 = vadd.f32 %v1701, %v1704
    %vm1706 = vweird.f32 %v1670
    %vm1707 = vweird.f32 %v1701
    %vm1708 = vmor %vm1706, %vm1707
    %v1709 = vsel %vm1708, %v1701, %v1705
    %v1710 = vand.u32 2147483647, %v1670
    %vm1711 = vcmp.eq.f32.partialorder %v1710, 8.507059e+37
    %v1712 = vand.u32 %v1670, 2147483648
    %v1713 = vor.u32 1.1754944e-38, %v1712
    %v1714 = vsel %vm1711, %v1713, %v1709
    %v1715 = vmul.f32 %v1661, %v1714
    %1716 = vrot.lane.b32.xlu0 %v334, 40
    %v1717 = vpop.permute.xlu0 %1716
    %1718 = vrot.lane.b32.xlu0 %v337, 40
    %v1719 = vpop.permute.xlu0 %1718
    %1720 = vrot.lane.b32.xlu0 %v340, 40
    %v1721 = vpop.permute.xlu0 %1720
    %v1726 = vsel %vm396, %v1685, 0
    %v1729 = vsel %vm396, %v1700, 0
    %v1732 = vsel %vm396, %v1715, 0
    %1734 = vmatpush.msra.mxu0 0.0
    %1735 = vmatpush.msra.mxu0 0.0
    %1736 = vmatpush.msra.mxu0 0.0
    %1737 = vmatpush.msra.mxu0 0.0
    %1738 = vmatpush.msra.mxu0 0.0
    %1739 = vmatpush.msra.mxu0 0.0
    %1740 = vmatpush.msra.mxu0 0.0
    %1741 = vmatpush.msra.mxu0 0.0
    %1742 = vmatpush.msra.mxu0 0.0
    %1743 = vmatpush.msra.mxu0 0.0
    %1744 = vmatpush.msra.mxu0 0.0
    %1745 = vmatpush.msra.mxu0 0.0
    %1746 = vmatpush.msra.mxu0 0.0
    %1747 = vmatpush.msra.mxu0 %v1721
    %1748 = vmatpush.msra.mxu0 %v1719
    %1749 = vmatpush.msra.mxu0 %v1717
    %1750 = vmatmul.f32.gmra.mxu0 %v1726
    %v1751 = vpop.f32.mrf.mxu0
    %v1752 = vadd.f32 0.0, %v1751
    %1753 = vmatmul.f32.gmra.mxu0 %v1729
    %v1754 = vpop.f32.mrf.mxu0
    %v1755 = vadd.f32 0.0, %v1754
    %1756 = vmatmul.f32.gmra.mxu0 %v1732
    %v1757 = vpop.f32.mrf.mxu0
    %v1758 = vadd.f32 0.0, %v1757
    %1759 = vdwg.mxu0
    %1763 = vrot.lane.b32.xlu0 %v1408, 8
    %v1764 = vpop.permute.xlu0 %1763
    %1765 = vrot.lane.b32.xlu0 %v1411, 8
    %v1766 = vpop.permute.xlu0 %1765
    %1767 = vrot.lane.b32.xlu0 %v1414, 8
    %v1768 = vpop.permute.xlu0 %1767
    %1775 = vrot.lane.b32.xlu0 %v1580, 16
    %v1776 = vpop.permute.xlu0 %1775
    %1777 = vrot.lane.b32.xlu0 %v1583, 16
    %v1778 = vpop.permute.xlu0 %1777
    %1779 = vrot.lane.b32.xlu0 %v1586, 16
    %v1780 = vpop.permute.xlu0 %1779
    %1787 = vrot.lane.b32.xlu0 %v1752, 24
    %v1788 = vpop.permute.xlu0 %1787
    %1789 = vrot.lane.b32.xlu0 %v1755, 24
    %v1790 = vpop.permute.xlu0 %1789
    %1791 = vrot.lane.b32.xlu0 %v1758, 24
    %v1792 = vpop.permute.xlu0 %1791
    %v1796 = vsel %vm351, %v1236, %v1764
    %v1797 = vsel %vm351, %v1239, %v1766
    %v1798 = vsel %vm351, %v1242, %v1768
    %v1799 = vsel %vm1068, %v1796, %v1776
    %v1800 = vsel %vm1068, %v1797, %v1778
    %v1801 = vsel %vm1068, %v1798, %v1780
    %v1802 = vsel %vm396, %v1799, %v1788
    %v1803 = vsel %vm396, %v1800, %v1790
    %v1804 = vsel %vm396, %v1801, %v1792
    %v1805 = vperm.slane %v107, 0
    %1810 = vrot.lane.b32.xlu0 %v110, 32
    %v1811 = vpop.permute.xlu0 %1810
    %1812 = vrot.lane.b32.xlu0 %v111, 32
    %v1813 = vpop.permute.xlu0 %1812
    %1814 = vrot.lane.b32.xlu0 %v112, 32
    %v1815 = vpop.permute.xlu0 %1814
    %1816 = vrot.lane.b32.xlu0 %v113, 32
    %v1817 = vpop.permute.xlu0 %1816
    %v1823 = vsel %vm134, %v1072, 0
    %v1826 = vsel %vm134, %v1073, 0
    %v1829 = vsel %vm134, %v1074, 0
    %v1832 = vsel %vm134, %v1802, 0
    %v1835 = vsel %vm134, %v1803, 0
    %v1838 = vsel %vm134, %v1804, 0
    %1840 = vmatpush.msra.mxu0 0.0
    %1841 = vmatpush.msra.mxu0 0.0
    %1842 = vmatpush.msra.mxu0 0.0
    %1843 = vmatpush.msra.mxu0 0.0
    %1844 = vmatpush.msra.mxu0 0.0
    %1845 = vmatpush.msra.mxu0 0.0
    %1846 = vmatpush.msra.mxu0 0.0
    %1847 = vmatpush.msra.mxu0 0.0
    %1848 = vmatpush.msra.mxu0 0.0
    %1849 = vmatpush.msra.mxu0 0.0
    %1850 = vmatpush.msra.mxu0 0.0
    %1851 = vmatpush.msra.mxu0 0.0
    %1852 = vmatpush.msra.mxu0 %v1817
    %1853 = vmatpush.msra.mxu0 %v1815
    %1854 = vmatpush.msra.mxu0 %v1813
    %1855 = vmatpush.msra.mxu0 %v1811
    %1856 = vmatmul.f32.gmra.mxu0 %v1823
    %v1857 = vpop.f32.mrf.mxu0
    %v1858 = vadd.f32 %v1805, %v1857
    %1859 = vmatmul.f32.gmra.mxu0 %v1826
    %v1860 = vpop.f32.mrf.mxu0
    %v1861 = vadd.f32 %v1805, %v1860
    %1862 = vmatmul.f32.gmra.mxu0 %v1829
    %v1863 = vpop.f32.mrf.mxu0
    %v1864 = vadd.f32 %v1805, %v1863
    %1865 = vmatmul.f32.gmra.mxu0 %v1832
    %v1866 = vpop.f32.mrf.mxu0
    %v1867 = vadd.f32 %v1805, %v1866
    %1868 = vmatmul.f32.gmra.mxu0 %v1835
    %v1869 = vpop.f32.mrf.mxu0
    %v1870 = vadd.f32 %v1805, %v1869
    %1871 = vmatmul.f32.gmra.mxu0 %v1838
    %v1872 = vpop.f32.mrf.mxu0
    %v1873 = vadd.f32 %v1805, %v1872
    %1874 = vdwg.mxu0
    %v1875 = vadd.f32 %v81, %v1858
    %v1876 = vadd.f32 %v84, %v1861
    %v1877 = vadd.f32 %v87, %v1864
    %v1878 = vadd.f32 %v90, %v1867
    %v1879 = vadd.f32 %v93, %v1870
    %v1880 = vadd.f32 %v96, %v1873
    %v1881 = vsel %vm134, %v1875, 0.0
    %1882 = vadd.xlane.f32.xlu0 %v1881
    %v1883 = vpop.xlane.xlu0 %1882
    %v1884 = vsel %vm134, %v1876, 0.0
    %1885 = vadd.xlane.f32.xlu0 %v1884
    %v1886 = vpop.xlane.xlu0 %1885
    %v1887 = vsel %vm134, %v1877, 0.0
    %1888 = vadd.xlane.f32.xlu0 %v1887
    %v1889 = vpop.xlane.xlu0 %1888
    %v1890 = vsel %vm134, %v1878, 0.0
    %1891 = vadd.xlane.f32.xlu0 %v1890
    %v1892 = vpop.xlane.xlu0 %1891
    %v1893 = vsel %vm134, %v1879, 0.0
    %1894 = vadd.xlane.f32.xlu0 %v1893
    %v1895 = vpop.xlane.xlu0 %1894
    %v1896 = vsel %vm134, %v1880, 0.0
    %1897 = vadd.xlane.f32.xlu0 %v1896
    %v1898 = vpop.xlane.xlu0 %1897
    %v1899 = vmul.f32 %v1883, %v159
    %v1900 = vmul.f32 %v1886, %v159
    %v1901 = vmul.f32 %v1889, %v159
    %v1902 = vmul.f32 %v1892, %v159
    %v1903 = vmul.f32 %v1895, %v159
    %v1904 = vmul.f32 %v1898, %v159
    %v1905 = vsub.f32 %v1875, %v1899
    %v1906 = vsub.f32 %v1876, %v1900
    %v1907 = vsub.f32 %v1877, %v1901
    %v1908 = vsub.f32 %v1878, %v1902
    %v1909 = vsub.f32 %v1879, %v1903
    %v1910 = vsub.f32 %v1880, %v1904
    %v1911 = vmul.f32 %v1905, %v1905
    %v1912 = vmul.f32 %v1906, %v1906
    %v1913 = vmul.f32 %v1907, %v1907
    %v1914 = vmul.f32 %v1908, %v1908
    %v1915 = vmul.f32 %v1909, %v1909
    %v1916 = vmul.f32 %v1910, %v1910
    %v1917 = vsel %vm134, %v1911, 0.0
    %1918 = vadd.xlane.f32.xlu0 %v1917
    %v1919 = vpop.xlane.xlu0 %1918
    %v1920 = vsel %vm134, %v1912, 0.0
    %1921 = vadd.xlane.f32.xlu0 %v1920
    %v1922 = vpop.xlane.xlu0 %1921
    %v1923 = vsel %vm134, %v1913, 0.0
    %1924 = vadd.xlane.f32.xlu0 %v1923
    %v1925 = vpop.xlane.xlu0 %1924
    %v1926 = vsel %vm134, %v1914, 0.0
    %1927 = vadd.xlane.f32.xlu0 %v1926
    %v1928 = vpop.xlane.xlu0 %1927
    %v1929 = vsel %vm134, %v1915, 0.0
    %1930 = vadd.xlane.f32.xlu0 %v1929
    %v1931 = vpop.xlane.xlu0 %1930
    %v1932 = vsel %vm134, %v1916, 0.0
    %1933 = vadd.xlane.f32.xlu0 %v1932
    %v1934 = vpop.xlane.xlu0 %1933
    %v1935 = vmul.f32 %v1919, %v159
    %v1936 = vmul.f32 %v1922, %v159
    %v1937 = vmul.f32 %v1925, %v159
    %v1938 = vmul.f32 %v1928, %v159
    %v1939 = vmul.f32 %v1931, %v159
    %v1940 = vmul.f32 %v1934, %v159
    %v1941 = vadd.f32 %v1935, 1e-06
    %v1942 = vadd.f32 %v1936, 1e-06
    %v1943 = vadd.f32 %v1937, 1e-06
    %v1944 = vadd.f32 %v1938, 1e-06
    %v1945 = vadd.f32 %v1939, 1e-06
    %v1946 = vadd.f32 %v1940, 1e-06
    %v1947 = vrsqrt.pop %v1941
    %v1948 = vmul.f32 %v1947, %v1941
    %v1949 = vmul.f32 %v1948, %v1947
    %v1950 = vmul.f32 0.5, %v1949
    %v1951 = vsub.f32 1.5, %v1950
    %v1952 = vmul.f32 %v1947, %v1951
    %vm1953 = vweird.f32 %v1941
    %vm1954 = vweird.f32 %v1947
    %vm1955 = vmor %vm1953, %vm1954
    %v1956 = vsel %vm1955, %v1947, %v1952
    %v1957 = vrsqrt.pop %v1942
    %v1958 = vmul.f32 %v1957, %v1942
    %v1959 = vmul.f32 %v1958, %v1957
    %v1960 = vmul.f32 0.5, %v1959
    %v1961 = vsub.f32 1.5, %v1960
    %v1962 = vmul.f32 %v1957, %v1961
    %vm1963 = vweird.f32 %v1942
    %vm1964 = vweird.f32 %v1957
    %vm1965 = vmor %vm1963, %vm1964
    %v1966 = vsel %vm1965, %v1957, %v1962
    %v1967 = vrsqrt.pop %v1943
    %v1968 = vmul.f32 %v1967, %v1943
    %v1969 = vmul.f32 %v1968, %v1967
    %v1970 = vmul.f32 0.5, %v1969
    %v1971 = vsub.f32 1.5, %v1970
    %v1972 = vmul.f32 %v1967, %v1971
    %vm1973 = vweird.f32 %v1943
    %vm1974 = vweird.f32 %v1967
    %vm1975 = vmor %vm1973, %vm1974
    %v1976 = vsel %vm1975, %v1967, %v1972
    %v1977 = vrsqrt.pop %v1944
    %v1978 = vmul.f32 %v1977, %v1944
    %v1979 = vmul.f32 %v1978, %v1977
    %v1980 = vmul.f32 0.5, %v1979
    %v1981 = vsub.f32 1.5, %v1980
    %v1982 = vmul.f32 %v1977, %v1981
    %vm1983 = vweird.f32 %v1944
    %vm1984 = vweird.f32 %v1977
    %vm1985 = vmor %vm1983, %vm1984
    %v1986 = vsel %vm1985, %v1977, %v1982
    %v1987 = vrsqrt.pop %v1945
    %v1988 = vmul.f32 %v1987, %v1945
    %v1989 = vmul.f32 %v1988, %v1987
    %v1990 = vmul.f32 0.5, %v1989
    %v1991 = vsub.f32 1.5, %v1990
    %v1992 = vmul.f32 %v1987, %v1991
    %vm1993 = vweird.f32 %v1945
    %vm1994 = vweird.f32 %v1987
    %vm1995 = vmor %vm1993, %vm1994
    %v1996 = vsel %vm1995, %v1987, %v1992
    %v1997 = vrsqrt.pop %v1946
    %v1998 = vmul.f32 %v1997, %v1946
    %v1999 = vmul.f32 %v1998, %v1997
    %v2000 = vmul.f32 0.5, %v1999
    %v2001 = vsub.f32 1.5, %v2000
    %v2002 = vmul.f32 %v1997, %v2001
    %vm2003 = vweird.f32 %v1946
    %vm2004 = vweird.f32 %v1997
    %vm2005 = vmor %vm2003, %vm2004
    %v2006 = vsel %vm2005, %v1997, %v2002
    %v2007 = vmul.f32 %v1905, %v1956
    %v2008 = vmul.f32 %v1906, %v1966
    %v2009 = vmul.f32 %v1907, %v1976
    %v2010 = vmul.f32 %v1908, %v1986
    %v2011 = vmul.f32 %v1909, %v1996
    %v2012 = vmul.f32 %v1910, %v2006
    %v2013 = vperm.slane %v104, 0
    %v2014 = vmul.f32 %v2007, %v2013
    %v2015 = vmul.f32 %v2008, %v2013
    %v2016 = vmul.f32 %v2009, %v2013
    %v2017 = vmul.f32 %v2010, %v2013
    %v2018 = vmul.f32 %v2011, %v2013
    %v2019 = vmul.f32 %v2012, %v2013
    %v2020 = vperm.slane %v105, 0
    %v2021 = vadd.f32 %v2014, %v2020
    %v2022 = vadd.f32 %v2015, %v2020
    %v2023 = vadd.f32 %v2016, %v2020
    %v2024 = vadd.f32 %v2017, %v2020
    %v2025 = vadd.f32 %v2018, %v2020
    %v2026 = vadd.f32 %v2019, %v2020
    %v2027 = vperm.slane %v108, 0
    %v2029 = vsel %vm134, %v2021, 0
    %v2032 = vsel %vm134, %v2022, 0
    %v2035 = vsel %vm134, %v2023, 0
    %v2038 = vsel %vm134, %v2024, 0
    %v2041 = vsel %vm134, %v2025, 0
    %v2044 = vsel %vm134, %v2026, 0
    %2046 = vmatpush.msra.mxu0 0.0
    %2047 = vmatpush.msra.mxu0 0.0
    %2048 = vmatpush.msra.mxu0 0.0
    %2049 = vmatpush.msra.mxu0 0.0
    %2050 = vmatpush.msra.mxu0 0.0
    %2051 = vmatpush.msra.mxu0 0.0
    %2052 = vmatpush.msra.mxu0 0.0
    %2053 = vmatpush.msra.mxu0 0.0
    %2054 = vmatpush.msra.mxu0 0.0
    %2055 = vmatpush.msra.mxu0 0.0
    %2056 = vmatpush.msra.mxu0 0.0
    %2057 = vmatpush.msra.mxu0 0.0
    %2058 = vmatpush.msra.mxu0 %v117
    %2059 = vmatpush.msra.mxu0 %v116
    %2060 = vmatpush.msra.mxu0 %v115
    %2061 = vmatpush.msra.mxu0 %v114
    %2062 = vmatmul.f32.gmra.mxu0 %v2029
    %v2063 = vpop.f32.mrf.mxu0
    %v2064 = vadd.f32 %v2027, %v2063
    %2065 = vmatmul.f32.gmra.mxu0 %v2032
    %v2066 = vpop.f32.mrf.mxu0
    %v2067 = vadd.f32 %v2027, %v2066
    %2068 = vmatmul.f32.gmra.mxu0 %v2035
    %v2069 = vpop.f32.mrf.mxu0
    %v2070 = vadd.f32 %v2027, %v2069
    %2071 = vmatmul.f32.gmra.mxu0 %v2038
    %v2072 = vpop.f32.mrf.mxu0
    %v2073 = vadd.f32 %v2027, %v2072
    %2074 = vmatmul.f32.gmra.mxu0 %v2041
    %v2075 = vpop.f32.mrf.mxu0
    %v2076 = vadd.f32 %v2027, %v2075
    %2077 = vmatmul.f32.gmra.mxu0 %v2044
    %v2078 = vpop.f32.mrf.mxu0
    %v2079 = vadd.f32 %v2027, %v2078
    %2080 = vdwg.mxu0
    %v2081 = vmul.f32 %v2064, 0.5
    %v2082 = vmul.f32 %v2067, 0.5
    %v2083 = vmul.f32 %v2070, 0.5
    %v2084 = vmul.f32 %v2073, 0.5
    %v2085 = vmul.f32 %v2076, 0.5
    %v2086 = vmul.f32 %v2079, 0.5
    %v2087 = vmul.f32 %v2064, 0.70710677
    %v2088 = vmul.f32 %v2067, 0.70710677
    %v2089 = vmul.f32 %v2070, 0.70710677
    %v2090 = vmul.f32 %v2073, 0.70710677
    %v2091 = vmul.f32 %v2076, 0.70710677
    %v2092 = vmul.f32 %v2079, 0.70710677
    %v2093 = vmul.f32 %v2087, %v2087
    %v2094 = vmin.f32 16.0, %v2093
    %v2095 = vmul.f32 %v2094, 2.1237322e-06
    %v2096 = vadd.f32 %v2095, 0.00028619796
    %v2097 = vmul.f32 %v2094, %v2096
    %v2098 = vadd.f32 %v2097, 0.0036580483
    %v2099 = vmul.f32 %v2094, %v2098
    %v2100 = vadd.f32 %v2099, 0.05243302
    %v2101 = vmul.f32 %v2094, %v2100
    %v2102 = vadd.f32 %v2101, 0.18741608
    %v2103 = vmul.f32 %v2094, %v2102
    %v2104 = vadd.f32 %v2103, 1.1283791
    %v2105 = vmul.f32 %v2087, %v2104
    %v2106 = vmul.f32 %v2094, 3.8918573e-05
    %v2107 = vadd.f32 %v2106, 0.001143296
    %v2108 = vmul.f32 %v2094, %v2107
    %v2109 = vadd.f32 %v2108, 0.014752088
    %v2110 = vmul.f32 %v2094, %v2109
    %v2111 = vadd.f32 %v2110, 0.112945676
    %v2112 = vmul.f32 %v2094, %v2111
    %v2113 = vadd.f32 %v2112, 0.4994258
    %v2114 = vmul.f32 %v2094, %v2113
    %v2115 = vadd.f32 %v2114, 1.0
    %v2116 = vrcp.pop %v2115
    %v2117 = vmul.f32 %v2115, %v2116
    %v2118 = vsub.f32 1.0, %v2117
    %v2119 = vmul.f32 %v2116, %v2118
    %v2120 = vadd.f32 %v2116, %v2119
    %vm2121 = vweird.f32 %v2115
    %vm2122 = vweird.f32 %v2116
    %vm2123 = vmor %vm2121, %vm2122
    %v2124 = vsel %vm2123, %v2116, %v2120
    %v2125 = vand.u32 2147483647, %v2115
    %vm2126 = vcmp.eq.f32.partialorder %v2125, 8.507059e+37
    %v2127 = vand.u32 %v2115, 2147483648
    %v2128 = vor.u32 1.1754944e-38, %v2127
    %v2129 = vsel %vm2126, %v2128, %v2124
    %v2130 = vmul.f32 %v2105, %v2129
    %v2131 = vmin.f32 %v2130, 1.0
    %v2132 = vmax.f32 %v2131, -1.0
    %v2133 = vmul.f32 %v2088, %v2088
    %v2134 = vmin.f32 16.0, %v2133
    %v2135 = vmul.f32 %v2134, 2.1237322e-06
    %v2136 = vadd.f32 %v2135, 0.00028619796
    %v2137 = vmul.f32 %v2134, %v2136
    %v2138 = vadd.f32 %v2137, 0.0036580483
    %v2139 = vmul.f32 %v2134, %v2138
    %v2140 = vadd.f32 %v2139, 0.05243302
    %v2141 = vmul.f32 %v2134, %v2140
    %v2142 = vadd.f32 %v2141, 0.18741608
    %v2143 = vmul.f32 %v2134, %v2142
    %v2144 = vadd.f32 %v2143, 1.1283791
    %v2145 = vmul.f32 %v2088, %v2144
    %v2146 = vmul.f32 %v2134, 3.8918573e-05
    %v2147 = vadd.f32 %v2146, 0.001143296
    %v2148 = vmul.f32 %v2134, %v2147
    %v2149 = vadd.f32 %v2148, 0.014752088
    %v2150 = vmul.f32 %v2134, %v2149
    %v2151 = vadd.f32 %v2150, 0.112945676
    %v2152 = vmul.f32 %v2134, %v2151
    %v2153 = vadd.f32 %v2152, 0.4994258
    %v2154 = vmul.f32 %v2134, %v2153
    %v2155 = vadd.f32 %v2154, 1.0
    %v2156 = vrcp.pop %v2155
    %v2157 = vmul.f32 %v2155, %v2156
    %v2158 = vsub.f32 1.0, %v2157
    %v2159 = vmul.f32 %v2156, %v2158
    %v2160 = vadd.f32 %v2156, %v2159
    %vm2161 = vweird.f32 %v2155
    %vm2162 = vweird.f32 %v2156
    %vm2163 = vmor %vm2161, %vm2162
    %v2164 = vsel %vm2163, %v2156, %v2160
    %v2165 = vand.u32 2147483647, %v2155
    %vm2166 = vcmp.eq.f32.partialorder %v2165, 8.507059e+37
    %v2167 = vand.u32 %v2155, 2147483648
    %v2168 = vor.u32 1.1754944e-38, %v2167
    %v2169 = vsel %vm2166, %v2168, %v2164
    %v2170 = vmul.f32 %v2145, %v2169
    %v2171 = vmin.f32 %v2170, 1.0
    %v2172 = vmax.f32 %v2171, -1.0
    %v2173 = vmul.f32 %v2089, %v2089
    %v2174 = vmin.f32 16.0, %v2173
    %v2175 = vmul.f32 %v2174, 2.1237322e-06
    %v2176 = vadd.f32 %v2175, 0.00028619796
    %v2177 = vmul.f32 %v2174, %v2176
    %v2178 = vadd.f32 %v2177, 0.0036580483
    %v2179 = vmul.f32 %v2174, %v2178
    %v2180 = vadd.f32 %v2179, 0.05243302
    %v2181 = vmul.f32 %v2174, %v2180
    %v2182 = vadd.f32 %v2181, 0.18741608
    %v2183 = vmul.f32 %v2174, %v2182
    %v2184 = vadd.f32 %v2183, 1.1283791
    %v2185 = vmul.f32 %v2089, %v2184
    %v2186 = vmul.f32 %v2174, 3.8918573e-05
    %v2187 = vadd.f32 %v2186, 0.001143296
    %v2188 = vmul.f32 %v2174, %v2187
    %v2189 = vadd.f32 %v2188, 0.014752088
    %v2190 = vmul.f32 %v2174, %v2189
    %v2191 = vadd.f32 %v2190, 0.112945676
    %v2192 = vmul.f32 %v2174, %v2191
    %v2193 = vadd.f32 %v2192, 0.4994258
    %v2194 = vmul.f32 %v2174, %v2193
    %v2195 = vadd.f32 %v2194, 1.0
    %v2196 = vrcp.pop %v2195
    %v2197 = vmul.f32 %v2195, %v2196
    %v2198 = vsub.f32 1.0, %v2197
    %v2199 = vmul.f32 %v2196, %v2198
    %v2200 = vadd.f32 %v2196, %v2199
    %vm2201 = vweird.f32 %v2195
    %vm2202 = vweird.f32 %v2196
    %vm2203 = vmor %vm2201, %vm2202
    %v2204 = vsel %vm2203, %v2196, %v2200
    %v2205 = vand.u32 2147483647, %v2195
    %vm2206 = vcmp.eq.f32.partialorder %v2205, 8.507059e+37
    %v2207 = vand.u32 %v2195, 2147483648
    %v2208 = vor.u32 1.1754944e-38, %v2207
    %v2209 = vsel %vm2206, %v2208, %v2204
    %v2210 = vmul.f32 %v2185, %v2209
    %v2211 = vmin.f32 %v2210, 1.0
    %v2212 = vmax.f32 %v2211, -1.0
    %v2213 = vmul.f32 %v2090, %v2090
    %v2214 = vmin.f32 16.0, %v2213
    %v2215 = vmul.f32 %v2214, 2.1237322e-06
    %v2216 = vadd.f32 %v2215, 0.00028619796
    %v2217 = vmul.f32 %v2214, %v2216
    %v2218 = vadd.f32 %v2217, 0.0036580483
    %v2219 = vmul.f32 %v2214, %v2218
    %v2220 = vadd.f32 %v2219, 0.05243302
    %v2221 = vmul.f32 %v2214, %v2220
    %v2222 = vadd.f32 %v2221, 0.18741608
    %v2223 = vmul.f32 %v2214, %v2222
    %v2224 = vadd.f32 %v2223, 1.1283791
    %v2225 = vmul.f32 %v2090, %v2224
    %v2226 = vmul.f32 %v2214, 3.8918573e-05
    %v2227 = vadd.f32 %v2226, 0.001143296
    %v2228 = vmul.f32 %v2214, %v2227
    %v2229 = vadd.f32 %v2228, 0.014752088
    %v2230 = vmul.f32 %v2214, %v2229
    %v2231 = vadd.f32 %v2230, 0.112945676
    %v2232 = vmul.f32 %v2214, %v2231
    %v2233 = vadd.f32 %v2232, 0.4994258
    %v2234 = vmul.f32 %v2214, %v2233
    %v2235 = vadd.f32 %v2234, 1.0
    %v2236 = vrcp.pop %v2235
    %v2237 = vmul.f32 %v2235, %v2236
    %v2238 = vsub.f32 1.0, %v2237
    %v2239 = vmul.f32 %v2236, %v2238
    %v2240 = vadd.f32 %v2236, %v2239
    %vm2241 = vweird.f32 %v2235
    %vm2242 = vweird.f32 %v2236
    %vm2243 = vmor %vm2241, %vm2242
    %v2244 = vsel %vm2243, %v2236, %v2240
    %v2245 = vand.u32 2147483647, %v2235
    %vm2246 = vcmp.eq.f32.partialorder %v2245, 8.507059e+37
    %v2247 = vand.u32 %v2235, 2147483648
    %v2248 = vor.u32 1.1754944e-38, %v2247
    %v2249 = vsel %vm2246, %v2248, %v2244
    %v2250 = vmul.f32 %v2225, %v2249
    %v2251 = vmin.f32 %v2250, 1.0
    %v2252 = vmax.f32 %v2251, -1.0
    %v2253 = vmul.f32 %v2091, %v2091
    %v2254 = vmin.f32 16.0, %v2253
    %v2255 = vmul.f32 %v2254, 2.1237322e-06
    %v2256 = vadd.f32 %v2255, 0.00028619796
    %v2257 = vmul.f32 %v2254, %v2256
    %v2258 = vadd.f32 %v2257, 0.0036580483
    %v2259 = vmul.f32 %v2254, %v2258
    %v2260 = vadd.f32 %v2259, 0.05243302
    %v2261 = vmul.f32 %v2254, %v2260
    %v2262 = vadd.f32 %v2261, 0.18741608
    %v2263 = vmul.f32 %v2254, %v2262
    %v2264 = vadd.f32 %v2263, 1.1283791
    %v2265 = vmul.f32 %v2091, %v2264
    %v2266 = vmul.f32 %v2254, 3.8918573e-05
    %v2267 = vadd.f32 %v2266, 0.001143296
    %v2268 = vmul.f32 %v2254, %v2267
    %v2269 = vadd.f32 %v2268, 0.014752088
    %v2270 = vmul.f32 %v2254, %v2269
    %v2271 = vadd.f32 %v2270, 0.112945676
    %v2272 = vmul.f32 %v2254, %v2271
    %v2273 = vadd.f32 %v2272, 0.4994258
    %v2274 = vmul.f32 %v2254, %v2273
    %v2275 = vadd.f32 %v2274, 1.0
    %v2276 = vrcp.pop %v2275
    %v2277 = vmul.f32 %v2275, %v2276
    %v2278 = vsub.f32 1.0, %v2277
    %v2279 = vmul.f32 %v2276, %v2278
    %v2280 = vadd.f32 %v2276, %v2279
    %vm2281 = vweird.f32 %v2275
    %vm2282 = vweird.f32 %v2276
    %vm2283 = vmor %vm2281, %vm2282
    %v2284 = vsel %vm2283, %v2276, %v2280
    %v2285 = vand.u32 2147483647, %v2275
    %vm2286 = vcmp.eq.f32.partialorder %v2285, 8.507059e+37
    %v2287 = vand.u32 %v2275, 2147483648
    %v2288 = vor.u32 1.1754944e-38, %v2287
    %v2289 = vsel %vm2286, %v2288, %v2284
    %v2290 = vmul.f32 %v2265, %v2289
    %v2291 = vmin.f32 %v2290, 1.0
    %v2292 = vmax.f32 %v2291, -1.0
    %v2293 = vmul.f32 %v2092, %v2092
    %v2294 = vmin.f32 16.0, %v2293
    %v2295 = vmul.f32 %v2294, 2.1237322e-06
    %v2296 = vadd.f32 %v2295, 0.00028619796
    %v2297 = vmul.f32 %v2294, %v2296
    %v2298 = vadd.f32 %v2297, 0.0036580483
    %v2299 = vmul.f32 %v2294, %v2298
    %v2300 = vadd.f32 %v2299, 0.05243302
    %v2301 = vmul.f32 %v2294, %v2300
    %v2302 = vadd.f32 %v2301, 0.18741608
    %v2303 = vmul.f32 %v2294, %v2302
    %v2304 = vadd.f32 %v2303, 1.1283791
    %v2305 = vmul.f32 %v2092, %v2304
    %v2306 = vmul.f32 %v2294, 3.8918573e-05
    %v2307 = vadd.f32 %v2306, 0.001143296
    %v2308 = vmul.f32 %v2294, %v2307
    %v2309 = vadd.f32 %v2308, 0.014752088
    %v2310 = vmul.f32 %v2294, %v2309
    %v2311 = vadd.f32 %v2310, 0.112945676
    %v2312 = vmul.f32 %v2294, %v2311
    %v2313 = vadd.f32 %v2312, 0.4994258
    %v2314 = vmul.f32 %v2294, %v2313
    %v2315 = vadd.f32 %v2314, 1.0
    %v2316 = vrcp.pop %v2315
    %v2317 = vmul.f32 %v2315, %v2316
    %v2318 = vsub.f32 1.0, %v2317
    %v2319 = vmul.f32 %v2316, %v2318
    %v2320 = vadd.f32 %v2316, %v2319
    %vm2321 = vweird.f32 %v2315
    %vm2322 = vweird.f32 %v2316
    %vm2323 = vmor %vm2321, %vm2322
    %v2324 = vsel %vm2323, %v2316, %v2320
    %v2325 = vand.u32 2147483647, %v2315
    %vm2326 = vcmp.eq.f32.partialorder %v2325, 8.507059e+37
    %v2327 = vand.u32 %v2315, 2147483648
    %v2328 = vor.u32 1.1754944e-38, %v2327
    %v2329 = vsel %vm2326, %v2328, %v2324
    %v2330 = vmul.f32 %v2305, %v2329
    %v2331 = vmin.f32 %v2330, 1.0
    %v2332 = vmax.f32 %v2331, -1.0
    %v2333 = vadd.f32 %v2132, 1.0
    %v2334 = vadd.f32 %v2172, 1.0
    %v2335 = vadd.f32 %v2212, 1.0
    %v2336 = vadd.f32 %v2252, 1.0
    %v2337 = vadd.f32 %v2292, 1.0
    %v2338 = vadd.f32 %v2332, 1.0
    %v2339 = vmul.f32 %v2081, %v2333
    %v2340 = vmul.f32 %v2082, %v2334
    %v2341 = vmul.f32 %v2083, %v2335
    %v2342 = vmul.f32 %v2084, %v2336
    %v2343 = vmul.f32 %v2085, %v2337
    %v2344 = vmul.f32 %v2086, %v2338
    %v2345 = vperm.slane %v109, 0
    %2346 = vmatpush.msra.mxu0 %v133
    %2347 = vmatpush.msra.mxu0 %v132
    %2348 = vmatpush.msra.mxu0 %v131
    %2349 = vmatpush.msra.mxu0 %v130
    %2350 = vmatpush.msra.mxu0 %v129
    %2351 = vmatpush.msra.mxu0 %v128
    %2352 = vmatpush.msra.mxu0 %v127
    %2353 = vmatpush.msra.mxu0 %v126
    %2354 = vmatpush.msra.mxu0 %v125
    %2355 = vmatpush.msra.mxu0 %v124
    %2356 = vmatpush.msra.mxu0 %v123
    %2357 = vmatpush.msra.mxu0 %v122
    %2358 = vmatpush.msra.mxu0 %v121
    %2359 = vmatpush.msra.mxu0 %v120
    %2360 = vmatpush.msra.mxu0 %v119
    %2361 = vmatpush.msra.mxu0 %v118
    %2362 = vmatmul.f32.gmra.mxu0 %v2339
    %v2363 = vpop.f32.mrf.mxu0
    %v2364 = vadd.f32 %v2345, %v2363
    %2365 = vmatmul.f32.gmra.mxu0 %v2340
    %v2366 = vpop.f32.mrf.mxu0
    %v2367 = vadd.f32 %v2345, %v2366
    %2368 = vmatmul.f32.gmra.mxu0 %v2341
    %v2369 = vpop.f32.mrf.mxu0
    %v2370 = vadd.f32 %v2345, %v2369
    %2371 = vmatmul.f32.gmra.mxu0 %v2342
    %v2372 = vpop.f32.mrf.mxu0
    %v2373 = vadd.f32 %v2345, %v2372
    %2374 = vmatmul.f32.gmra.mxu0 %v2343
    %v2375 = vpop.f32.mrf.mxu0
    %v2376 = vadd.f32 %v2345, %v2375
    %2377 = vmatmul.f32.gmra.mxu0 %v2344
    %v2378 = vpop.f32.mrf.mxu0
    %v2379 = vadd.f32 %v2345, %v2378
    %2380 = vdwg.mxu0
    %v2381 = vadd.f32 %v1875, %v2364
    %v2382 = vadd.f32 %v1876, %v2367
    %v2383 = vadd.f32 %v1877, %v2370
    %v2384 = vadd.f32 %v1878, %v2373
    %v2385 = vadd.f32 %v1879, %v2376
    %v2386 = vadd.f32 %v1880, %v2379
    %s2387 = scalar_lea.vmem %s4, 8
    %v2388 = vld [vmem:[%s2387] sm:$0x1]
    %v2389 = vld [vmem:[%s2387 + $0x1] sm:$0x1]
    %v2390 = vld [vmem:[%s2387 + $0x2] sm:$0x1]
    %v2391 = vld [vmem:[%s2387 + $0x3] sm:$0x1]
    %v2392 = vld [vmem:[%s2387 + $0x4] sm:$0x1]
    %v2393 = vld [vmem:[%s2387 + $0x5] sm:$0x1]
    %v2394 = vld [vmem:[%s2387 + $0x6] sm:$0x1]
    %v2395 = vld [vmem:[%s2387 + $0x7] sm:$0x1]
    %s2396 = scalar_lea.vmem %s2, 64
    %v2397 = vld [vmem:[%s2396] sm:$0xff]
    %v2398 = vld [vmem:[%s2396 + $0x10] sm:$0xff]
    %v2399 = vld [vmem:[%s2396 + $0x20] sm:$0xff]
    %v2400 = vld [vmem:[%s2396 + $0x30] sm:$0xff]
    %v2401 = vld [vmem:[%s2396 + $0x8] sm:$0xff]
    %v2402 = vld [vmem:[%s2396 + $0x18] sm:$0xff]
    %v2403 = vld [vmem:[%s2396 + $0x28] sm:$0xff]
    %v2404 = vld [vmem:[%s2396 + $0x38] sm:$0xff]
    %s2405 = scalar_lea.vmem %s3, 128
    %v2406 = vld [vmem:[%s2405] sm:$0xff]
    %v2407 = vld [vmem:[%s2405 + $0x8] sm:$0xff]
    %v2408 = vld [vmem:[%s2405 + $0x10] sm:$0xff]
    %v2409 = vld [vmem:[%s2405 + $0x18] sm:$0xff]
    %v2410 = vld [vmem:[%s2405 + $0x20] sm:$0xff]
    %v2411 = vld [vmem:[%s2405 + $0x28] sm:$0xff]
    %v2412 = vld [vmem:[%s2405 + $0x30] sm:$0xff]
    %v2413 = vld [vmem:[%s2405 + $0x38] sm:$0xff]
    %v2414 = vld [vmem:[%s2405 + $0x40] sm:$0xff]
    %v2415 = vld [vmem:[%s2405 + $0x48] sm:$0xff]
    %v2416 = vld [vmem:[%s2405 + $0x50] sm:$0xff]
    %v2417 = vld [vmem:[%s2405 + $0x58] sm:$0xff]
    %v2418 = vld [vmem:[%s2405 + $0x60] sm:$0xff]
    %v2419 = vld [vmem:[%s2405 + $0x68] sm:$0xff]
    %v2420 = vld [vmem:[%s2405 + $0x70] sm:$0xff]
    %v2421 = vld [vmem:[%s2405 + $0x78] sm:$0xff]
    %v2422 = vsel %vm134, %v2381, 0.0
    %2423 = vadd.xlane.f32.xlu0 %v2422
    %v2424 = vpop.xlane.xlu0 %2423
    %v2425 = vsel %vm134, %v2382, 0.0
    %2426 = vadd.xlane.f32.xlu0 %v2425
    %v2427 = vpop.xlane.xlu0 %2426
    %v2428 = vsel %vm134, %v2383, 0.0
    %2429 = vadd.xlane.f32.xlu0 %v2428
    %v2430 = vpop.xlane.xlu0 %2429
    %v2431 = vsel %vm134, %v2384, 0.0
    %2432 = vadd.xlane.f32.xlu0 %v2431
    %v2433 = vpop.xlane.xlu0 %2432
    %v2434 = vsel %vm134, %v2385, 0.0
    %2435 = vadd.xlane.f32.xlu0 %v2434
    %v2436 = vpop.xlane.xlu0 %2435
    %v2437 = vsel %vm134, %v2386, 0.0
    %2438 = vadd.xlane.f32.xlu0 %v2437
    %v2439 = vpop.xlane.xlu0 %2438
    %v2440 = vmul.f32 %v2424, %v159
    %v2441 = vmul.f32 %v2427, %v159
    %v2442 = vmul.f32 %v2430, %v159
    %v2443 = vmul.f32 %v2433, %v159
    %v2444 = vmul.f32 %v2436, %v159
    %v2445 = vmul.f32 %v2439, %v159
    %v2446 = vsub.f32 %v2381, %v2440
    %v2447 = vsub.f32 %v2382, %v2441
    %v2448 = vsub.f32 %v2383, %v2442
    %v2449 = vsub.f32 %v2384, %v2443
    %v2450 = vsub.f32 %v2385, %v2444
    %v2451 = vsub.f32 %v2386, %v2445
    %v2452 = vmul.f32 %v2446, %v2446
    %v2453 = vmul.f32 %v2447, %v2447
    %v2454 = vmul.f32 %v2448, %v2448
    %v2455 = vmul.f32 %v2449, %v2449
    %v2456 = vmul.f32 %v2450, %v2450
    %v2457 = vmul.f32 %v2451, %v2451
    %v2458 = vsel %vm134, %v2452, 0.0
    %2459 = vadd.xlane.f32.xlu0 %v2458
    %v2460 = vpop.xlane.xlu0 %2459
    %v2461 = vsel %vm134, %v2453, 0.0
    %2462 = vadd.xlane.f32.xlu0 %v2461
    %v2463 = vpop.xlane.xlu0 %2462
    %v2464 = vsel %vm134, %v2454, 0.0
    %2465 = vadd.xlane.f32.xlu0 %v2464
    %v2466 = vpop.xlane.xlu0 %2465
    %v2467 = vsel %vm134, %v2455, 0.0
    %2468 = vadd.xlane.f32.xlu0 %v2467
    %v2469 = vpop.xlane.xlu0 %2468
    %v2470 = vsel %vm134, %v2456, 0.0
    %2471 = vadd.xlane.f32.xlu0 %v2470
    %v2472 = vpop.xlane.xlu0 %2471
    %v2473 = vsel %vm134, %v2457, 0.0
    %2474 = vadd.xlane.f32.xlu0 %v2473
    %v2475 = vpop.xlane.xlu0 %2474
    %v2476 = vmul.f32 %v2460, %v159
    %v2477 = vmul.f32 %v2463, %v159
    %v2478 = vmul.f32 %v2466, %v159
    %v2479 = vmul.f32 %v2469, %v159
    %v2480 = vmul.f32 %v2472, %v159
    %v2481 = vmul.f32 %v2475, %v159
    %v2482 = vadd.f32 %v2476, 1e-06
    %v2483 = vadd.f32 %v2477, 1e-06
    %v2484 = vadd.f32 %v2478, 1e-06
    %v2485 = vadd.f32 %v2479, 1e-06
    %v2486 = vadd.f32 %v2480, 1e-06
    %v2487 = vadd.f32 %v2481, 1e-06
    %v2488 = vrsqrt.pop %v2482
    %v2489 = vmul.f32 %v2488, %v2482
    %v2490 = vmul.f32 %v2489, %v2488
    %v2491 = vmul.f32 0.5, %v2490
    %v2492 = vsub.f32 1.5, %v2491
    %v2493 = vmul.f32 %v2488, %v2492
    %vm2494 = vweird.f32 %v2482
    %vm2495 = vweird.f32 %v2488
    %vm2496 = vmor %vm2494, %vm2495
    %v2497 = vsel %vm2496, %v2488, %v2493
    %v2498 = vrsqrt.pop %v2483
    %v2499 = vmul.f32 %v2498, %v2483
    %v2500 = vmul.f32 %v2499, %v2498
    %v2501 = vmul.f32 0.5, %v2500
    %v2502 = vsub.f32 1.5, %v2501
    %v2503 = vmul.f32 %v2498, %v2502
    %vm2504 = vweird.f32 %v2483
    %vm2505 = vweird.f32 %v2498
    %vm2506 = vmor %vm2504, %vm2505
    %v2507 = vsel %vm2506, %v2498, %v2503
    %v2508 = vrsqrt.pop %v2484
    %v2509 = vmul.f32 %v2508, %v2484
    %v2510 = vmul.f32 %v2509, %v2508
    %v2511 = vmul.f32 0.5, %v2510
    %v2512 = vsub.f32 1.5, %v2511
    %v2513 = vmul.f32 %v2508, %v2512
    %vm2514 = vweird.f32 %v2484
    %vm2515 = vweird.f32 %v2508
    %vm2516 = vmor %vm2514, %vm2515
    %v2517 = vsel %vm2516, %v2508, %v2513
    %v2518 = vrsqrt.pop %v2485
    %v2519 = vmul.f32 %v2518, %v2485
    %v2520 = vmul.f32 %v2519, %v2518
    %v2521 = vmul.f32 0.5, %v2520
    %v2522 = vsub.f32 1.5, %v2521
    %v2523 = vmul.f32 %v2518, %v2522
    %vm2524 = vweird.f32 %v2485
    %vm2525 = vweird.f32 %v2518
    %vm2526 = vmor %vm2524, %vm2525
    %v2527 = vsel %vm2526, %v2518, %v2523
    %v2528 = vrsqrt.pop %v2486
    %v2529 = vmul.f32 %v2528, %v2486
    %v2530 = vmul.f32 %v2529, %v2528
    %v2531 = vmul.f32 0.5, %v2530
    %v2532 = vsub.f32 1.5, %v2531
    %v2533 = vmul.f32 %v2528, %v2532
    %vm2534 = vweird.f32 %v2486
    %vm2535 = vweird.f32 %v2528
    %vm2536 = vmor %vm2534, %vm2535
    %v2537 = vsel %vm2536, %v2528, %v2533
    %v2538 = vrsqrt.pop %v2487
    %v2539 = vmul.f32 %v2538, %v2487
    %v2540 = vmul.f32 %v2539, %v2538
    %v2541 = vmul.f32 0.5, %v2540
    %v2542 = vsub.f32 1.5, %v2541
    %v2543 = vmul.f32 %v2538, %v2542
    %vm2544 = vweird.f32 %v2487
    %vm2545 = vweird.f32 %v2538
    %vm2546 = vmor %vm2544, %vm2545
    %v2547 = vsel %vm2546, %v2538, %v2543
    %v2548 = vmul.f32 %v2446, %v2497
    %v2549 = vmul.f32 %v2447, %v2507
    %v2550 = vmul.f32 %v2448, %v2517
    %v2551 = vmul.f32 %v2449, %v2527
    %v2552 = vmul.f32 %v2450, %v2537
    %v2553 = vmul.f32 %v2451, %v2547
    %v2554 = vperm.slane %v2388, 0
    %v2555 = vmul.f32 %v2548, %v2554
    %v2556 = vmul.f32 %v2549, %v2554
    %v2557 = vmul.f32 %v2550, %v2554
    %v2558 = vmul.f32 %v2551, %v2554
    %v2559 = vmul.f32 %v2552, %v2554
    %v2560 = vmul.f32 %v2553, %v2554
    %v2561 = vperm.slane %v2389, 0
    %v2562 = vadd.f32 %v2555, %v2561
    %v2563 = vadd.f32 %v2556, %v2561
    %v2564 = vadd.f32 %v2557, %v2561
    %v2565 = vadd.f32 %v2558, %v2561
    %v2566 = vadd.f32 %v2559, %v2561
    %v2567 = vadd.f32 %v2560, %v2561
    %v2568 = vperm.slane %v2392, 0
    %v2570 = vsel %vm134, %v2562, 0
    %v2573 = vsel %vm134, %v2563, 0
    %v2576 = vsel %vm134, %v2564, 0
    %v2579 = vsel %vm134, %v2565, 0
    %v2582 = vsel %vm134, %v2566, 0
    %v2585 = vsel %vm134, %v2567, 0
    %2587 = vmatpush.msra.mxu0 0.0
    %2588 = vmatpush.msra.mxu0 0.0
    %2589 = vmatpush.msra.mxu0 0.0
    %2590 = vmatpush.msra.mxu0 0.0
    %2591 = vmatpush.msra.mxu0 0.0
    %2592 = vmatpush.msra.mxu0 0.0
    %2593 = vmatpush.msra.mxu0 0.0
    %2594 = vmatpush.msra.mxu0 0.0
    %2595 = vmatpush.msra.mxu0 0.0
    %2596 = vmatpush.msra.mxu0 0.0
    %2597 = vmatpush.msra.mxu0 0.0
    %2598 = vmatpush.msra.mxu0 0.0
    %2599 = vmatpush.msra.mxu0 %v2400
    %2600 = vmatpush.msra.mxu0 %v2399
    %2601 = vmatpush.msra.mxu0 %v2398
    %2602 = vmatpush.msra.mxu0 %v2397
    %2603 = vmatmul.f32.gmra.mxu0 %v2570
    %v2604 = vpop.f32.mrf.mxu0
    %v2605 = vadd.f32 %v2568, %v2604
    %2606 = vmatmul.f32.gmra.mxu0 %v2573
    %v2607 = vpop.f32.mrf.mxu0
    %v2608 = vadd.f32 %v2568, %v2607
    %2609 = vmatmul.f32.gmra.mxu0 %v2576
    %v2610 = vpop.f32.mrf.mxu0
    %v2611 = vadd.f32 %v2568, %v2610
    %2612 = vmatmul.f32.gmra.mxu0 %v2579
    %v2613 = vpop.f32.mrf.mxu0
    %v2614 = vadd.f32 %v2568, %v2613
    %2615 = vmatmul.f32.gmra.mxu0 %v2582
    %v2616 = vpop.f32.mrf.mxu0
    %v2617 = vadd.f32 %v2568, %v2616
    %2618 = vmatmul.f32.gmra.mxu0 %v2585
    %v2619 = vpop.f32.mrf.mxu0
    %v2620 = vadd.f32 %v2568, %v2619
    %2621 = vdwg.mxu0
    %2625 = vrot.lane.b32.xlu0 %v2605, 96
    %v2626 = vpop.permute.xlu0 %2625
    %2627 = vrot.lane.b32.xlu0 %v2608, 96
    %v2628 = vpop.permute.xlu0 %2627
    %2629 = vrot.lane.b32.xlu0 %v2611, 96
    %v2630 = vpop.permute.xlu0 %2629
    %v2631 = vsel %vm351, %v2605, 0
    %v2633 = vsel %vm351, %v2608, 0
    %v2635 = vsel %vm351, %v2611, 0
    %v2637 = vsel %vm351, %v2626, 0
    %v2639 = vsel %vm351, %v2628, 0
    %v2641 = vsel %vm351, %v2630, 0
    %2643 = vmatpush.xpose.msra.mxu0 0.0
    %2644 = vmatpush.xpose.msra.mxu0 0.0
    %2645 = vmatpush.xpose.msra.mxu0 0.0
    %2646 = vmatpush.xpose.msra.mxu0 0.0
    %2647 = vmatpush.xpose.msra.mxu0 0.0
    %2648 = vmatpush.xpose.msra.mxu0 0.0
    %2649 = vmatpush.xpose.msra.mxu0 0.0
    %2650 = vmatpush.xpose.msra.mxu0 0.0
    %2651 = vmatpush.xpose.msra.mxu0 0.0
    %2652 = vmatpush.xpose.msra.mxu0 0.0
    %2653 = vmatpush.xpose.msra.mxu0 0.0
    %2654 = vmatpush.xpose.msra.mxu0 0.0
    %2655 = vmatpush.xpose.msra.mxu0 0.0
    %2656 = vmatpush.xpose.msra.mxu0 %v2641
    %2657 = vmatpush.xpose.msra.mxu0 %v2639
    %2658 = vmatpush.xpose.msra.mxu0 %v2637
    %2659 = vmatmul.f32.gmra.mxu0 %v2631
    %v2660 = vpop.f32.mrf.mxu0
    %v2661 = vadd.f32 0.0, %v2660
    %2662 = vmatmul.f32.gmra.mxu0 %v2633
    %v2663 = vpop.f32.mrf.mxu0
    %v2664 = vadd.f32 0.0, %v2663
    %2665 = vmatmul.f32.gmra.mxu0 %v2635
    %v2666 = vpop.f32.mrf.mxu0
    %v2667 = vadd.f32 0.0, %v2666
    %2668 = vdwg.mxu0
    %v2669 = vmul.f32 %v2661, 0.35355338
    %v2670 = vmul.f32 %v2664, 0.35355338
    %v2671 = vmul.f32 %v2667, 0.35355338
    %v2672 = vadd.f32 %v2669, %v101
    %v2673 = vadd.f32 %v2670, %v101
    %v2674 = vadd.f32 %v2671, %v101
    %v2675 = vsel %vm396, %v2672, -inf
    %2676 = vmax.xlane.f32.xlu0 %v2675
    %v2677 = vpop.xlane.xlu0 %2676
    %v2678 = vsel %vm396, %v2673, -inf
    %2679 = vmax.xlane.f32.xlu0 %v2678
    %v2680 = vpop.xlane.xlu0 %2679
    %v2681 = vsel %vm396, %v2674, -inf
    %2682 = vmax.xlane.f32.xlu0 %v2681
    %v2683 = vpop.xlane.xlu0 %2682
    %v2684 = vsub.f32 %v2672, %v2677
    %v2685 = vsub.f32 %v2673, %v2680
    %v2686 = vsub.f32 %v2674, %v2683
    %v2687 = vmul.f32 %v2684, 1.442695
    %v2688 = vpow.pop %v2687
    %v2689 = vmul.f32 %v2685, 1.442695
    %v2690 = vpow.pop %v2689
    %v2691 = vmul.f32 %v2686, 1.442695
    %v2692 = vpow.pop %v2691
    %v2693 = vsel %vm396, %v2688, 0.0
    %2694 = vadd.xlane.f32.xlu0 %v2693
    %v2695 = vpop.xlane.xlu0 %2694
    %v2696 = vsel %vm396, %v2690, 0.0
    %2697 = vadd.xlane.f32.xlu0 %v2696
    %v2698 = vpop.xlane.xlu0 %2697
    %v2699 = vsel %vm396, %v2692, 0.0
    %2700 = vadd.xlane.f32.xlu0 %v2699
    %v2701 = vpop.xlane.xlu0 %2700
    %v2702 = vrcp.pop %v2695
    %v2703 = vmul.f32 %v2695, %v2702
    %v2704 = vsub.f32 1.0, %v2703
    %v2705 = vmul.f32 %v2702, %v2704
    %v2706 = vadd.f32 %v2702, %v2705
    %vm2707 = vweird.f32 %v2695
    %vm2708 = vweird.f32 %v2702
    %vm2709 = vmor %vm2707, %vm2708
    %v2710 = vsel %vm2709, %v2702, %v2706
    %v2711 = vand.u32 2147483647, %v2695
    %vm2712 = vcmp.eq.f32.partialorder %v2711, 8.507059e+37
    %v2713 = vand.u32 %v2695, 2147483648
    %v2714 = vor.u32 1.1754944e-38, %v2713
    %v2715 = vsel %vm2712, %v2714, %v2710
    %v2716 = vmul.f32 %v2688, %v2715
    %v2717 = vrcp.pop %v2698
    %v2718 = vmul.f32 %v2698, %v2717
    %v2719 = vsub.f32 1.0, %v2718
    %v2720 = vmul.f32 %v2717, %v2719
    %v2721 = vadd.f32 %v2717, %v2720
    %vm2722 = vweird.f32 %v2698
    %vm2723 = vweird.f32 %v2717
    %vm2724 = vmor %vm2722, %vm2723
    %v2725 = vsel %vm2724, %v2717, %v2721
    %v2726 = vand.u32 2147483647, %v2698
    %vm2727 = vcmp.eq.f32.partialorder %v2726, 8.507059e+37
    %v2728 = vand.u32 %v2698, 2147483648
    %v2729 = vor.u32 1.1754944e-38, %v2728
    %v2730 = vsel %vm2727, %v2729, %v2725
    %v2731 = vmul.f32 %v2690, %v2730
    %v2732 = vrcp.pop %v2701
    %v2733 = vmul.f32 %v2701, %v2732
    %v2734 = vsub.f32 1.0, %v2733
    %v2735 = vmul.f32 %v2732, %v2734
    %v2736 = vadd.f32 %v2732, %v2735
    %vm2737 = vweird.f32 %v2701
    %vm2738 = vweird.f32 %v2732
    %vm2739 = vmor %vm2737, %vm2738
    %v2740 = vsel %vm2739, %v2732, %v2736
    %v2741 = vand.u32 2147483647, %v2701
    %vm2742 = vcmp.eq.f32.partialorder %v2741, 8.507059e+37
    %v2743 = vand.u32 %v2701, 2147483648
    %v2744 = vor.u32 1.1754944e-38, %v2743
    %v2745 = vsel %vm2742, %v2744, %v2740
    %v2746 = vmul.f32 %v2692, %v2745
    %2747 = vrot.lane.b32.xlu0 %v2605, 64
    %v2748 = vpop.permute.xlu0 %2747
    %2749 = vrot.lane.b32.xlu0 %v2608, 64
    %v2750 = vpop.permute.xlu0 %2749
    %2751 = vrot.lane.b32.xlu0 %v2611, 64
    %v2752 = vpop.permute.xlu0 %2751
    %v2757 = vsel %vm396, %v2716, 0
    %v2760 = vsel %vm396, %v2731, 0
    %v2763 = vsel %vm396, %v2746, 0
    %2765 = vmatpush.msra.mxu0 0.0
    %2766 = vmatpush.msra.mxu0 0.0
    %2767 = vmatpush.msra.mxu0 0.0
    %2768 = vmatpush.msra.mxu0 0.0
    %2769 = vmatpush.msra.mxu0 0.0
    %2770 = vmatpush.msra.mxu0 0.0
    %2771 = vmatpush.msra.mxu0 0.0
    %2772 = vmatpush.msra.mxu0 0.0
    %2773 = vmatpush.msra.mxu0 0.0
    %2774 = vmatpush.msra.mxu0 0.0
    %2775 = vmatpush.msra.mxu0 0.0
    %2776 = vmatpush.msra.mxu0 0.0
    %2777 = vmatpush.msra.mxu0 0.0
    %2778 = vmatpush.msra.mxu0 %v2752
    %2779 = vmatpush.msra.mxu0 %v2750
    %2780 = vmatpush.msra.mxu0 %v2748
    %2781 = vmatmul.f32.gmra.mxu0 %v2757
    %v2782 = vpop.f32.mrf.mxu0
    %v2783 = vadd.f32 0.0, %v2782
    %2784 = vmatmul.f32.gmra.mxu0 %v2760
    %v2785 = vpop.f32.mrf.mxu0
    %v2786 = vadd.f32 0.0, %v2785
    %2787 = vmatmul.f32.gmra.mxu0 %v2763
    %v2788 = vpop.f32.mrf.mxu0
    %v2789 = vadd.f32 0.0, %v2788
    %2790 = vdwg.mxu0
    %2791 = vrot.lane.b32.xlu0 %v2605, 120
    %v2792 = vpop.permute.xlu0 %2791
    %2793 = vrot.lane.b32.xlu0 %v2608, 120
    %v2794 = vpop.permute.xlu0 %2793
    %2795 = vrot.lane.b32.xlu0 %v2611, 120
    %v2796 = vpop.permute.xlu0 %2795
    %2797 = vrot.lane.b32.xlu0 %v2605, 88
    %v2798 = vpop.permute.xlu0 %2797
    %2799 = vrot.lane.b32.xlu0 %v2608, 88
    %v2800 = vpop.permute.xlu0 %2799
    %2801 = vrot.lane.b32.xlu0 %v2611, 88
    %v2802 = vpop.permute.xlu0 %2801
    %v2803 = vsel %vm351, %v2792, 0
    %v2805 = vsel %vm351, %v2794, 0
    %v2807 = vsel %vm351, %v2796, 0
    %v2809 = vsel %vm351, %v2798, 0
    %v2811 = vsel %vm351, %v2800, 0
    %v2813 = vsel %vm351, %v2802, 0
    %2815 = vmatpush.xpose.msra.mxu0 0.0
    %2816 = vmatpush.xpose.msra.mxu0 0.0
    %2817 = vmatpush.xpose.msra.mxu0 0.0
    %2818 = vmatpush.xpose.msra.mxu0 0.0
    %2819 = vmatpush.xpose.msra.mxu0 0.0
    %2820 = vmatpush.xpose.msra.mxu0 0.0
    %2821 = vmatpush.xpose.msra.mxu0 0.0
    %2822 = vmatpush.xpose.msra.mxu0 0.0
    %2823 = vmatpush.xpose.msra.mxu0 0.0
    %2824 = vmatpush.xpose.msra.mxu0 0.0
    %2825 = vmatpush.xpose.msra.mxu0 0.0
    %2826 = vmatpush.xpose.msra.mxu0 0.0
    %2827 = vmatpush.xpose.msra.mxu0 0.0
    %2828 = vmatpush.xpose.msra.mxu0 %v2813
    %2829 = vmatpush.xpose.msra.mxu0 %v2811
    %2830 = vmatpush.xpose.msra.mxu0 %v2809
    %2831 = vmatmul.f32.gmra.mxu0 %v2803
    %v2832 = vpop.f32.mrf.mxu0
    %v2833 = vadd.f32 0.0, %v2832
    %2834 = vmatmul.f32.gmra.mxu0 %v2805
    %v2835 = vpop.f32.mrf.mxu0
    %v2836 = vadd.f32 0.0, %v2835
    %2837 = vmatmul.f32.gmra.mxu0 %v2807
    %v2838 = vpop.f32.mrf.mxu0
    %v2839 = vadd.f32 0.0, %v2838
    %2840 = vdwg.mxu0
    %v2841 = vmul.f32 %v2833, 0.35355338
    %v2842 = vmul.f32 %v2836, 0.35355338
    %v2843 = vmul.f32 %v2839, 0.35355338
    %v2844 = vadd.f32 %v2841, %v101
    %v2845 = vadd.f32 %v2842, %v101
    %v2846 = vadd.f32 %v2843, %v101
    %v2847 = vsel %vm396, %v2844, -inf
    %2848 = vmax.xlane.f32.xlu0 %v2847
    %v2849 = vpop.xlane.xlu0 %2848
    %v2850 = vsel %vm396, %v2845, -inf
    %2851 = vmax.xlane.f32.xlu0 %v2850
    %v2852 = vpop.xlane.xlu0 %2851
    %v2853 = vsel %vm396, %v2846, -inf
    %2854 = vmax.xlane.f32.xlu0 %v2853
    %v2855 = vpop.xlane.xlu0 %2854
    %v2856 = vsub.f32 %v2844, %v2849
    %v2857 = vsub.f32 %v2845, %v2852
    %v2858 = vsub.f32 %v2846, %v2855
    %v2859 = vmul.f32 %v2856, 1.442695
    %v2860 = vpow.pop %v2859
    %v2861 = vmul.f32 %v2857, 1.442695
    %v2862 = vpow.pop %v2861
    %v2863 = vmul.f32 %v2858, 1.442695
    %v2864 = vpow.pop %v2863
    %v2865 = vsel %vm396, %v2860, 0.0
    %2866 = vadd.xlane.f32.xlu0 %v2865
    %v2867 = vpop.xlane.xlu0 %2866
    %v2868 = vsel %vm396, %v2862, 0.0
    %2869 = vadd.xlane.f32.xlu0 %v2868
    %v2870 = vpop.xlane.xlu0 %2869
    %v2871 = vsel %vm396, %v2864, 0.0
    %2872 = vadd.xlane.f32.xlu0 %v2871
    %v2873 = vpop.xlane.xlu0 %2872
    %v2874 = vrcp.pop %v2867
    %v2875 = vmul.f32 %v2867, %v2874
    %v2876 = vsub.f32 1.0, %v2875
    %v2877 = vmul.f32 %v2874, %v2876
    %v2878 = vadd.f32 %v2874, %v2877
    %vm2879 = vweird.f32 %v2867
    %vm2880 = vweird.f32 %v2874
    %vm2881 = vmor %vm2879, %vm2880
    %v2882 = vsel %vm2881, %v2874, %v2878
    %v2883 = vand.u32 2147483647, %v2867
    %vm2884 = vcmp.eq.f32.partialorder %v2883, 8.507059e+37
    %v2885 = vand.u32 %v2867, 2147483648
    %v2886 = vor.u32 1.1754944e-38, %v2885
    %v2887 = vsel %vm2884, %v2886, %v2882
    %v2888 = vmul.f32 %v2860, %v2887
    %v2889 = vrcp.pop %v2870
    %v2890 = vmul.f32 %v2870, %v2889
    %v2891 = vsub.f32 1.0, %v2890
    %v2892 = vmul.f32 %v2889, %v2891
    %v2893 = vadd.f32 %v2889, %v2892
    %vm2894 = vweird.f32 %v2870
    %vm2895 = vweird.f32 %v2889
    %vm2896 = vmor %vm2894, %vm2895
    %v2897 = vsel %vm2896, %v2889, %v2893
    %v2898 = vand.u32 2147483647, %v2870
    %vm2899 = vcmp.eq.f32.partialorder %v2898, 8.507059e+37
    %v2900 = vand.u32 %v2870, 2147483648
    %v2901 = vor.u32 1.1754944e-38, %v2900
    %v2902 = vsel %vm2899, %v2901, %v2897
    %v2903 = vmul.f32 %v2862, %v2902
    %v2904 = vrcp.pop %v2873
    %v2905 = vmul.f32 %v2873, %v2904
    %v2906 = vsub.f32 1.0, %v2905
    %v2907 = vmul.f32 %v2904, %v2906
    %v2908 = vadd.f32 %v2904, %v2907
    %vm2909 = vweird.f32 %v2873
    %vm2910 = vweird.f32 %v2904
    %vm2911 = vmor %vm2909, %vm2910
    %v2912 = vsel %vm2911, %v2904, %v2908
    %v2913 = vand.u32 2147483647, %v2873
    %vm2914 = vcmp.eq.f32.partialorder %v2913, 8.507059e+37
    %v2915 = vand.u32 %v2873, 2147483648
    %v2916 = vor.u32 1.1754944e-38, %v2915
    %v2917 = vsel %vm2914, %v2916, %v2912
    %v2918 = vmul.f32 %v2864, %v2917
    %2919 = vrot.lane.b32.xlu0 %v2605, 56
    %v2920 = vpop.permute.xlu0 %2919
    %2921 = vrot.lane.b32.xlu0 %v2608, 56
    %v2922 = vpop.permute.xlu0 %2921
    %2923 = vrot.lane.b32.xlu0 %v2611, 56
    %v2924 = vpop.permute.xlu0 %2923
    %v2929 = vsel %vm396, %v2888, 0
    %v2932 = vsel %vm396, %v2903, 0
    %v2935 = vsel %vm396, %v2918, 0
    %2937 = vmatpush.msra.mxu0 0.0
    %2938 = vmatpush.msra.mxu0 0.0
    %2939 = vmatpush.msra.mxu0 0.0
    %2940 = vmatpush.msra.mxu0 0.0
    %2941 = vmatpush.msra.mxu0 0.0
    %2942 = vmatpush.msra.mxu0 0.0
    %2943 = vmatpush.msra.mxu0 0.0
    %2944 = vmatpush.msra.mxu0 0.0
    %2945 = vmatpush.msra.mxu0 0.0
    %2946 = vmatpush.msra.mxu0 0.0
    %2947 = vmatpush.msra.mxu0 0.0
    %2948 = vmatpush.msra.mxu0 0.0
    %2949 = vmatpush.msra.mxu0 0.0
    %2950 = vmatpush.msra.mxu0 %v2924
    %2951 = vmatpush.msra.mxu0 %v2922
    %2952 = vmatpush.msra.mxu0 %v2920
    %2953 = vmatmul.f32.gmra.mxu0 %v2929
    %v2954 = vpop.f32.mrf.mxu0
    %v2955 = vadd.f32 0.0, %v2954
    %2956 = vmatmul.f32.gmra.mxu0 %v2932
    %v2957 = vpop.f32.mrf.mxu0
    %v2958 = vadd.f32 0.0, %v2957
    %2959 = vmatmul.f32.gmra.mxu0 %v2935
    %v2960 = vpop.f32.mrf.mxu0
    %v2961 = vadd.f32 0.0, %v2960
    %2962 = vdwg.mxu0
    %2963 = vrot.lane.b32.xlu0 %v2605, 112
    %v2964 = vpop.permute.xlu0 %2963
    %2965 = vrot.lane.b32.xlu0 %v2608, 112
    %v2966 = vpop.permute.xlu0 %2965
    %2967 = vrot.lane.b32.xlu0 %v2611, 112
    %v2968 = vpop.permute.xlu0 %2967
    %2969 = vrot.lane.b32.xlu0 %v2605, 80
    %v2970 = vpop.permute.xlu0 %2969
    %2971 = vrot.lane.b32.xlu0 %v2608, 80
    %v2972 = vpop.permute.xlu0 %2971
    %2973 = vrot.lane.b32.xlu0 %v2611, 80
    %v2974 = vpop.permute.xlu0 %2973
    %v2975 = vsel %vm351, %v2964, 0
    %v2977 = vsel %vm351, %v2966, 0
    %v2979 = vsel %vm351, %v2968, 0
    %v2981 = vsel %vm351, %v2970, 0
    %v2983 = vsel %vm351, %v2972, 0
    %v2985 = vsel %vm351, %v2974, 0
    %2987 = vmatpush.xpose.msra.mxu0 0.0
    %2988 = vmatpush.xpose.msra.mxu0 0.0
    %2989 = vmatpush.xpose.msra.mxu0 0.0
    %2990 = vmatpush.xpose.msra.mxu0 0.0
    %2991 = vmatpush.xpose.msra.mxu0 0.0
    %2992 = vmatpush.xpose.msra.mxu0 0.0
    %2993 = vmatpush.xpose.msra.mxu0 0.0
    %2994 = vmatpush.xpose.msra.mxu0 0.0
    %2995 = vmatpush.xpose.msra.mxu0 0.0
    %2996 = vmatpush.xpose.msra.mxu0 0.0
    %2997 = vmatpush.xpose.msra.mxu0 0.0
    %2998 = vmatpush.xpose.msra.mxu0 0.0
    %2999 = vmatpush.xpose.msra.mxu0 0.0
    %3000 = vmatpush.xpose.msra.mxu0 %v2985
    %3001 = vmatpush.xpose.msra.mxu0 %v2983
    %3002 = vmatpush.xpose.msra.mxu0 %v2981
    %3003 = vmatmul.f32.gmra.mxu0 %v2975
    %v3004 = vpop.f32.mrf.mxu0
    %v3005 = vadd.f32 0.0, %v3004
    %3006 = vmatmul.f32.gmra.mxu0 %v2977
    %v3007 = vpop.f32.mrf.mxu0
    %v3008 = vadd.f32 0.0, %v3007
    %3009 = vmatmul.f32.gmra.mxu0 %v2979
    %v3010 = vpop.f32.mrf.mxu0
    %v3011 = vadd.f32 0.0, %v3010
    %3012 = vdwg.mxu0
    %v3013 = vmul.f32 %v3005, 0.35355338
    %v3014 = vmul.f32 %v3008, 0.35355338
    %v3015 = vmul.f32 %v3011, 0.35355338
    %v3016 = vadd.f32 %v3013, %v101
    %v3017 = vadd.f32 %v3014, %v101
    %v3018 = vadd.f32 %v3015, %v101
    %v3019 = vsel %vm396, %v3016, -inf
    %3020 = vmax.xlane.f32.xlu0 %v3019
    %v3021 = vpop.xlane.xlu0 %3020
    %v3022 = vsel %vm396, %v3017, -inf
    %3023 = vmax.xlane.f32.xlu0 %v3022
    %v3024 = vpop.xlane.xlu0 %3023
    %v3025 = vsel %vm396, %v3018, -inf
    %3026 = vmax.xlane.f32.xlu0 %v3025
    %v3027 = vpop.xlane.xlu0 %3026
    %v3028 = vsub.f32 %v3016, %v3021
    %v3029 = vsub.f32 %v3017, %v3024
    %v3030 = vsub.f32 %v3018, %v3027
    %v3031 = vmul.f32 %v3028, 1.442695
    %v3032 = vpow.pop %v3031
    %v3033 = vmul.f32 %v3029, 1.442695
    %v3034 = vpow.pop %v3033
    %v3035 = vmul.f32 %v3030, 1.442695
    %v3036 = vpow.pop %v3035
    %v3037 = vsel %vm396, %v3032, 0.0
    %3038 = vadd.xlane.f32.xlu0 %v3037
    %v3039 = vpop.xlane.xlu0 %3038
    %v3040 = vsel %vm396, %v3034, 0.0
    %3041 = vadd.xlane.f32.xlu0 %v3040
    %v3042 = vpop.xlane.xlu0 %3041
    %v3043 = vsel %vm396, %v3036, 0.0
    %3044 = vadd.xlane.f32.xlu0 %v3043
    %v3045 = vpop.xlane.xlu0 %3044
    %v3046 = vrcp.pop %v3039
    %v3047 = vmul.f32 %v3039, %v3046
    %v3048 = vsub.f32 1.0, %v3047
    %v3049 = vmul.f32 %v3046, %v3048
    %v3050 = vadd.f32 %v3046, %v3049
    %vm3051 = vweird.f32 %v3039
    %vm3052 = vweird.f32 %v3046
    %vm3053 = vmor %vm3051, %vm3052
    %v3054 = vsel %vm3053, %v3046, %v3050
    %v3055 = vand.u32 2147483647, %v3039
    %vm3056 = vcmp.eq.f32.partialorder %v3055, 8.507059e+37
    %v3057 = vand.u32 %v3039, 2147483648
    %v3058 = vor.u32 1.1754944e-38, %v3057
    %v3059 = vsel %vm3056, %v3058, %v3054
    %v3060 = vmul.f32 %v3032, %v3059
    %v3061 = vrcp.pop %v3042
    %v3062 = vmul.f32 %v3042, %v3061
    %v3063 = vsub.f32 1.0, %v3062
    %v3064 = vmul.f32 %v3061, %v3063
    %v3065 = vadd.f32 %v3061, %v3064
    %vm3066 = vweird.f32 %v3042
    %vm3067 = vweird.f32 %v3061
    %vm3068 = vmor %vm3066, %vm3067
    %v3069 = vsel %vm3068, %v3061, %v3065
    %v3070 = vand.u32 2147483647, %v3042
    %vm3071 = vcmp.eq.f32.partialorder %v3070, 8.507059e+37
    %v3072 = vand.u32 %v3042, 2147483648
    %v3073 = vor.u32 1.1754944e-38, %v3072
    %v3074 = vsel %vm3071, %v3073, %v3069
    %v3075 = vmul.f32 %v3034, %v3074
    %v3076 = vrcp.pop %v3045
    %v3077 = vmul.f32 %v3045, %v3076
    %v3078 = vsub.f32 1.0, %v3077
    %v3079 = vmul.f32 %v3076, %v3078
    %v3080 = vadd.f32 %v3076, %v3079
    %vm3081 = vweird.f32 %v3045
    %vm3082 = vweird.f32 %v3076
    %vm3083 = vmor %vm3081, %vm3082
    %v3084 = vsel %vm3083, %v3076, %v3080
    %v3085 = vand.u32 2147483647, %v3045
    %vm3086 = vcmp.eq.f32.partialorder %v3085, 8.507059e+37
    %v3087 = vand.u32 %v3045, 2147483648
    %v3088 = vor.u32 1.1754944e-38, %v3087
    %v3089 = vsel %vm3086, %v3088, %v3084
    %v3090 = vmul.f32 %v3036, %v3089
    %3091 = vrot.lane.b32.xlu0 %v2605, 48
    %v3092 = vpop.permute.xlu0 %3091
    %3093 = vrot.lane.b32.xlu0 %v2608, 48
    %v3094 = vpop.permute.xlu0 %3093
    %3095 = vrot.lane.b32.xlu0 %v2611, 48
    %v3096 = vpop.permute.xlu0 %3095
    %v3101 = vsel %vm396, %v3060, 0
    %v3104 = vsel %vm396, %v3075, 0
    %v3107 = vsel %vm396, %v3090, 0
    %3109 = vmatpush.msra.mxu0 0.0
    %3110 = vmatpush.msra.mxu0 0.0
    %3111 = vmatpush.msra.mxu0 0.0
    %3112 = vmatpush.msra.mxu0 0.0
    %3113 = vmatpush.msra.mxu0 0.0
    %3114 = vmatpush.msra.mxu0 0.0
    %3115 = vmatpush.msra.mxu0 0.0
    %3116 = vmatpush.msra.mxu0 0.0
    %3117 = vmatpush.msra.mxu0 0.0
    %3118 = vmatpush.msra.mxu0 0.0
    %3119 = vmatpush.msra.mxu0 0.0
    %3120 = vmatpush.msra.mxu0 0.0
    %3121 = vmatpush.msra.mxu0 0.0
    %3122 = vmatpush.msra.mxu0 %v3096
    %3123 = vmatpush.msra.mxu0 %v3094
    %3124 = vmatpush.msra.mxu0 %v3092
    %3125 = vmatmul.f32.gmra.mxu0 %v3101
    %v3126 = vpop.f32.mrf.mxu0
    %v3127 = vadd.f32 0.0, %v3126
    %3128 = vmatmul.f32.gmra.mxu0 %v3104
    %v3129 = vpop.f32.mrf.mxu0
    %v3130 = vadd.f32 0.0, %v3129
    %3131 = vmatmul.f32.gmra.mxu0 %v3107
    %v3132 = vpop.f32.mrf.mxu0
    %v3133 = vadd.f32 0.0, %v3132
    %3134 = vdwg.mxu0
    %3135 = vrot.lane.b32.xlu0 %v2605, 104
    %v3136 = vpop.permute.xlu0 %3135
    %3137 = vrot.lane.b32.xlu0 %v2608, 104
    %v3138 = vpop.permute.xlu0 %3137
    %3139 = vrot.lane.b32.xlu0 %v2611, 104
    %v3140 = vpop.permute.xlu0 %3139
    %3141 = vrot.lane.b32.xlu0 %v2605, 72
    %v3142 = vpop.permute.xlu0 %3141
    %3143 = vrot.lane.b32.xlu0 %v2608, 72
    %v3144 = vpop.permute.xlu0 %3143
    %3145 = vrot.lane.b32.xlu0 %v2611, 72
    %v3146 = vpop.permute.xlu0 %3145
    %v3147 = vsel %vm351, %v3136, 0
    %v3149 = vsel %vm351, %v3138, 0
    %v3151 = vsel %vm351, %v3140, 0
    %v3153 = vsel %vm351, %v3142, 0
    %v3155 = vsel %vm351, %v3144, 0
    %v3157 = vsel %vm351, %v3146, 0
    %3159 = vmatpush.xpose.msra.mxu0 0.0
    %3160 = vmatpush.xpose.msra.mxu0 0.0
    %3161 = vmatpush.xpose.msra.mxu0 0.0
    %3162 = vmatpush.xpose.msra.mxu0 0.0
    %3163 = vmatpush.xpose.msra.mxu0 0.0
    %3164 = vmatpush.xpose.msra.mxu0 0.0
    %3165 = vmatpush.xpose.msra.mxu0 0.0
    %3166 = vmatpush.xpose.msra.mxu0 0.0
    %3167 = vmatpush.xpose.msra.mxu0 0.0
    %3168 = vmatpush.xpose.msra.mxu0 0.0
    %3169 = vmatpush.xpose.msra.mxu0 0.0
    %3170 = vmatpush.xpose.msra.mxu0 0.0
    %3171 = vmatpush.xpose.msra.mxu0 0.0
    %3172 = vmatpush.xpose.msra.mxu0 %v3157
    %3173 = vmatpush.xpose.msra.mxu0 %v3155
    %3174 = vmatpush.xpose.msra.mxu0 %v3153
    %3175 = vmatmul.f32.gmra.mxu0 %v3147
    %v3176 = vpop.f32.mrf.mxu0
    %v3177 = vadd.f32 0.0, %v3176
    %3178 = vmatmul.f32.gmra.mxu0 %v3149
    %v3179 = vpop.f32.mrf.mxu0
    %v3180 = vadd.f32 0.0, %v3179
    %3181 = vmatmul.f32.gmra.mxu0 %v3151
    %v3182 = vpop.f32.mrf.mxu0
    %v3183 = vadd.f32 0.0, %v3182
    %3184 = vdwg.mxu0
    %v3185 = vmul.f32 %v3177, 0.35355338
    %v3186 = vmul.f32 %v3180, 0.35355338
    %v3187 = vmul.f32 %v3183, 0.35355338
    %v3188 = vadd.f32 %v3185, %v101
    %v3189 = vadd.f32 %v3186, %v101
    %v3190 = vadd.f32 %v3187, %v101
    %v3191 = vsel %vm396, %v3188, -inf
    %3192 = vmax.xlane.f32.xlu0 %v3191
    %v3193 = vpop.xlane.xlu0 %3192
    %v3194 = vsel %vm396, %v3189, -inf
    %3195 = vmax.xlane.f32.xlu0 %v3194
    %v3196 = vpop.xlane.xlu0 %3195
    %v3197 = vsel %vm396, %v3190, -inf
    %3198 = vmax.xlane.f32.xlu0 %v3197
    %v3199 = vpop.xlane.xlu0 %3198
    %v3200 = vsub.f32 %v3188, %v3193
    %v3201 = vsub.f32 %v3189, %v3196
    %v3202 = vsub.f32 %v3190, %v3199
    %v3203 = vmul.f32 %v3200, 1.442695
    %v3204 = vpow.pop %v3203
    %v3205 = vmul.f32 %v3201, 1.442695
    %v3206 = vpow.pop %v3205
    %v3207 = vmul.f32 %v3202, 1.442695
    %v3208 = vpow.pop %v3207
    %v3209 = vsel %vm396, %v3204, 0.0
    %3210 = vadd.xlane.f32.xlu0 %v3209
    %v3211 = vpop.xlane.xlu0 %3210
    %v3212 = vsel %vm396, %v3206, 0.0
    %3213 = vadd.xlane.f32.xlu0 %v3212
    %v3214 = vpop.xlane.xlu0 %3213
    %v3215 = vsel %vm396, %v3208, 0.0
    %3216 = vadd.xlane.f32.xlu0 %v3215
    %v3217 = vpop.xlane.xlu0 %3216
    %v3218 = vrcp.pop %v3211
    %v3219 = vmul.f32 %v3211, %v3218
    %v3220 = vsub.f32 1.0, %v3219
    %v3221 = vmul.f32 %v3218, %v3220
    %v3222 = vadd.f32 %v3218, %v3221
    %vm3223 = vweird.f32 %v3211
    %vm3224 = vweird.f32 %v3218
    %vm3225 = vmor %vm3223, %vm3224
    %v3226 = vsel %vm3225, %v3218, %v3222
    %v3227 = vand.u32 2147483647, %v3211
    %vm3228 = vcmp.eq.f32.partialorder %v3227, 8.507059e+37
    %v3229 = vand.u32 %v3211, 2147483648
    %v3230 = vor.u32 1.1754944e-38, %v3229
    %v3231 = vsel %vm3228, %v3230, %v3226
    %v3232 = vmul.f32 %v3204, %v3231
    %v3233 = vrcp.pop %v3214
    %v3234 = vmul.f32 %v3214, %v3233
    %v3235 = vsub.f32 1.0, %v3234
    %v3236 = vmul.f32 %v3233, %v3235
    %v3237 = vadd.f32 %v3233, %v3236
    %vm3238 = vweird.f32 %v3214
    %vm3239 = vweird.f32 %v3233
    %vm3240 = vmor %vm3238, %vm3239
    %v3241 = vsel %vm3240, %v3233, %v3237
    %v3242 = vand.u32 2147483647, %v3214
    %vm3243 = vcmp.eq.f32.partialorder %v3242, 8.507059e+37
    %v3244 = vand.u32 %v3214, 2147483648
    %v3245 = vor.u32 1.1754944e-38, %v3244
    %v3246 = vsel %vm3243, %v3245, %v3241
    %v3247 = vmul.f32 %v3206, %v3246
    %v3248 = vrcp.pop %v3217
    %v3249 = vmul.f32 %v3217, %v3248
    %v3250 = vsub.f32 1.0, %v3249
    %v3251 = vmul.f32 %v3248, %v3250
    %v3252 = vadd.f32 %v3248, %v3251
    %vm3253 = vweird.f32 %v3217
    %vm3254 = vweird.f32 %v3248
    %vm3255 = vmor %vm3253, %vm3254
    %v3256 = vsel %vm3255, %v3248, %v3252
    %v3257 = vand.u32 2147483647, %v3217
    %vm3258 = vcmp.eq.f32.partialorder %v3257, 8.507059e+37
    %v3259 = vand.u32 %v3217, 2147483648
    %v3260 = vor.u32 1.1754944e-38, %v3259
    %v3261 = vsel %vm3258, %v3260, %v3256
    %v3262 = vmul.f32 %v3208, %v3261
    %3263 = vrot.lane.b32.xlu0 %v2605, 40
    %v3264 = vpop.permute.xlu0 %3263
    %3265 = vrot.lane.b32.xlu0 %v2608, 40
    %v3266 = vpop.permute.xlu0 %3265
    %3267 = vrot.lane.b32.xlu0 %v2611, 40
    %v3268 = vpop.permute.xlu0 %3267
    %v3273 = vsel %vm396, %v3232, 0
    %v3276 = vsel %vm396, %v3247, 0
    %v3279 = vsel %vm396, %v3262, 0
    %3281 = vmatpush.msra.mxu0 0.0
    %3282 = vmatpush.msra.mxu0 0.0
    %3283 = vmatpush.msra.mxu0 0.0
    %3284 = vmatpush.msra.mxu0 0.0
    %3285 = vmatpush.msra.mxu0 0.0
    %3286 = vmatpush.msra.mxu0 0.0
    %3287 = vmatpush.msra.mxu0 0.0
    %3288 = vmatpush.msra.mxu0 0.0
    %3289 = vmatpush.msra.mxu0 0.0
    %3290 = vmatpush.msra.mxu0 0.0
    %3291 = vmatpush.msra.mxu0 0.0
    %3292 = vmatpush.msra.mxu0 0.0
    %3293 = vmatpush.msra.mxu0 0.0
    %3294 = vmatpush.msra.mxu0 %v3268
    %3295 = vmatpush.msra.mxu0 %v3266
    %3296 = vmatpush.msra.mxu0 %v3264
    %3297 = vmatmul.f32.gmra.mxu0 %v3273
    %v3298 = vpop.f32.mrf.mxu0
    %v3299 = vadd.f32 0.0, %v3298
    %3300 = vmatmul.f32.gmra.mxu0 %v3276
    %v3301 = vpop.f32.mrf.mxu0
    %v3302 = vadd.f32 0.0, %v3301
    %3303 = vmatmul.f32.gmra.mxu0 %v3279
    %v3304 = vpop.f32.mrf.mxu0
    %v3305 = vadd.f32 0.0, %v3304
    %3306 = vdwg.mxu0
    %3310 = vrot.lane.b32.xlu0 %v2955, 8
    %v3311 = vpop.permute.xlu0 %3310
    %3312 = vrot.lane.b32.xlu0 %v2958, 8
    %v3313 = vpop.permute.xlu0 %3312
    %3314 = vrot.lane.b32.xlu0 %v2961, 8
    %v3315 = vpop.permute.xlu0 %3314
    %3322 = vrot.lane.b32.xlu0 %v3127, 16
    %v3323 = vpop.permute.xlu0 %3322
    %3324 = vrot.lane.b32.xlu0 %v3130, 16
    %v3325 = vpop.permute.xlu0 %3324
    %3326 = vrot.lane.b32.xlu0 %v3133, 16
    %v3327 = vpop.permute.xlu0 %3326
    %3334 = vrot.lane.b32.xlu0 %v3299, 24
    %v3335 = vpop.permute.xlu0 %3334
    %3336 = vrot.lane.b32.xlu0 %v3302, 24
    %v3337 = vpop.permute.xlu0 %3336
    %3338 = vrot.lane.b32.xlu0 %v3305, 24
    %v3339 = vpop.permute.xlu0 %3338
    %v3343 = vsel %vm351, %v2783, %v3311
    %v3344 = vsel %vm351, %v2786, %v3313
    %v3345 = vsel %vm351, %v2789, %v3315
    %v3346 = vsel %vm1068, %v3343, %v3323
    %v3347 = vsel %vm1068, %v3344, %v3325
    %v3348 = vsel %vm1068, %v3345, %v3327
    %v3349 = vsel %vm396, %v3346, %v3335
    %v3350 = vsel %vm396, %v3347, %v3337
    %v3351 = vsel %vm396, %v3348, %v3339
    %3355 = vrot.lane.b32.xlu0 %v2614, 96
    %v3356 = vpop.permute.xlu0 %3355
    %3357 = vrot.lane.b32.xlu0 %v2617, 96
    %v3358 = vpop.permute.xlu0 %3357
    %3359 = vrot.lane.b32.xlu0 %v2620, 96
    %v3360 = vpop.permute.xlu0 %3359
    %v3361 = vsel %vm351, %v2614, 0
    %v3363 = vsel %vm351, %v2617, 0
    %v3365 = vsel %vm351, %v2620, 0
    %v3367 = vsel %vm351, %v3356, 0
    %v3369 = vsel %vm351, %v3358, 0
    %v3371 = vsel %vm351, %v3360, 0
    %3373 = vmatpush.xpose.msra.mxu0 0.0
    %3374 = vmatpush.xpose.msra.mxu0 0.0
    %3375 = vmatpush.xpose.msra.mxu0 0.0
    %3376 = vmatpush.xpose.msra.mxu0 0.0
    %3377 = vmatpush.xpose.msra.mxu0 0.0
    %3378 = vmatpush.xpose.msra.mxu0 0.0
    %3379 = vmatpush.xpose.msra.mxu0 0.0
    %3380 = vmatpush.xpose.msra.mxu0 0.0
    %3381 = vmatpush.xpose.msra.mxu0 0.0
    %3382 = vmatpush.xpose.msra.mxu0 0.0
    %3383 = vmatpush.xpose.msra.mxu0 0.0
    %3384 = vmatpush.xpose.msra.mxu0 0.0
    %3385 = vmatpush.xpose.msra.mxu0 0.0
    %3386 = vmatpush.xpose.msra.mxu0 %v3371
    %3387 = vmatpush.xpose.msra.mxu0 %v3369
    %3388 = vmatpush.xpose.msra.mxu0 %v3367
    %3389 = vmatmul.f32.gmra.mxu0 %v3361
    %v3390 = vpop.f32.mrf.mxu0
    %v3391 = vadd.f32 0.0, %v3390
    %3392 = vmatmul.f32.gmra.mxu0 %v3363
    %v3393 = vpop.f32.mrf.mxu0
    %v3394 = vadd.f32 0.0, %v3393
    %3395 = vmatmul.f32.gmra.mxu0 %v3365
    %v3396 = vpop.f32.mrf.mxu0
    %v3397 = vadd.f32 0.0, %v3396
    %3398 = vdwg.mxu0
    %v3399 = vmul.f32 %v3391, 0.35355338
    %v3400 = vmul.f32 %v3394, 0.35355338
    %v3401 = vmul.f32 %v3397, 0.35355338
    %v3402 = vadd.f32 %v3399, %v101
    %v3403 = vadd.f32 %v3400, %v101
    %v3404 = vadd.f32 %v3401, %v101
    %v3405 = vsel %vm396, %v3402, -inf
    %3406 = vmax.xlane.f32.xlu0 %v3405
    %v3407 = vpop.xlane.xlu0 %3406
    %v3408 = vsel %vm396, %v3403, -inf
    %3409 = vmax.xlane.f32.xlu0 %v3408
    %v3410 = vpop.xlane.xlu0 %3409
    %v3411 = vsel %vm396, %v3404, -inf
    %3412 = vmax.xlane.f32.xlu0 %v3411
    %v3413 = vpop.xlane.xlu0 %3412
    %v3414 = vsub.f32 %v3402, %v3407
    %v3415 = vsub.f32 %v3403, %v3410
    %v3416 = vsub.f32 %v3404, %v3413
    %v3417 = vmul.f32 %v3414, 1.442695
    %v3418 = vpow.pop %v3417
    %v3419 = vmul.f32 %v3415, 1.442695
    %v3420 = vpow.pop %v3419
    %v3421 = vmul.f32 %v3416, 1.442695
    %v3422 = vpow.pop %v3421
    %v3423 = vsel %vm396, %v3418, 0.0
    %3424 = vadd.xlane.f32.xlu0 %v3423
    %v3425 = vpop.xlane.xlu0 %3424
    %v3426 = vsel %vm396, %v3420, 0.0
    %3427 = vadd.xlane.f32.xlu0 %v3426
    %v3428 = vpop.xlane.xlu0 %3427
    %v3429 = vsel %vm396, %v3422, 0.0
    %3430 = vadd.xlane.f32.xlu0 %v3429
    %v3431 = vpop.xlane.xlu0 %3430
    %v3432 = vrcp.pop %v3425
    %v3433 = vmul.f32 %v3425, %v3432
    %v3434 = vsub.f32 1.0, %v3433
    %v3435 = vmul.f32 %v3432, %v3434
    %v3436 = vadd.f32 %v3432, %v3435
    %vm3437 = vweird.f32 %v3425
    %vm3438 = vweird.f32 %v3432
    %vm3439 = vmor %vm3437, %vm3438
    %v3440 = vsel %vm3439, %v3432, %v3436
    %v3441 = vand.u32 2147483647, %v3425
    %vm3442 = vcmp.eq.f32.partialorder %v3441, 8.507059e+37
    %v3443 = vand.u32 %v3425, 2147483648
    %v3444 = vor.u32 1.1754944e-38, %v3443
    %v3445 = vsel %vm3442, %v3444, %v3440
    %v3446 = vmul.f32 %v3418, %v3445
    %v3447 = vrcp.pop %v3428
    %v3448 = vmul.f32 %v3428, %v3447
    %v3449 = vsub.f32 1.0, %v3448
    %v3450 = vmul.f32 %v3447, %v3449
    %v3451 = vadd.f32 %v3447, %v3450
    %vm3452 = vweird.f32 %v3428
    %vm3453 = vweird.f32 %v3447
    %vm3454 = vmor %vm3452, %vm3453
    %v3455 = vsel %vm3454, %v3447, %v3451
    %v3456 = vand.u32 2147483647, %v3428
    %vm3457 = vcmp.eq.f32.partialorder %v3456, 8.507059e+37
    %v3458 = vand.u32 %v3428, 2147483648
    %v3459 = vor.u32 1.1754944e-38, %v3458
    %v3460 = vsel %vm3457, %v3459, %v3455
    %v3461 = vmul.f32 %v3420, %v3460
    %v3462 = vrcp.pop %v3431
    %v3463 = vmul.f32 %v3431, %v3462
    %v3464 = vsub.f32 1.0, %v3463
    %v3465 = vmul.f32 %v3462, %v3464
    %v3466 = vadd.f32 %v3462, %v3465
    %vm3467 = vweird.f32 %v3431
    %vm3468 = vweird.f32 %v3462
    %vm3469 = vmor %vm3467, %vm3468
    %v3470 = vsel %vm3469, %v3462, %v3466
    %v3471 = vand.u32 2147483647, %v3431
    %vm3472 = vcmp.eq.f32.partialorder %v3471, 8.507059e+37
    %v3473 = vand.u32 %v3431, 2147483648
    %v3474 = vor.u32 1.1754944e-38, %v3473
    %v3475 = vsel %vm3472, %v3474, %v3470
    %v3476 = vmul.f32 %v3422, %v3475
    %3477 = vrot.lane.b32.xlu0 %v2614, 64
    %v3478 = vpop.permute.xlu0 %3477
    %3479 = vrot.lane.b32.xlu0 %v2617, 64
    %v3480 = vpop.permute.xlu0 %3479
    %3481 = vrot.lane.b32.xlu0 %v2620, 64
    %v3482 = vpop.permute.xlu0 %3481
    %v3487 = vsel %vm396, %v3446, 0
    %v3490 = vsel %vm396, %v3461, 0
    %v3493 = vsel %vm396, %v3476, 0
    %3495 = vmatpush.msra.mxu0 0.0
    %3496 = vmatpush.msra.mxu0 0.0
    %3497 = vmatpush.msra.mxu0 0.0
    %3498 = vmatpush.msra.mxu0 0.0
    %3499 = vmatpush.msra.mxu0 0.0
    %3500 = vmatpush.msra.mxu0 0.0
    %3501 = vmatpush.msra.mxu0 0.0
    %3502 = vmatpush.msra.mxu0 0.0
    %3503 = vmatpush.msra.mxu0 0.0
    %3504 = vmatpush.msra.mxu0 0.0
    %3505 = vmatpush.msra.mxu0 0.0
    %3506 = vmatpush.msra.mxu0 0.0
    %3507 = vmatpush.msra.mxu0 0.0
    %3508 = vmatpush.msra.mxu0 %v3482
    %3509 = vmatpush.msra.mxu0 %v3480
    %3510 = vmatpush.msra.mxu0 %v3478
    %3511 = vmatmul.f32.gmra.mxu0 %v3487
    %v3512 = vpop.f32.mrf.mxu0
    %v3513 = vadd.f32 0.0, %v3512
    %3514 = vmatmul.f32.gmra.mxu0 %v3490
    %v3515 = vpop.f32.mrf.mxu0
    %v3516 = vadd.f32 0.0, %v3515
    %3517 = vmatmul.f32.gmra.mxu0 %v3493
    %v3518 = vpop.f32.mrf.mxu0
    %v3519 = vadd.f32 0.0, %v3518
    %3520 = vdwg.mxu0
    %3521 = vrot.lane.b32.xlu0 %v2614, 120
    %v3522 = vpop.permute.xlu0 %3521
    %3523 = vrot.lane.b32.xlu0 %v2617, 120
    %v3524 = vpop.permute.xlu0 %3523
    %3525 = vrot.lane.b32.xlu0 %v2620, 120
    %v3526 = vpop.permute.xlu0 %3525
    %3527 = vrot.lane.b32.xlu0 %v2614, 88
    %v3528 = vpop.permute.xlu0 %3527
    %3529 = vrot.lane.b32.xlu0 %v2617, 88
    %v3530 = vpop.permute.xlu0 %3529
    %3531 = vrot.lane.b32.xlu0 %v2620, 88
    %v3532 = vpop.permute.xlu0 %3531
    %v3533 = vsel %vm351, %v3522, 0
    %v3535 = vsel %vm351, %v3524, 0
    %v3537 = vsel %vm351, %v3526, 0
    %v3539 = vsel %vm351, %v3528, 0
    %v3541 = vsel %vm351, %v3530, 0
    %v3543 = vsel %vm351, %v3532, 0
    %3545 = vmatpush.xpose.msra.mxu0 0.0
    %3546 = vmatpush.xpose.msra.mxu0 0.0
    %3547 = vmatpush.xpose.msra.mxu0 0.0
    %3548 = vmatpush.xpose.msra.mxu0 0.0
    %3549 = vmatpush.xpose.msra.mxu0 0.0
    %3550 = vmatpush.xpose.msra.mxu0 0.0
    %3551 = vmatpush.xpose.msra.mxu0 0.0
    %3552 = vmatpush.xpose.msra.mxu0 0.0
    %3553 = vmatpush.xpose.msra.mxu0 0.0
    %3554 = vmatpush.xpose.msra.mxu0 0.0
    %3555 = vmatpush.xpose.msra.mxu0 0.0
    %3556 = vmatpush.xpose.msra.mxu0 0.0
    %3557 = vmatpush.xpose.msra.mxu0 0.0
    %3558 = vmatpush.xpose.msra.mxu0 %v3543
    %3559 = vmatpush.xpose.msra.mxu0 %v3541
    %3560 = vmatpush.xpose.msra.mxu0 %v3539
    %3561 = vmatmul.f32.gmra.mxu0 %v3533
    %v3562 = vpop.f32.mrf.mxu0
    %v3563 = vadd.f32 0.0, %v3562
    %3564 = vmatmul.f32.gmra.mxu0 %v3535
    %v3565 = vpop.f32.mrf.mxu0
    %v3566 = vadd.f32 0.0, %v3565
    %3567 = vmatmul.f32.gmra.mxu0 %v3537
    %v3568 = vpop.f32.mrf.mxu0
    %v3569 = vadd.f32 0.0, %v3568
    %3570 = vdwg.mxu0
    %v3571 = vmul.f32 %v3563, 0.35355338
    %v3572 = vmul.f32 %v3566, 0.35355338
    %v3573 = vmul.f32 %v3569, 0.35355338
    %v3574 = vadd.f32 %v3571, %v101
    %v3575 = vadd.f32 %v3572, %v101
    %v3576 = vadd.f32 %v3573, %v101
    %v3577 = vsel %vm396, %v3574, -inf
    %3578 = vmax.xlane.f32.xlu0 %v3577
    %v3579 = vpop.xlane.xlu0 %3578
    %v3580 = vsel %vm396, %v3575, -inf
    %3581 = vmax.xlane.f32.xlu0 %v3580
    %v3582 = vpop.xlane.xlu0 %3581
    %v3583 = vsel %vm396, %v3576, -inf
    %3584 = vmax.xlane.f32.xlu0 %v3583
    %v3585 = vpop.xlane.xlu0 %3584
    %v3586 = vsub.f32 %v3574, %v3579
    %v3587 = vsub.f32 %v3575, %v3582
    %v3588 = vsub.f32 %v3576, %v3585
    %v3589 = vmul.f32 %v3586, 1.442695
    %v3590 = vpow.pop %v3589
    %v3591 = vmul.f32 %v3587, 1.442695
    %v3592 = vpow.pop %v3591
    %v3593 = vmul.f32 %v3588, 1.442695
    %v3594 = vpow.pop %v3593
    %v3595 = vsel %vm396, %v3590, 0.0
    %3596 = vadd.xlane.f32.xlu0 %v3595
    %v3597 = vpop.xlane.xlu0 %3596
    %v3598 = vsel %vm396, %v3592, 0.0
    %3599 = vadd.xlane.f32.xlu0 %v3598
    %v3600 = vpop.xlane.xlu0 %3599
    %v3601 = vsel %vm396, %v3594, 0.0
    %3602 = vadd.xlane.f32.xlu0 %v3601
    %v3603 = vpop.xlane.xlu0 %3602
    %v3604 = vrcp.pop %v3597
    %v3605 = vmul.f32 %v3597, %v3604
    %v3606 = vsub.f32 1.0, %v3605
    %v3607 = vmul.f32 %v3604, %v3606
    %v3608 = vadd.f32 %v3604, %v3607
    %vm3609 = vweird.f32 %v3597
    %vm3610 = vweird.f32 %v3604
    %vm3611 = vmor %vm3609, %vm3610
    %v3612 = vsel %vm3611, %v3604, %v3608
    %v3613 = vand.u32 2147483647, %v3597
    %vm3614 = vcmp.eq.f32.partialorder %v3613, 8.507059e+37
    %v3615 = vand.u32 %v3597, 2147483648
    %v3616 = vor.u32 1.1754944e-38, %v3615
    %v3617 = vsel %vm3614, %v3616, %v3612
    %v3618 = vmul.f32 %v3590, %v3617
    %v3619 = vrcp.pop %v3600
    %v3620 = vmul.f32 %v3600, %v3619
    %v3621 = vsub.f32 1.0, %v3620
    %v3622 = vmul.f32 %v3619, %v3621
    %v3623 = vadd.f32 %v3619, %v3622
    %vm3624 = vweird.f32 %v3600
    %vm3625 = vweird.f32 %v3619
    %vm3626 = vmor %vm3624, %vm3625
    %v3627 = vsel %vm3626, %v3619, %v3623
    %v3628 = vand.u32 2147483647, %v3600
    %vm3629 = vcmp.eq.f32.partialorder %v3628, 8.507059e+37
    %v3630 = vand.u32 %v3600, 2147483648
    %v3631 = vor.u32 1.1754944e-38, %v3630
    %v3632 = vsel %vm3629, %v3631, %v3627
    %v3633 = vmul.f32 %v3592, %v3632
    %v3634 = vrcp.pop %v3603
    %v3635 = vmul.f32 %v3603, %v3634
    %v3636 = vsub.f32 1.0, %v3635
    %v3637 = vmul.f32 %v3634, %v3636
    %v3638 = vadd.f32 %v3634, %v3637
    %vm3639 = vweird.f32 %v3603
    %vm3640 = vweird.f32 %v3634
    %vm3641 = vmor %vm3639, %vm3640
    %v3642 = vsel %vm3641, %v3634, %v3638
    %v3643 = vand.u32 2147483647, %v3603
    %vm3644 = vcmp.eq.f32.partialorder %v3643, 8.507059e+37
    %v3645 = vand.u32 %v3603, 2147483648
    %v3646 = vor.u32 1.1754944e-38, %v3645
    %v3647 = vsel %vm3644, %v3646, %v3642
    %v3648 = vmul.f32 %v3594, %v3647
    %3649 = vrot.lane.b32.xlu0 %v2614, 56
    %v3650 = vpop.permute.xlu0 %3649
    %3651 = vrot.lane.b32.xlu0 %v2617, 56
    %v3652 = vpop.permute.xlu0 %3651
    %3653 = vrot.lane.b32.xlu0 %v2620, 56
    %v3654 = vpop.permute.xlu0 %3653
    %v3659 = vsel %vm396, %v3618, 0
    %v3662 = vsel %vm396, %v3633, 0
    %v3665 = vsel %vm396, %v3648, 0
    %3667 = vmatpush.msra.mxu0 0.0
    %3668 = vmatpush.msra.mxu0 0.0
    %3669 = vmatpush.msra.mxu0 0.0
    %3670 = vmatpush.msra.mxu0 0.0
    %3671 = vmatpush.msra.mxu0 0.0
    %3672 = vmatpush.msra.mxu0 0.0
    %3673 = vmatpush.msra.mxu0 0.0
    %3674 = vmatpush.msra.mxu0 0.0
    %3675 = vmatpush.msra.mxu0 0.0
    %3676 = vmatpush.msra.mxu0 0.0
    %3677 = vmatpush.msra.mxu0 0.0
    %3678 = vmatpush.msra.mxu0 0.0
    %3679 = vmatpush.msra.mxu0 0.0
    %3680 = vmatpush.msra.mxu0 %v3654
    %3681 = vmatpush.msra.mxu0 %v3652
    %3682 = vmatpush.msra.mxu0 %v3650
    %3683 = vmatmul.f32.gmra.mxu0 %v3659
    %v3684 = vpop.f32.mrf.mxu0
    %v3685 = vadd.f32 0.0, %v3684
    %3686 = vmatmul.f32.gmra.mxu0 %v3662
    %v3687 = vpop.f32.mrf.mxu0
    %v3688 = vadd.f32 0.0, %v3687
    %3689 = vmatmul.f32.gmra.mxu0 %v3665
    %v3690 = vpop.f32.mrf.mxu0
    %v3691 = vadd.f32 0.0, %v3690
    %3692 = vdwg.mxu0
    %3693 = vrot.lane.b32.xlu0 %v2614, 112
    %v3694 = vpop.permute.xlu0 %3693
    %3695 = vrot.lane.b32.xlu0 %v2617, 112
    %v3696 = vpop.permute.xlu0 %3695
    %3697 = vrot.lane.b32.xlu0 %v2620, 112
    %v3698 = vpop.permute.xlu0 %3697
    %3699 = vrot.lane.b32.xlu0 %v2614, 80
    %v3700 = vpop.permute.xlu0 %3699
    %3701 = vrot.lane.b32.xlu0 %v2617, 80
    %v3702 = vpop.permute.xlu0 %3701
    %3703 = vrot.lane.b32.xlu0 %v2620, 80
    %v3704 = vpop.permute.xlu0 %3703
    %v3705 = vsel %vm351, %v3694, 0
    %v3707 = vsel %vm351, %v3696, 0
    %v3709 = vsel %vm351, %v3698, 0
    %v3711 = vsel %vm351, %v3700, 0
    %v3713 = vsel %vm351, %v3702, 0
    %v3715 = vsel %vm351, %v3704, 0
    %3717 = vmatpush.xpose.msra.mxu0 0.0
    %3718 = vmatpush.xpose.msra.mxu0 0.0
    %3719 = vmatpush.xpose.msra.mxu0 0.0
    %3720 = vmatpush.xpose.msra.mxu0 0.0
    %3721 = vmatpush.xpose.msra.mxu0 0.0
    %3722 = vmatpush.xpose.msra.mxu0 0.0
    %3723 = vmatpush.xpose.msra.mxu0 0.0
    %3724 = vmatpush.xpose.msra.mxu0 0.0
    %3725 = vmatpush.xpose.msra.mxu0 0.0
    %3726 = vmatpush.xpose.msra.mxu0 0.0
    %3727 = vmatpush.xpose.msra.mxu0 0.0
    %3728 = vmatpush.xpose.msra.mxu0 0.0
    %3729 = vmatpush.xpose.msra.mxu0 0.0
    %3730 = vmatpush.xpose.msra.mxu0 %v3715
    %3731 = vmatpush.xpose.msra.mxu0 %v3713
    %3732 = vmatpush.xpose.msra.mxu0 %v3711
    %3733 = vmatmul.f32.gmra.mxu0 %v3705
    %v3734 = vpop.f32.mrf.mxu0
    %v3735 = vadd.f32 0.0, %v3734
    %3736 = vmatmul.f32.gmra.mxu0 %v3707
    %v3737 = vpop.f32.mrf.mxu0
    %v3738 = vadd.f32 0.0, %v3737
    %3739 = vmatmul.f32.gmra.mxu0 %v3709
    %v3740 = vpop.f32.mrf.mxu0
    %v3741 = vadd.f32 0.0, %v3740
    %3742 = vdwg.mxu0
    %v3743 = vmul.f32 %v3735, 0.35355338
    %v3744 = vmul.f32 %v3738, 0.35355338
    %v3745 = vmul.f32 %v3741, 0.35355338
    %v3746 = vadd.f32 %v3743, %v101
    %v3747 = vadd.f32 %v3744, %v101
    %v3748 = vadd.f32 %v3745, %v101
    %v3749 = vsel %vm396, %v3746, -inf
    %3750 = vmax.xlane.f32.xlu0 %v3749
    %v3751 = vpop.xlane.xlu0 %3750
    %v3752 = vsel %vm396, %v3747, -inf
    %3753 = vmax.xlane.f32.xlu0 %v3752
    %v3754 = vpop.xlane.xlu0 %3753
    %v3755 = vsel %vm396, %v3748, -inf
    %3756 = vmax.xlane.f32.xlu0 %v3755
    %v3757 = vpop.xlane.xlu0 %3756
    %v3758 = vsub.f32 %v3746, %v3751
    %v3759 = vsub.f32 %v3747, %v3754
    %v3760 = vsub.f32 %v3748, %v3757
    %v3761 = vmul.f32 %v3758, 1.442695
    %v3762 = vpow.pop %v3761
    %v3763 = vmul.f32 %v3759, 1.442695
    %v3764 = vpow.pop %v3763
    %v3765 = vmul.f32 %v3760, 1.442695
    %v3766 = vpow.pop %v3765
    %v3767 = vsel %vm396, %v3762, 0.0
    %3768 = vadd.xlane.f32.xlu0 %v3767
    %v3769 = vpop.xlane.xlu0 %3768
    %v3770 = vsel %vm396, %v3764, 0.0
    %3771 = vadd.xlane.f32.xlu0 %v3770
    %v3772 = vpop.xlane.xlu0 %3771
    %v3773 = vsel %vm396, %v3766, 0.0
    %3774 = vadd.xlane.f32.xlu0 %v3773
    %v3775 = vpop.xlane.xlu0 %3774
    %v3776 = vrcp.pop %v3769
    %v3777 = vmul.f32 %v3769, %v3776
    %v3778 = vsub.f32 1.0, %v3777
    %v3779 = vmul.f32 %v3776, %v3778
    %v3780 = vadd.f32 %v3776, %v3779
    %vm3781 = vweird.f32 %v3769
    %vm3782 = vweird.f32 %v3776
    %vm3783 = vmor %vm3781, %vm3782
    %v3784 = vsel %vm3783, %v3776, %v3780
    %v3785 = vand.u32 2147483647, %v3769
    %vm3786 = vcmp.eq.f32.partialorder %v3785, 8.507059e+37
    %v3787 = vand.u32 %v3769, 2147483648
    %v3788 = vor.u32 1.1754944e-38, %v3787
    %v3789 = vsel %vm3786, %v3788, %v3784
    %v3790 = vmul.f32 %v3762, %v3789
    %v3791 = vrcp.pop %v3772
    %v3792 = vmul.f32 %v3772, %v3791
    %v3793 = vsub.f32 1.0, %v3792
    %v3794 = vmul.f32 %v3791, %v3793
    %v3795 = vadd.f32 %v3791, %v3794
    %vm3796 = vweird.f32 %v3772
    %vm3797 = vweird.f32 %v3791
    %vm3798 = vmor %vm3796, %vm3797
    %v3799 = vsel %vm3798, %v3791, %v3795
    %v3800 = vand.u32 2147483647, %v3772
    %vm3801 = vcmp.eq.f32.partialorder %v3800, 8.507059e+37
    %v3802 = vand.u32 %v3772, 2147483648
    %v3803 = vor.u32 1.1754944e-38, %v3802
    %v3804 = vsel %vm3801, %v3803, %v3799
    %v3805 = vmul.f32 %v3764, %v3804
    %v3806 = vrcp.pop %v3775
    %v3807 = vmul.f32 %v3775, %v3806
    %v3808 = vsub.f32 1.0, %v3807
    %v3809 = vmul.f32 %v3806, %v3808
    %v3810 = vadd.f32 %v3806, %v3809
    %vm3811 = vweird.f32 %v3775
    %vm3812 = vweird.f32 %v3806
    %vm3813 = vmor %vm3811, %vm3812
    %v3814 = vsel %vm3813, %v3806, %v3810
    %v3815 = vand.u32 2147483647, %v3775
    %vm3816 = vcmp.eq.f32.partialorder %v3815, 8.507059e+37
    %v3817 = vand.u32 %v3775, 2147483648
    %v3818 = vor.u32 1.1754944e-38, %v3817
    %v3819 = vsel %vm3816, %v3818, %v3814
    %v3820 = vmul.f32 %v3766, %v3819
    %3821 = vrot.lane.b32.xlu0 %v2614, 48
    %v3822 = vpop.permute.xlu0 %3821
    %3823 = vrot.lane.b32.xlu0 %v2617, 48
    %v3824 = vpop.permute.xlu0 %3823
    %3825 = vrot.lane.b32.xlu0 %v2620, 48
    %v3826 = vpop.permute.xlu0 %3825
    %v3831 = vsel %vm396, %v3790, 0
    %v3834 = vsel %vm396, %v3805, 0
    %v3837 = vsel %vm396, %v3820, 0
    %3839 = vmatpush.msra.mxu0 0.0
    %3840 = vmatpush.msra.mxu0 0.0
    %3841 = vmatpush.msra.mxu0 0.0
    %3842 = vmatpush.msra.mxu0 0.0
    %3843 = vmatpush.msra.mxu0 0.0
    %3844 = vmatpush.msra.mxu0 0.0
    %3845 = vmatpush.msra.mxu0 0.0
    %3846 = vmatpush.msra.mxu0 0.0
    %3847 = vmatpush.msra.mxu0 0.0
    %3848 = vmatpush.msra.mxu0 0.0
    %3849 = vmatpush.msra.mxu0 0.0
    %3850 = vmatpush.msra.mxu0 0.0
    %3851 = vmatpush.msra.mxu0 0.0
    %3852 = vmatpush.msra.mxu0 %v3826
    %3853 = vmatpush.msra.mxu0 %v3824
    %3854 = vmatpush.msra.mxu0 %v3822
    %3855 = vmatmul.f32.gmra.mxu0 %v3831
    %v3856 = vpop.f32.mrf.mxu0
    %v3857 = vadd.f32 0.0, %v3856
    %3858 = vmatmul.f32.gmra.mxu0 %v3834
    %v3859 = vpop.f32.mrf.mxu0
    %v3860 = vadd.f32 0.0, %v3859
    %3861 = vmatmul.f32.gmra.mxu0 %v3837
    %v3862 = vpop.f32.mrf.mxu0
    %v3863 = vadd.f32 0.0, %v3862
    %3864 = vdwg.mxu0
    %3865 = vrot.lane.b32.xlu0 %v2614, 104
    %v3866 = vpop.permute.xlu0 %3865
    %3867 = vrot.lane.b32.xlu0 %v2617, 104
    %v3868 = vpop.permute.xlu0 %3867
    %3869 = vrot.lane.b32.xlu0 %v2620, 104
    %v3870 = vpop.permute.xlu0 %3869
    %3871 = vrot.lane.b32.xlu0 %v2614, 72
    %v3872 = vpop.permute.xlu0 %3871
    %3873 = vrot.lane.b32.xlu0 %v2617, 72
    %v3874 = vpop.permute.xlu0 %3873
    %3875 = vrot.lane.b32.xlu0 %v2620, 72
    %v3876 = vpop.permute.xlu0 %3875
    %v3877 = vsel %vm351, %v3866, 0
    %v3879 = vsel %vm351, %v3868, 0
    %v3881 = vsel %vm351, %v3870, 0
    %v3883 = vsel %vm351, %v3872, 0
    %v3885 = vsel %vm351, %v3874, 0
    %v3887 = vsel %vm351, %v3876, 0
    %3889 = vmatpush.xpose.msra.mxu0 0.0
    %3890 = vmatpush.xpose.msra.mxu0 0.0
    %3891 = vmatpush.xpose.msra.mxu0 0.0
    %3892 = vmatpush.xpose.msra.mxu0 0.0
    %3893 = vmatpush.xpose.msra.mxu0 0.0
    %3894 = vmatpush.xpose.msra.mxu0 0.0
    %3895 = vmatpush.xpose.msra.mxu0 0.0
    %3896 = vmatpush.xpose.msra.mxu0 0.0
    %3897 = vmatpush.xpose.msra.mxu0 0.0
    %3898 = vmatpush.xpose.msra.mxu0 0.0
    %3899 = vmatpush.xpose.msra.mxu0 0.0
    %3900 = vmatpush.xpose.msra.mxu0 0.0
    %3901 = vmatpush.xpose.msra.mxu0 0.0
    %3902 = vmatpush.xpose.msra.mxu0 %v3887
    %3903 = vmatpush.xpose.msra.mxu0 %v3885
    %3904 = vmatpush.xpose.msra.mxu0 %v3883
    %3905 = vmatmul.f32.gmra.mxu0 %v3877
    %v3906 = vpop.f32.mrf.mxu0
    %v3907 = vadd.f32 0.0, %v3906
    %3908 = vmatmul.f32.gmra.mxu0 %v3879
    %v3909 = vpop.f32.mrf.mxu0
    %v3910 = vadd.f32 0.0, %v3909
    %3911 = vmatmul.f32.gmra.mxu0 %v3881
    %v3912 = vpop.f32.mrf.mxu0
    %v3913 = vadd.f32 0.0, %v3912
    %3914 = vdwg.mxu0
    %v3915 = vmul.f32 %v3907, 0.35355338
    %v3916 = vmul.f32 %v3910, 0.35355338
    %v3917 = vmul.f32 %v3913, 0.35355338
    %v3918 = vadd.f32 %v3915, %v101
    %v3919 = vadd.f32 %v3916, %v101
    %v3920 = vadd.f32 %v3917, %v101
    %v3921 = vsel %vm396, %v3918, -inf
    %3922 = vmax.xlane.f32.xlu0 %v3921
    %v3923 = vpop.xlane.xlu0 %3922
    %v3924 = vsel %vm396, %v3919, -inf
    %3925 = vmax.xlane.f32.xlu0 %v3924
    %v3926 = vpop.xlane.xlu0 %3925
    %v3927 = vsel %vm396, %v3920, -inf
    %3928 = vmax.xlane.f32.xlu0 %v3927
    %v3929 = vpop.xlane.xlu0 %3928
    %v3930 = vsub.f32 %v3918, %v3923
    %v3931 = vsub.f32 %v3919, %v3926
    %v3932 = vsub.f32 %v3920, %v3929
    %v3933 = vmul.f32 %v3930, 1.442695
    %v3934 = vpow.pop %v3933
    %v3935 = vmul.f32 %v3931, 1.442695
    %v3936 = vpow.pop %v3935
    %v3937 = vmul.f32 %v3932, 1.442695
    %v3938 = vpow.pop %v3937
    %v3939 = vsel %vm396, %v3934, 0.0
    %3940 = vadd.xlane.f32.xlu0 %v3939
    %v3941 = vpop.xlane.xlu0 %3940
    %v3942 = vsel %vm396, %v3936, 0.0
    %3943 = vadd.xlane.f32.xlu0 %v3942
    %v3944 = vpop.xlane.xlu0 %3943
    %v3945 = vsel %vm396, %v3938, 0.0
    %3946 = vadd.xlane.f32.xlu0 %v3945
    %v3947 = vpop.xlane.xlu0 %3946
    %v3948 = vrcp.pop %v3941
    %v3949 = vmul.f32 %v3941, %v3948
    %v3950 = vsub.f32 1.0, %v3949
    %v3951 = vmul.f32 %v3948, %v3950
    %v3952 = vadd.f32 %v3948, %v3951
    %vm3953 = vweird.f32 %v3941
    %vm3954 = vweird.f32 %v3948
    %vm3955 = vmor %vm3953, %vm3954
    %v3956 = vsel %vm3955, %v3948, %v3952
    %v3957 = vand.u32 2147483647, %v3941
    %vm3958 = vcmp.eq.f32.partialorder %v3957, 8.507059e+37
    %v3959 = vand.u32 %v3941, 2147483648
    %v3960 = vor.u32 1.1754944e-38, %v3959
    %v3961 = vsel %vm3958, %v3960, %v3956
    %v3962 = vmul.f32 %v3934, %v3961
    %v3963 = vrcp.pop %v3944
    %v3964 = vmul.f32 %v3944, %v3963
    %v3965 = vsub.f32 1.0, %v3964
    %v3966 = vmul.f32 %v3963, %v3965
    %v3967 = vadd.f32 %v3963, %v3966
    %vm3968 = vweird.f32 %v3944
    %vm3969 = vweird.f32 %v3963
    %vm3970 = vmor %vm3968, %vm3969
    %v3971 = vsel %vm3970, %v3963, %v3967
    %v3972 = vand.u32 2147483647, %v3944
    %vm3973 = vcmp.eq.f32.partialorder %v3972, 8.507059e+37
    %v3974 = vand.u32 %v3944, 2147483648
    %v3975 = vor.u32 1.1754944e-38, %v3974
    %v3976 = vsel %vm3973, %v3975, %v3971
    %v3977 = vmul.f32 %v3936, %v3976
    %v3978 = vrcp.pop %v3947
    %v3979 = vmul.f32 %v3947, %v3978
    %v3980 = vsub.f32 1.0, %v3979
    %v3981 = vmul.f32 %v3978, %v3980
    %v3982 = vadd.f32 %v3978, %v3981
    %vm3983 = vweird.f32 %v3947
    %vm3984 = vweird.f32 %v3978
    %vm3985 = vmor %vm3983, %vm3984
    %v3986 = vsel %vm3985, %v3978, %v3982
    %v3987 = vand.u32 2147483647, %v3947
    %vm3988 = vcmp.eq.f32.partialorder %v3987, 8.507059e+37
    %v3989 = vand.u32 %v3947, 2147483648
    %v3990 = vor.u32 1.1754944e-38, %v3989
    %v3991 = vsel %vm3988, %v3990, %v3986
    %v3992 = vmul.f32 %v3938, %v3991
    %3993 = vrot.lane.b32.xlu0 %v2614, 40
    %v3994 = vpop.permute.xlu0 %3993
    %3995 = vrot.lane.b32.xlu0 %v2617, 40
    %v3996 = vpop.permute.xlu0 %3995
    %3997 = vrot.lane.b32.xlu0 %v2620, 40
    %v3998 = vpop.permute.xlu0 %3997
    %v4003 = vsel %vm396, %v3962, 0
    %v4006 = vsel %vm396, %v3977, 0
    %v4009 = vsel %vm396, %v3992, 0
    %4011 = vmatpush.msra.mxu0 0.0
    %4012 = vmatpush.msra.mxu0 0.0
    %4013 = vmatpush.msra.mxu0 0.0
    %4014 = vmatpush.msra.mxu0 0.0
    %4015 = vmatpush.msra.mxu0 0.0
    %4016 = vmatpush.msra.mxu0 0.0
    %4017 = vmatpush.msra.mxu0 0.0
    %4018 = vmatpush.msra.mxu0 0.0
    %4019 = vmatpush.msra.mxu0 0.0
    %4020 = vmatpush.msra.mxu0 0.0
    %4021 = vmatpush.msra.mxu0 0.0
    %4022 = vmatpush.msra.mxu0 0.0
    %4023 = vmatpush.msra.mxu0 0.0
    %4024 = vmatpush.msra.mxu0 %v3998
    %4025 = vmatpush.msra.mxu0 %v3996
    %4026 = vmatpush.msra.mxu0 %v3994
    %4027 = vmatmul.f32.gmra.mxu0 %v4003
    %v4028 = vpop.f32.mrf.mxu0
    %v4029 = vadd.f32 0.0, %v4028
    %4030 = vmatmul.f32.gmra.mxu0 %v4006
    %v4031 = vpop.f32.mrf.mxu0
    %v4032 = vadd.f32 0.0, %v4031
    %4033 = vmatmul.f32.gmra.mxu0 %v4009
    %v4034 = vpop.f32.mrf.mxu0
    %v4035 = vadd.f32 0.0, %v4034
    %4036 = vdwg.mxu0
    %4040 = vrot.lane.b32.xlu0 %v3685, 8
    %v4041 = vpop.permute.xlu0 %4040
    %4042 = vrot.lane.b32.xlu0 %v3688, 8
    %v4043 = vpop.permute.xlu0 %4042
    %4044 = vrot.lane.b32.xlu0 %v3691, 8
    %v4045 = vpop.permute.xlu0 %4044
    %4052 = vrot.lane.b32.xlu0 %v3857, 16
    %v4053 = vpop.permute.xlu0 %4052
    %4054 = vrot.lane.b32.xlu0 %v3860, 16
    %v4055 = vpop.permute.xlu0 %4054
    %4056 = vrot.lane.b32.xlu0 %v3863, 16
    %v4057 = vpop.permute.xlu0 %4056
    %4064 = vrot.lane.b32.xlu0 %v4029, 24
    %v4065 = vpop.permute.xlu0 %4064
    %4066 = vrot.lane.b32.xlu0 %v4032, 24
    %v4067 = vpop.permute.xlu0 %4066
    %4068 = vrot.lane.b32.xlu0 %v4035, 24
    %v4069 = vpop.permute.xlu0 %4068
    %v4073 = vsel %vm351, %v3513, %v4041
    %v4074 = vsel %vm351, %v3516, %v4043
    %v4075 = vsel %vm351, %v3519, %v4045
    %v4076 = vsel %vm1068, %v4073, %v4053
    %v4077 = vsel %vm1068, %v4074, %v4055
    %v4078 = vsel %vm1068, %v4075, %v4057
    %v4079 = vsel %vm396, %v4076, %v4065
    %v4080 = vsel %vm396, %v4077, %v4067
    %v4081 = vsel %vm396, %v4078, %v4069
    %v4082 = vperm.slane %v2393, 0
    %4087 = vrot.lane.b32.xlu0 %v2397, 32
    %v4088 = vpop.permute.xlu0 %4087
    %4089 = vrot.lane.b32.xlu0 %v2398, 32
    %v4090 = vpop.permute.xlu0 %4089
    %4091 = vrot.lane.b32.xlu0 %v2399, 32
    %v4092 = vpop.permute.xlu0 %4091
    %4093 = vrot.lane.b32.xlu0 %v2400, 32
    %v4094 = vpop.permute.xlu0 %4093
    %v4100 = vsel %vm134, %v3349, 0
    %v4103 = vsel %vm134, %v3350, 0
    %v4106 = vsel %vm134, %v3351, 0
    %v4109 = vsel %vm134, %v4079, 0
    %v4112 = vsel %vm134, %v4080, 0
    %v4115 = vsel %vm134, %v4081, 0
    %4117 = vmatpush.msra.mxu0 0.0
    %4118 = vmatpush.msra.mxu0 0.0
    %4119 = vmatpush.msra.mxu0 0.0
    %4120 = vmatpush.msra.mxu0 0.0
    %4121 = vmatpush.msra.mxu0 0.0
    %4122 = vmatpush.msra.mxu0 0.0
    %4123 = vmatpush.msra.mxu0 0.0
    %4124 = vmatpush.msra.mxu0 0.0
    %4125 = vmatpush.msra.mxu0 0.0
    %4126 = vmatpush.msra.mxu0 0.0
    %4127 = vmatpush.msra.mxu0 0.0
    %4128 = vmatpush.msra.mxu0 0.0
    %4129 = vmatpush.msra.mxu0 %v4094
    %4130 = vmatpush.msra.mxu0 %v4092
    %4131 = vmatpush.msra.mxu0 %v4090
    %4132 = vmatpush.msra.mxu0 %v4088
    %4133 = vmatmul.f32.gmra.mxu0 %v4100
    %v4134 = vpop.f32.mrf.mxu0
    %v4135 = vadd.f32 %v4082, %v4134
    %4136 = vmatmul.f32.gmra.mxu0 %v4103
    %v4137 = vpop.f32.mrf.mxu0
    %v4138 = vadd.f32 %v4082, %v4137
    %4139 = vmatmul.f32.gmra.mxu0 %v4106
    %v4140 = vpop.f32.mrf.mxu0
    %v4141 = vadd.f32 %v4082, %v4140
    %4142 = vmatmul.f32.gmra.mxu0 %v4109
    %v4143 = vpop.f32.mrf.mxu0
    %v4144 = vadd.f32 %v4082, %v4143
    %4145 = vmatmul.f32.gmra.mxu0 %v4112
    %v4146 = vpop.f32.mrf.mxu0
    %v4147 = vadd.f32 %v4082, %v4146
    %4148 = vmatmul.f32.gmra.mxu0 %v4115
    %v4149 = vpop.f32.mrf.mxu0
    %v4150 = vadd.f32 %v4082, %v4149
    %4151 = vdwg.mxu0
    %v4152 = vadd.f32 %v2381, %v4135
    %v4153 = vadd.f32 %v2382, %v4138
    %v4154 = vadd.f32 %v2383, %v4141
    %v4155 = vadd.f32 %v2384, %v4144
    %v4156 = vadd.f32 %v2385, %v4147
    %v4157 = vadd.f32 %v2386, %v4150
    %v4158 = vsel %vm134, %v4152, 0.0
    %4159 = vadd.xlane.f32.xlu0 %v4158
    %v4160 = vpop.xlane.xlu0 %4159
    %v4161 = vsel %vm134, %v4153, 0.0
    %4162 = vadd.xlane.f32.xlu0 %v4161
    %v4163 = vpop.xlane.xlu0 %4162
    %v4164 = vsel %vm134, %v4154, 0.0
    %4165 = vadd.xlane.f32.xlu0 %v4164
    %v4166 = vpop.xlane.xlu0 %4165
    %v4167 = vsel %vm134, %v4155, 0.0
    %4168 = vadd.xlane.f32.xlu0 %v4167
    %v4169 = vpop.xlane.xlu0 %4168
    %v4170 = vsel %vm134, %v4156, 0.0
    %4171 = vadd.xlane.f32.xlu0 %v4170
    %v4172 = vpop.xlane.xlu0 %4171
    %v4173 = vsel %vm134, %v4157, 0.0
    %4174 = vadd.xlane.f32.xlu0 %v4173
    %v4175 = vpop.xlane.xlu0 %4174
    %v4176 = vmul.f32 %v4160, %v159
    %v4177 = vmul.f32 %v4163, %v159
    %v4178 = vmul.f32 %v4166, %v159
    %v4179 = vmul.f32 %v4169, %v159
    %v4180 = vmul.f32 %v4172, %v159
    %v4181 = vmul.f32 %v4175, %v159
    %v4182 = vsub.f32 %v4152, %v4176
    %v4183 = vsub.f32 %v4153, %v4177
    %v4184 = vsub.f32 %v4154, %v4178
    %v4185 = vsub.f32 %v4155, %v4179
    %v4186 = vsub.f32 %v4156, %v4180
    %v4187 = vsub.f32 %v4157, %v4181
    %v4188 = vmul.f32 %v4182, %v4182
    %v4189 = vmul.f32 %v4183, %v4183
    %v4190 = vmul.f32 %v4184, %v4184
    %v4191 = vmul.f32 %v4185, %v4185
    %v4192 = vmul.f32 %v4186, %v4186
    %v4193 = vmul.f32 %v4187, %v4187
    %v4194 = vsel %vm134, %v4188, 0.0
    %4195 = vadd.xlane.f32.xlu0 %v4194
    %v4196 = vpop.xlane.xlu0 %4195
    %v4197 = vsel %vm134, %v4189, 0.0
    %4198 = vadd.xlane.f32.xlu0 %v4197
    %v4199 = vpop.xlane.xlu0 %4198
    %v4200 = vsel %vm134, %v4190, 0.0
    %4201 = vadd.xlane.f32.xlu0 %v4200
    %v4202 = vpop.xlane.xlu0 %4201
    %v4203 = vsel %vm134, %v4191, 0.0
    %4204 = vadd.xlane.f32.xlu0 %v4203
    %v4205 = vpop.xlane.xlu0 %4204
    %v4206 = vsel %vm134, %v4192, 0.0
    %4207 = vadd.xlane.f32.xlu0 %v4206
    %v4208 = vpop.xlane.xlu0 %4207
    %v4209 = vsel %vm134, %v4193, 0.0
    %4210 = vadd.xlane.f32.xlu0 %v4209
    %v4211 = vpop.xlane.xlu0 %4210
    %v4212 = vmul.f32 %v4196, %v159
    %v4213 = vmul.f32 %v4199, %v159
    %v4214 = vmul.f32 %v4202, %v159
    %v4215 = vmul.f32 %v4205, %v159
    %v4216 = vmul.f32 %v4208, %v159
    %v4217 = vmul.f32 %v4211, %v159
    %v4218 = vadd.f32 %v4212, 1e-06
    %v4219 = vadd.f32 %v4213, 1e-06
    %v4220 = vadd.f32 %v4214, 1e-06
    %v4221 = vadd.f32 %v4215, 1e-06
    %v4222 = vadd.f32 %v4216, 1e-06
    %v4223 = vadd.f32 %v4217, 1e-06
    %v4224 = vrsqrt.pop %v4218
    %v4225 = vmul.f32 %v4224, %v4218
    %v4226 = vmul.f32 %v4225, %v4224
    %v4227 = vmul.f32 0.5, %v4226
    %v4228 = vsub.f32 1.5, %v4227
    %v4229 = vmul.f32 %v4224, %v4228
    %vm4230 = vweird.f32 %v4218
    %vm4231 = vweird.f32 %v4224
    %vm4232 = vmor %vm4230, %vm4231
    %v4233 = vsel %vm4232, %v4224, %v4229
    %v4234 = vrsqrt.pop %v4219
    %v4235 = vmul.f32 %v4234, %v4219
    %v4236 = vmul.f32 %v4235, %v4234
    %v4237 = vmul.f32 0.5, %v4236
    %v4238 = vsub.f32 1.5, %v4237
    %v4239 = vmul.f32 %v4234, %v4238
    %vm4240 = vweird.f32 %v4219
    %vm4241 = vweird.f32 %v4234
    %vm4242 = vmor %vm4240, %vm4241
    %v4243 = vsel %vm4242, %v4234, %v4239
    %v4244 = vrsqrt.pop %v4220
    %v4245 = vmul.f32 %v4244, %v4220
    %v4246 = vmul.f32 %v4245, %v4244
    %v4247 = vmul.f32 0.5, %v4246
    %v4248 = vsub.f32 1.5, %v4247
    %v4249 = vmul.f32 %v4244, %v4248
    %vm4250 = vweird.f32 %v4220
    %vm4251 = vweird.f32 %v4244
    %vm4252 = vmor %vm4250, %vm4251
    %v4253 = vsel %vm4252, %v4244, %v4249
    %v4254 = vrsqrt.pop %v4221
    %v4255 = vmul.f32 %v4254, %v4221
    %v4256 = vmul.f32 %v4255, %v4254
    %v4257 = vmul.f32 0.5, %v4256
    %v4258 = vsub.f32 1.5, %v4257
    %v4259 = vmul.f32 %v4254, %v4258
    %vm4260 = vweird.f32 %v4221
    %vm4261 = vweird.f32 %v4254
    %vm4262 = vmor %vm4260, %vm4261
    %v4263 = vsel %vm4262, %v4254, %v4259
    %v4264 = vrsqrt.pop %v4222
    %v4265 = vmul.f32 %v4264, %v4222
    %v4266 = vmul.f32 %v4265, %v4264
    %v4267 = vmul.f32 0.5, %v4266
    %v4268 = vsub.f32 1.5, %v4267
    %v4269 = vmul.f32 %v4264, %v4268
    %vm4270 = vweird.f32 %v4222
    %vm4271 = vweird.f32 %v4264
    %vm4272 = vmor %vm4270, %vm4271
    %v4273 = vsel %vm4272, %v4264, %v4269
    %v4274 = vrsqrt.pop %v4223
    %v4275 = vmul.f32 %v4274, %v4223
    %v4276 = vmul.f32 %v4275, %v4274
    %v4277 = vmul.f32 0.5, %v4276
    %v4278 = vsub.f32 1.5, %v4277
    %v4279 = vmul.f32 %v4274, %v4278
    %vm4280 = vweird.f32 %v4223
    %vm4281 = vweird.f32 %v4274
    %vm4282 = vmor %vm4280, %vm4281
    %v4283 = vsel %vm4282, %v4274, %v4279
    %v4284 = vmul.f32 %v4182, %v4233
    %v4285 = vmul.f32 %v4183, %v4243
    %v4286 = vmul.f32 %v4184, %v4253
    %v4287 = vmul.f32 %v4185, %v4263
    %v4288 = vmul.f32 %v4186, %v4273
    %v4289 = vmul.f32 %v4187, %v4283
    %v4290 = vperm.slane %v2390, 0
    %v4291 = vmul.f32 %v4284, %v4290
    %v4292 = vmul.f32 %v4285, %v4290
    %v4293 = vmul.f32 %v4286, %v4290
    %v4294 = vmul.f32 %v4287, %v4290
    %v4295 = vmul.f32 %v4288, %v4290
    %v4296 = vmul.f32 %v4289, %v4290
    %v4297 = vperm.slane %v2391, 0
    %v4298 = vadd.f32 %v4291, %v4297
    %v4299 = vadd.f32 %v4292, %v4297
    %v4300 = vadd.f32 %v4293, %v4297
    %v4301 = vadd.f32 %v4294, %v4297
    %v4302 = vadd.f32 %v4295, %v4297
    %v4303 = vadd.f32 %v4296, %v4297
    %v4304 = vperm.slane %v2394, 0
    %v4306 = vsel %vm134, %v4298, 0
    %v4309 = vsel %vm134, %v4299, 0
    %v4312 = vsel %vm134, %v4300, 0
    %v4315 = vsel %vm134, %v4301, 0
    %v4318 = vsel %vm134, %v4302, 0
    %v4321 = vsel %vm134, %v4303, 0
    %4323 = vmatpush.msra.mxu0 0.0
    %4324 = vmatpush.msra.mxu0 0.0
    %4325 = vmatpush.msra.mxu0 0.0
    %4326 = vmatpush.msra.mxu0 0.0
    %4327 = vmatpush.msra.mxu0 0.0
    %4328 = vmatpush.msra.mxu0 0.0
    %4329 = vmatpush.msra.mxu0 0.0
    %4330 = vmatpush.msra.mxu0 0.0
    %4331 = vmatpush.msra.mxu0 0.0
    %4332 = vmatpush.msra.mxu0 0.0
    %4333 = vmatpush.msra.mxu0 0.0
    %4334 = vmatpush.msra.mxu0 0.0
    %4335 = vmatpush.msra.mxu0 %v2404
    %4336 = vmatpush.msra.mxu0 %v2403
    %4337 = vmatpush.msra.mxu0 %v2402
    %4338 = vmatpush.msra.mxu0 %v2401
    %4339 = vmatmul.f32.gmra.mxu0 %v4306
    %v4340 = vpop.f32.mrf.mxu0
    %v4341 = vadd.f32 %v4304, %v4340
    %4342 = vmatmul.f32.gmra.mxu0 %v4309
    %v4343 = vpop.f32.mrf.mxu0
    %v4344 = vadd.f32 %v4304, %v4343
    %4345 = vmatmul.f32.gmra.mxu0 %v4312
    %v4346 = vpop.f32.mrf.mxu0
    %v4347 = vadd.f32 %v4304, %v4346
    %4348 = vmatmul.f32.gmra.mxu0 %v4315
    %v4349 = vpop.f32.mrf.mxu0
    %v4350 = vadd.f32 %v4304, %v4349
    %4351 = vmatmul.f32.gmra.mxu0 %v4318
    %v4352 = vpop.f32.mrf.mxu0
    %v4353 = vadd.f32 %v4304, %v4352
    %4354 = vmatmul.f32.gmra.mxu0 %v4321
    %v4355 = vpop.f32.mrf.mxu0
    %v4356 = vadd.f32 %v4304, %v4355
    %4357 = vdwg.mxu0
    %v4358 = vmul.f32 %v4341, 0.5
    %v4359 = vmul.f32 %v4344, 0.5
    %v4360 = vmul.f32 %v4347, 0.5
    %v4361 = vmul.f32 %v4350, 0.5
    %v4362 = vmul.f32 %v4353, 0.5
    %v4363 = vmul.f32 %v4356, 0.5
    %v4364 = vmul.f32 %v4341, 0.70710677
    %v4365 = vmul.f32 %v4344, 0.70710677
    %v4366 = vmul.f32 %v4347, 0.70710677
    %v4367 = vmul.f32 %v4350, 0.70710677
    %v4368 = vmul.f32 %v4353, 0.70710677
    %v4369 = vmul.f32 %v4356, 0.70710677
    %v4370 = vmul.f32 %v4364, %v4364
    %v4371 = vmin.f32 16.0, %v4370
    %v4372 = vmul.f32 %v4371, 2.1237322e-06
    %v4373 = vadd.f32 %v4372, 0.00028619796
    %v4374 = vmul.f32 %v4371, %v4373
    %v4375 = vadd.f32 %v4374, 0.0036580483
    %v4376 = vmul.f32 %v4371, %v4375
    %v4377 = vadd.f32 %v4376, 0.05243302
    %v4378 = vmul.f32 %v4371, %v4377
    %v4379 = vadd.f32 %v4378, 0.18741608
    %v4380 = vmul.f32 %v4371, %v4379
    %v4381 = vadd.f32 %v4380, 1.1283791
    %v4382 = vmul.f32 %v4364, %v4381
    %v4383 = vmul.f32 %v4371, 3.8918573e-05
    %v4384 = vadd.f32 %v4383, 0.001143296
    %v4385 = vmul.f32 %v4371, %v4384
    %v4386 = vadd.f32 %v4385, 0.014752088
    %v4387 = vmul.f32 %v4371, %v4386
    %v4388 = vadd.f32 %v4387, 0.112945676
    %v4389 = vmul.f32 %v4371, %v4388
    %v4390 = vadd.f32 %v4389, 0.4994258
    %v4391 = vmul.f32 %v4371, %v4390
    %v4392 = vadd.f32 %v4391, 1.0
    %v4393 = vrcp.pop %v4392
    %v4394 = vmul.f32 %v4392, %v4393
    %v4395 = vsub.f32 1.0, %v4394
    %v4396 = vmul.f32 %v4393, %v4395
    %v4397 = vadd.f32 %v4393, %v4396
    %vm4398 = vweird.f32 %v4392
    %vm4399 = vweird.f32 %v4393
    %vm4400 = vmor %vm4398, %vm4399
    %v4401 = vsel %vm4400, %v4393, %v4397
    %v4402 = vand.u32 2147483647, %v4392
    %vm4403 = vcmp.eq.f32.partialorder %v4402, 8.507059e+37
    %v4404 = vand.u32 %v4392, 2147483648
    %v4405 = vor.u32 1.1754944e-38, %v4404
    %v4406 = vsel %vm4403, %v4405, %v4401
    %v4407 = vmul.f32 %v4382, %v4406
    %v4408 = vmin.f32 %v4407, 1.0
    %v4409 = vmax.f32 %v4408, -1.0
    %v4410 = vmul.f32 %v4365, %v4365
    %v4411 = vmin.f32 16.0, %v4410
    %v4412 = vmul.f32 %v4411, 2.1237322e-06
    %v4413 = vadd.f32 %v4412, 0.00028619796
    %v4414 = vmul.f32 %v4411, %v4413
    %v4415 = vadd.f32 %v4414, 0.0036580483
    %v4416 = vmul.f32 %v4411, %v4415
    %v4417 = vadd.f32 %v4416, 0.05243302
    %v4418 = vmul.f32 %v4411, %v4417
    %v4419 = vadd.f32 %v4418, 0.18741608
    %v4420 = vmul.f32 %v4411, %v4419
    %v4421 = vadd.f32 %v4420, 1.1283791
    %v4422 = vmul.f32 %v4365, %v4421
    %v4423 = vmul.f32 %v4411, 3.8918573e-05
    %v4424 = vadd.f32 %v4423, 0.001143296
    %v4425 = vmul.f32 %v4411, %v4424
    %v4426 = vadd.f32 %v4425, 0.014752088
    %v4427 = vmul.f32 %v4411, %v4426
    %v4428 = vadd.f32 %v4427, 0.112945676
    %v4429 = vmul.f32 %v4411, %v4428
    %v4430 = vadd.f32 %v4429, 0.4994258
    %v4431 = vmul.f32 %v4411, %v4430
    %v4432 = vadd.f32 %v4431, 1.0
    %v4433 = vrcp.pop %v4432
    %v4434 = vmul.f32 %v4432, %v4433
    %v4435 = vsub.f32 1.0, %v4434
    %v4436 = vmul.f32 %v4433, %v4435
    %v4437 = vadd.f32 %v4433, %v4436
    %vm4438 = vweird.f32 %v4432
    %vm4439 = vweird.f32 %v4433
    %vm4440 = vmor %vm4438, %vm4439
    %v4441 = vsel %vm4440, %v4433, %v4437
    %v4442 = vand.u32 2147483647, %v4432
    %vm4443 = vcmp.eq.f32.partialorder %v4442, 8.507059e+37
    %v4444 = vand.u32 %v4432, 2147483648
    %v4445 = vor.u32 1.1754944e-38, %v4444
    %v4446 = vsel %vm4443, %v4445, %v4441
    %v4447 = vmul.f32 %v4422, %v4446
    %v4448 = vmin.f32 %v4447, 1.0
    %v4449 = vmax.f32 %v4448, -1.0
    %v4450 = vmul.f32 %v4366, %v4366
    %v4451 = vmin.f32 16.0, %v4450
    %v4452 = vmul.f32 %v4451, 2.1237322e-06
    %v4453 = vadd.f32 %v4452, 0.00028619796
    %v4454 = vmul.f32 %v4451, %v4453
    %v4455 = vadd.f32 %v4454, 0.0036580483
    %v4456 = vmul.f32 %v4451, %v4455
    %v4457 = vadd.f32 %v4456, 0.05243302
    %v4458 = vmul.f32 %v4451, %v4457
    %v4459 = vadd.f32 %v4458, 0.18741608
    %v4460 = vmul.f32 %v4451, %v4459
    %v4461 = vadd.f32 %v4460, 1.1283791
    %v4462 = vmul.f32 %v4366, %v4461
    %v4463 = vmul.f32 %v4451, 3.8918573e-05
    %v4464 = vadd.f32 %v4463, 0.001143296
    %v4465 = vmul.f32 %v4451, %v4464
    %v4466 = vadd.f32 %v4465, 0.014752088
    %v4467 = vmul.f32 %v4451, %v4466
    %v4468 = vadd.f32 %v4467, 0.112945676
    %v4469 = vmul.f32 %v4451, %v4468
    %v4470 = vadd.f32 %v4469, 0.4994258
    %v4471 = vmul.f32 %v4451, %v4470
    %v4472 = vadd.f32 %v4471, 1.0
    %v4473 = vrcp.pop %v4472
    %v4474 = vmul.f32 %v4472, %v4473
    %v4475 = vsub.f32 1.0, %v4474
    %v4476 = vmul.f32 %v4473, %v4475
    %v4477 = vadd.f32 %v4473, %v4476
    %vm4478 = vweird.f32 %v4472
    %vm4479 = vweird.f32 %v4473
    %vm4480 = vmor %vm4478, %vm4479
    %v4481 = vsel %vm4480, %v4473, %v4477
    %v4482 = vand.u32 2147483647, %v4472
    %vm4483 = vcmp.eq.f32.partialorder %v4482, 8.507059e+37
    %v4484 = vand.u32 %v4472, 2147483648
    %v4485 = vor.u32 1.1754944e-38, %v4484
    %v4486 = vsel %vm4483, %v4485, %v4481
    %v4487 = vmul.f32 %v4462, %v4486
    %v4488 = vmin.f32 %v4487, 1.0
    %v4489 = vmax.f32 %v4488, -1.0
    %v4490 = vmul.f32 %v4367, %v4367
    %v4491 = vmin.f32 16.0, %v4490
    %v4492 = vmul.f32 %v4491, 2.1237322e-06
    %v4493 = vadd.f32 %v4492, 0.00028619796
    %v4494 = vmul.f32 %v4491, %v4493
    %v4495 = vadd.f32 %v4494, 0.0036580483
    %v4496 = vmul.f32 %v4491, %v4495
    %v4497 = vadd.f32 %v4496, 0.05243302
    %v4498 = vmul.f32 %v4491, %v4497
    %v4499 = vadd.f32 %v4498, 0.18741608
    %v4500 = vmul.f32 %v4491, %v4499
    %v4501 = vadd.f32 %v4500, 1.1283791
    %v4502 = vmul.f32 %v4367, %v4501
    %v4503 = vmul.f32 %v4491, 3.8918573e-05
    %v4504 = vadd.f32 %v4503, 0.001143296
    %v4505 = vmul.f32 %v4491, %v4504
    %v4506 = vadd.f32 %v4505, 0.014752088
    %v4507 = vmul.f32 %v4491, %v4506
    %v4508 = vadd.f32 %v4507, 0.112945676
    %v4509 = vmul.f32 %v4491, %v4508
    %v4510 = vadd.f32 %v4509, 0.4994258
    %v4511 = vmul.f32 %v4491, %v4510
    %v4512 = vadd.f32 %v4511, 1.0
    %v4513 = vrcp.pop %v4512
    %v4514 = vmul.f32 %v4512, %v4513
    %v4515 = vsub.f32 1.0, %v4514
    %v4516 = vmul.f32 %v4513, %v4515
    %v4517 = vadd.f32 %v4513, %v4516
    %vm4518 = vweird.f32 %v4512
    %vm4519 = vweird.f32 %v4513
    %vm4520 = vmor %vm4518, %vm4519
    %v4521 = vsel %vm4520, %v4513, %v4517
    %v4522 = vand.u32 2147483647, %v4512
    %vm4523 = vcmp.eq.f32.partialorder %v4522, 8.507059e+37
    %v4524 = vand.u32 %v4512, 2147483648
    %v4525 = vor.u32 1.1754944e-38, %v4524
    %v4526 = vsel %vm4523, %v4525, %v4521
    %v4527 = vmul.f32 %v4502, %v4526
    %v4528 = vmin.f32 %v4527, 1.0
    %v4529 = vmax.f32 %v4528, -1.0
    %v4530 = vmul.f32 %v4368, %v4368
    %v4531 = vmin.f32 16.0, %v4530
    %v4532 = vmul.f32 %v4531, 2.1237322e-06
    %v4533 = vadd.f32 %v4532, 0.00028619796
    %v4534 = vmul.f32 %v4531, %v4533
    %v4535 = vadd.f32 %v4534, 0.0036580483
    %v4536 = vmul.f32 %v4531, %v4535
    %v4537 = vadd.f32 %v4536, 0.05243302
    %v4538 = vmul.f32 %v4531, %v4537
    %v4539 = vadd.f32 %v4538, 0.18741608
    %v4540 = vmul.f32 %v4531, %v4539
    %v4541 = vadd.f32 %v4540, 1.1283791
    %v4542 = vmul.f32 %v4368, %v4541
    %v4543 = vmul.f32 %v4531, 3.8918573e-05
    %v4544 = vadd.f32 %v4543, 0.001143296
    %v4545 = vmul.f32 %v4531, %v4544
    %v4546 = vadd.f32 %v4545, 0.014752088
    %v4547 = vmul.f32 %v4531, %v4546
    %v4548 = vadd.f32 %v4547, 0.112945676
    %v4549 = vmul.f32 %v4531, %v4548
    %v4550 = vadd.f32 %v4549, 0.4994258
    %v4551 = vmul.f32 %v4531, %v4550
    %v4552 = vadd.f32 %v4551, 1.0
    %v4553 = vrcp.pop %v4552
    %v4554 = vmul.f32 %v4552, %v4553
    %v4555 = vsub.f32 1.0, %v4554
    %v4556 = vmul.f32 %v4553, %v4555
    %v4557 = vadd.f32 %v4553, %v4556
    %vm4558 = vweird.f32 %v4552
    %vm4559 = vweird.f32 %v4553
    %vm4560 = vmor %vm4558, %vm4559
    %v4561 = vsel %vm4560, %v4553, %v4557
    %v4562 = vand.u32 2147483647, %v4552
    %vm4563 = vcmp.eq.f32.partialorder %v4562, 8.507059e+37
    %v4564 = vand.u32 %v4552, 2147483648
    %v4565 = vor.u32 1.1754944e-38, %v4564
    %v4566 = vsel %vm4563, %v4565, %v4561
    %v4567 = vmul.f32 %v4542, %v4566
    %v4568 = vmin.f32 %v4567, 1.0
    %v4569 = vmax.f32 %v4568, -1.0
    %v4570 = vmul.f32 %v4369, %v4369
    %v4571 = vmin.f32 16.0, %v4570
    %v4572 = vmul.f32 %v4571, 2.1237322e-06
    %v4573 = vadd.f32 %v4572, 0.00028619796
    %v4574 = vmul.f32 %v4571, %v4573
    %v4575 = vadd.f32 %v4574, 0.0036580483
    %v4576 = vmul.f32 %v4571, %v4575
    %v4577 = vadd.f32 %v4576, 0.05243302
    %v4578 = vmul.f32 %v4571, %v4577
    %v4579 = vadd.f32 %v4578, 0.18741608
    %v4580 = vmul.f32 %v4571, %v4579
    %v4581 = vadd.f32 %v4580, 1.1283791
    %v4582 = vmul.f32 %v4369, %v4581
    %v4583 = vmul.f32 %v4571, 3.8918573e-05
    %v4584 = vadd.f32 %v4583, 0.001143296
    %v4585 = vmul.f32 %v4571, %v4584
    %v4586 = vadd.f32 %v4585, 0.014752088
    %v4587 = vmul.f32 %v4571, %v4586
    %v4588 = vadd.f32 %v4587, 0.112945676
    %v4589 = vmul.f32 %v4571, %v4588
    %v4590 = vadd.f32 %v4589, 0.4994258
    %v4591 = vmul.f32 %v4571, %v4590
    %v4592 = vadd.f32 %v4591, 1.0
    %v4593 = vrcp.pop %v4592
    %v4594 = vmul.f32 %v4592, %v4593
    %v4595 = vsub.f32 1.0, %v4594
    %v4596 = vmul.f32 %v4593, %v4595
    %v4597 = vadd.f32 %v4593, %v4596
    %vm4598 = vweird.f32 %v4592
    %vm4599 = vweird.f32 %v4593
    %vm4600 = vmor %vm4598, %vm4599
    %v4601 = vsel %vm4600, %v4593, %v4597
    %v4602 = vand.u32 2147483647, %v4592
    %vm4603 = vcmp.eq.f32.partialorder %v4602, 8.507059e+37
    %v4604 = vand.u32 %v4592, 2147483648
    %v4605 = vor.u32 1.1754944e-38, %v4604
    %v4606 = vsel %vm4603, %v4605, %v4601
    %v4607 = vmul.f32 %v4582, %v4606
    %v4608 = vmin.f32 %v4607, 1.0
    %v4609 = vmax.f32 %v4608, -1.0
    %v4610 = vadd.f32 %v4409, 1.0
    %v4611 = vadd.f32 %v4449, 1.0
    %v4612 = vadd.f32 %v4489, 1.0
    %v4613 = vadd.f32 %v4529, 1.0
    %v4614 = vadd.f32 %v4569, 1.0
    %v4615 = vadd.f32 %v4609, 1.0
    %v4616 = vmul.f32 %v4358, %v4610
    %v4617 = vmul.f32 %v4359, %v4611
    %v4618 = vmul.f32 %v4360, %v4612
    %v4619 = vmul.f32 %v4361, %v4613
    %v4620 = vmul.f32 %v4362, %v4614
    %v4621 = vmul.f32 %v4363, %v4615
    %v4622 = vperm.slane %v2395, 0
    %4623 = vmatpush.msra.mxu0 %v2421
    %4624 = vmatpush.msra.mxu0 %v2420
    %4625 = vmatpush.msra.mxu0 %v2419
    %4626 = vmatpush.msra.mxu0 %v2418
    %4627 = vmatpush.msra.mxu0 %v2417
    %4628 = vmatpush.msra.mxu0 %v2416
    %4629 = vmatpush.msra.mxu0 %v2415
    %4630 = vmatpush.msra.mxu0 %v2414
    %4631 = vmatpush.msra.mxu0 %v2413
    %4632 = vmatpush.msra.mxu0 %v2412
    %4633 = vmatpush.msra.mxu0 %v2411
    %4634 = vmatpush.msra.mxu0 %v2410
    %4635 = vmatpush.msra.mxu0 %v2409
    %4636 = vmatpush.msra.mxu0 %v2408
    %4637 = vmatpush.msra.mxu0 %v2407
    %4638 = vmatpush.msra.mxu0 %v2406
    %4639 = vmatmul.f32.gmra.mxu0 %v4616
    %v4640 = vpop.f32.mrf.mxu0
    %4641 = vmatmul.f32.gmra.mxu0 %v4617
    %v4642 = vpop.f32.mrf.mxu0
    %4643 = vmatmul.f32.gmra.mxu0 %v4618
    %v4644 = vpop.f32.mrf.mxu0
    %v4645 = vadd.f32 %v4622, %v4644
    %4646 = vmatmul.f32.gmra.mxu0 %v4619
    %v4647 = vpop.f32.mrf.mxu0
    %4648 = vmatmul.f32.gmra.mxu0 %v4620
    %v4649 = vpop.f32.mrf.mxu0
    %4650 = vmatmul.f32.gmra.mxu0 %v4621
    %v4651 = vpop.f32.mrf.mxu0
    %v4652 = vadd.f32 %v4622, %v4651
    %4653 = vdwg.mxu0
    %v4654 = vadd.f32 %v4154, %v4645
    %v4655 = vadd.f32 %v4157, %v4652
    %v4657 = vrot.slane %v4655, 7
    %vm4659 = vcmask 1040384
    %v4660 = vsel %vm4659, %v4654, %v4657
    %v4661 = vld [vmem:[%s5 + $0x21] sm:$0x1]
    %v4662 = vld [vmem:[%s5 + $0x22] sm:$0x1]
    %vm4663 = vcmask 254976
    %v4664 = vsel %vm4663, %v4660, 0.0
    %4665 = vadd.xlane.f32.xlu0 %v4664
    %v4666 = vpop.xlane.xlu0 %4665
    %v4667 = vmul.f32 %v4666, %v159
    %v4668 = vsub.f32 %v4660, %v4667
    %v4669 = vmul.f32 %v4668, %v4668
    %v4670 = vsel %vm4663, %v4669, 0.0
    %4671 = vadd.xlane.f32.xlu0 %v4670
    %v4672 = vpop.xlane.xlu0 %4671
    %v4673 = vmul.f32 %v4672, %v159
    %v4674 = vadd.f32 %v4673, 1e-06
    %v4675 = vrsqrt.pop %v4674
    %v4676 = vmul.f32 %v4675, %v4674
    %v4677 = vmul.f32 %v4676, %v4675
    %v4678 = vmul.f32 0.5, %v4677
    %v4679 = vsub.f32 1.5, %v4678
    %v4680 = vmul.f32 %v4675, %v4679
    %vm4681 = vweird.f32 %v4674
    %vm4682 = vweird.f32 %v4675
    %vm4683 = vmor %vm4681, %vm4682
    %v4684 = vsel %vm4683, %v4675, %v4680
    %v4685 = vmul.f32 %v4668, %v4684
    %v4686 = vperm.slane %v4661, 0
    %v4687 = vmul.f32 %v4685, %v4686
    %v4688 = vperm.slane %v4662, 0
    %v4689 = vadd.f32 %v4687, %v4688
    %v4690 = vld [vmem:[%s5] sm:$0xff]
    %v4691 = vld [vmem:[%s5 + $0x8] sm:$0xff]
    %v4692 = vld [vmem:[%s5 + $0x10] sm:$0xff]
    %v4693 = vld [vmem:[%s5 + $0x18] sm:$0xff]
    %v4694 = vld [vmem:[%s5 + $0x20] sm:$0x1]
    %v4695 = vperm.slane %v4694, 0
    %v4697 = vsel %vm134, %v4689, 0
    %4699 = vmatpush.msra.mxu0 0.0
    %4700 = vmatpush.msra.mxu0 0.0
    %4701 = vmatpush.msra.mxu0 0.0
    %4702 = vmatpush.msra.mxu0 0.0
    %4703 = vmatpush.msra.mxu0 0.0
    %4704 = vmatpush.msra.mxu0 0.0
    %4705 = vmatpush.msra.mxu0 0.0
    %4706 = vmatpush.msra.mxu0 0.0
    %4707 = vmatpush.msra.mxu0 0.0
    %4708 = vmatpush.msra.mxu0 0.0
    %4709 = vmatpush.msra.mxu0 0.0
    %4710 = vmatpush.msra.mxu0 0.0
    %4711 = vmatpush.msra.mxu0 %v4693
    %4712 = vmatpush.msra.mxu0 %v4692
    %4713 = vmatpush.msra.mxu0 %v4691
    %4714 = vmatpush.msra.mxu0 %v4690
    %4715 = vmatmul.f32.gmra.mxu0 %v4697
    %v4716 = vpop.f32.mrf.mxu0
    %v4717 = vadd.f32 %v4695, %v4716
    %4718 = vdwg.mxu0
    %4719 = vst [vmem:[#allocation2] sm:$0x3] %v4717
    // Predicated region
    $region26: #{vit_forward.1} parent=1 // pred_check
      _
    $region27: #{vit_forward.1} parent=1 // pred_check_branch
      %4721 = sbr.rel (0) target = $region29
    $region28: #{vit_forward.1} parent=1 // pred_region
      %4723 = vsyncadd [#allocation3], 0
      %s4725 = sshll.u32 [#allocation2], 4
      %s4726 = int_to_ptr.vmem [resolvable:$true] %s4725
      %s4727 = sshll.u32 %s6, 4
      %s4728 = int_to_ptr.hbm [resolvable:$true] %s4727
      %4730 = dma.vmem_to_hbm [thread:$0]  %s4726, 32, %s4728, [#allocation3]
    $region29: #{vit_forward.1} parent=1 // pred_fallthru
      _
    // Predicated region
    $region30: #{vit_forward.1} parent=1 // pred_check
      _
    $region31: #{vit_forward.1} parent=1 // pred_check_branch
      %4732 = sbr.rel (0) target = $region33
    $region32: #{vit_forward.1} parent=1 // pred_region
      %4734 = dma.done [#allocation3], 32
    $region33: #{vit_forward.1} parent=1 // pred_fallthru
      _
    %4735 = vsyncpa [#allocation3], 1

</llo_original>
